<compile_context>
chip_gen: v7x
topology: tpu7x:2x2x1
jax: 0.10.0
libtpu: 0.0.40
codegen_flags: <defaults>
</compile_context>

<pallas_src>
import math

import jax
import jax.numpy as jnp
from jax.experimental import pallas as pl
from jax.experimental.pallas import tpu as pltpu

LANE = 128                   # TPU lane width: feature axes padded to multiples of this
SOFTPLUS_BETA = 100.0        # nn.Softplus(beta=100)
SOFTPLUS_THRESHOLD = 20.0    # nn.Softplus default threshold


def _round_up(n, m):
    return (n + m - 1) // m * m


def _softplus100(y, dtype):
    """PyTorch nn.Softplus(beta=100, threshold=20); `dtype` = element-wise math dtype."""
    ya = y.astype(dtype)
    by = ya * SOFTPLUS_BETA
    safe = jnp.minimum(by, SOFTPLUS_THRESHOLD)            # keep the dead branch finite
    sp = jnp.log(1.0 + jnp.exp(safe)) * (1.0 / SOFTPLUS_BETA)
    return jnp.where(by > SOFTPLUS_THRESHOLD, ya, sp)


def _use_bf16_activations():
    """bf16 VPU/EUP path exists on v6e/v7x; v5e and older stay f32 element-wise."""
    try:
        kind = jax.devices()[0].device_kind.lower()
    except Exception:
        return False
    return not any(v in kind for v in ("v2", "v3", "v4", "v5"))


# ----------------------------------------------------------------------------- kernel
def _make_kernel(layers, act_dtype):
    """layers[l] = (kind, hid_idx, in_idx, n_pad); kind in {"first","plain","skip"}."""
    n_layers = len(layers)

    def kernel(inp_ref, w_in_ref, w_hid_ref, b_ref, o_ref):
        inp = inp_ref[...]                 # (bm, 8) f32 — raw coords stay f32 (K tiny)
        b_all = b_ref[...]                 # (L, np_w) f32
        np_w = b_all.shape[1]

        h = None                           # running activation (act_dtype, lane-dense)
        for l, (kind, hid_idx, in_idx, n_pad) in enumerate(layers):
            b = b_all[l:l + 1, :n_pad]                              # (1, n_pad) f32
            if kind == "first":
                w_i = w_in_ref[in_idx]                              # (8, np_w) f32
                if n_pad != np_w:
                    w_i = w_i[:, :n_pad]
                y = jnp.dot(inp, w_i, preferred_element_type=jnp.float32)
            elif kind == "skip":
                # x = cat([h, inputs], 1) / sqrt(2) @ W
                #   == h @ Wa + inputs @ Wi  (1/sqrt(2), scale folded into Wa/Wi)
                w_a = w_hid_ref[hid_idx]                            # (128, np_w) bf16
                w_i = w_in_ref[in_idx]                              # (8, np_w) f32
                if n_pad != np_w:
                    w_a = w_a[:, :n_pad]
                    w_i = w_i[:, :n_pad]
                y = (jnp.dot(h.astype(jnp.bfloat16), w_a,
                             preferred_element_type=jnp.float32)
                     + jnp.dot(inp, w_i, preferred_element_type=jnp.float32))
            else:
                w = w_hid_ref[hid_idx]                              # (128, np_w) bf16
                if n_pad != np_w:
                    w = w[:, :n_pad]
                y = jnp.dot(h.astype(jnp.bfloat16), w,
                            preferred_element_type=jnp.float32)
            y = y + b
            if l < n_layers - 1:
                h = _softplus100(y, act_dtype)      # bf16 EUP path on v6e/v7x
            else:
                o_ref[...] = y.astype(o_ref.dtype)  # lane-dense (128-wide) store

    return kernel


# --------------------------------------------------------------------------- wrapper
def _choose_block_m(n, block_m):
    """Clamp block_m to the batch (multiple of 8) and prefer an EVEN tile count so
    v7x's two TensorCores both get work on the 'parallel' batch axis (costs at most
    one extra ~0.35us grid step on single-TC chips)."""
    n8 = _round_up(max(n, 1), 8)
    bm = max(8, min(_round_up(block_m, 8), n8))
    n_tiles = pl.cdiv(n8, bm)
    if n_tiles == 1 and n8 >= 16:
        bm = _round_up(pl.cdiv(n8, 2), 8)
    elif n_tiles % 2 == 1 and n_tiles > 1:
        bm_alt = _round_up(pl.cdiv(n8, n_tiles + 1), 8)
        if 8 <= bm_alt <= n8 and pl.cdiv(n8, bm_alt) % 2 == 0:
            bm = bm_alt
    return bm


def sdf_forward(input_pts, topo_coord, params, d_out, alpha_ratio=1.0, *,
                block_m=1024, act_bf16=None):
    """SDFNetwork.forward (multires == 0 path; alpha_ratio unused)."""
    del alpha_ratio
    w_in, w_hid, b_all, layers, d_out_pad = params
    n = input_pts.shape[0]
    d_in0 = input_pts.shape[1] + topo_coord.shape[1]
    d_in_pad = w_in.shape[1]

    # One lane-padded input stream (scale is folded into the weights, so no host mul).
    inputs = jnp.concatenate([input_pts, topo_coord], axis=-1).astype(jnp.float32)
    if d_in_pad != d_in0:
        inputs = jnp.pad(inputs, ((0, 0), (0, d_in_pad - d_in0)))

    block_m = _choose_block_m(n, block_m)
    n_rows = _round_up(n, block_m)
    if n_rows != n:
        inputs = jnp.pad(inputs, ((0, n_rows - n), (0, 0)))

    if act_bf16 is None:
        act_bf16 = _use_bf16_activations()
    act_dtype = jnp.bfloat16 if act_bf16 else jnp.float32

    grid = (n_rows // block_m,)
    out_padded = pl.pallas_call(
        _make_kernel(layers, act_dtype),
        out_shape=jax.ShapeDtypeStruct((n_rows, d_out_pad), jnp.float32),
        grid=grid,
        in_specs=[
            pl.BlockSpec((block_m, d_in_pad), lambda i: (i, 0)),   # streamed batch tile
            pl.BlockSpec(w_in.shape, lambda i: (0, 0, 0)),         # const (resident)
            pl.BlockSpec(w_hid.shape, lambda i: (0, 0, 0)),        # const (resident)
            pl.BlockSpec(b_all.shape, lambda i: (0, 0)),           # const (resident)
        ],
        out_specs=pl.BlockSpec((block_m, d_out_pad), lambda i: (i, 0)),
        compiler_params=pltpu.CompilerParams(
            dimension_semantics=("parallel",)),   # v7x: shard batch tiles across 2 TCs
    )(inputs, w_in, w_hid, b_all)

    # NOTE(v5e): the padded f32 writeback + this slice is the largest memory stream;
    # downstream code that can consume the padded array should do so directly.
    return out_padded[:n, :d_out]


# -------------------------------------------------------------------- parameter prep
def init_raw_params(key, d_in_1, d_in_2, d_out, d_hidden, n_layers, skip_in):
    """Synthetic parameters in math layout W:(d_in, d_out), b:(d_out,).
    (weight_norm / geometric_init only change parameter values, not forward math.)"""
    d_in0 = d_in_1 + d_in_2
    dims = [d_in0] + [d_hidden] * n_layers + [d_out]
    raw = []
    for l in range(len(dims) - 1):
        out_dim = dims[l + 1] - dims[0] if (l + 1) in skip_in else dims[l + 1]
        key, kw, kb = jax.random.split(key, 3)
        bound = 1.0 / math.sqrt(dims[l])
        w = jax.random.uniform(kw, (dims[l], out_dim), jnp.float32, -bound, bound)
        b = jax.random.uniform(kb, (out_dim,), jnp.float32, -bound, bound)
        raw.append((w, b))
    return raw


def prepare_params(raw, d_in_1, d_in_2, skip_in, scale):
    """Fold scale / 1/sqrt(2) / output 1/scale into the weights, merge the pts/topo
    pieces, pad feature axes to multiples of 128, and pack everything into three
    arrays: hidden-K weights (bf16 slab), input-K weights (f32 slab), biases (f32)."""
    assert 0 not in skip_in, "skip at layer 0 is not meaningful for SDFNetwork"
    d_in0 = d_in_1 + d_in_2
    d_in_pad = _round_up(d_in0, 8)
    L = len(raw)
    inv_sqrt2 = 1.0 / math.sqrt(2.0)

    n_true = [w.shape[1] for (w, _) in raw]
    n_pads = [_round_up(n, LANE) for n in n_true]
    # All carried activations (layers 0..L-2) share one padded width == hidden K.
    k_pad = n_pads[0]
    assert all(p == k_pad for p in n_pads[:L - 1]), \
        "hidden activations must share one 128-padded width"
    np_w = max(n_pads)          # packed slab / bias column width

    def pad2(w, rows, cols):
        return jnp.pad(w, ((0, rows - w.shape[0]), (0, cols - w.shape[1])))

    def pad1(b, cols):
        return jnp.pad(b, (0, cols - b.shape[0]))

    hid_ws, in_ws, biases, layers = [], [], [], []
    prev_n = None
    for l, (w, b) in enumerate(raw):
        w = jnp.asarray(w, jnp.float32)
        b = jnp.asarray(b, jnp.float32)
        if l == L - 1:
            # forward ends with cat([x[:, :1] / scale, x[:, 1:]]) -> fold 1/scale in.
            w = w.at[:, 0].divide(scale)
            b = b.at[0].divide(scale)
        n_pad = n_pads[l]

        if l == 0:
            # inputs = cat([pts * scale, topo]) -> fold `scale` into the pts rows.
            w_i = w.at[:d_in_1, :].multiply(scale)
            in_ws.append(pad2(w_i, d_in_pad, np_w))
            layers.append(("first", -1, len(in_ws) - 1, n_pad))
        elif l in skip_in:
            k_h = w.shape[0] - d_in0            # width of the running activation
            # Padded-lane invariant: next layer's zero-padded K rows must exactly
            # cover the previous layer's padded output columns.
            assert k_h == prev_n, "skip layer K must chain with previous layer N"
            w_a = w[:k_h, :] * inv_sqrt2
            w_i = (w[k_h:, :] * inv_sqrt2).at[:d_in_1, :].multiply(scale)
            hid_ws.append(pad2(w_a, k_pad, np_w))
            in_ws.append(pad2(w_i, d_in_pad, np_w))
            layers.append(("skip", len(hid_ws) - 1, len(in_ws) - 1, n_pad))
        else:
            assert w.shape[0] == prev_n, "layer K must chain with previous layer N"
            hid_ws.append(pad2(w, k_pad, np_w))
            layers.append(("plain", len(hid_ws) - 1, -1, n_pad))

        biases.append(pad1(b, np_w))
        prev_n = n_true[l]

    w_hid = jnp.stack(hid_ws).astype(jnp.bfloat16)   # (n_hid, k_pad, np_w) bf16 slab
    w_in = jnp.stack(in_ws).astype(jnp.float32)      # (n_in, 8, np_w) f32 slab
    b_all = jnp.stack(biases).astype(jnp.float32)    # (L, np_w) f32
    return w_in, w_hid, b_all, tuple(layers), n_pads[-1]


# ------------------------------------------------------------------------- reference
def sdf_reference(input_pts, topo_coord, raw, skip_in, scale):
    """Pure-JAX f32 mirror of SDFNetwork.forward (multires == 0)."""
    inputs = jnp.concatenate([input_pts * scale, topo_coord], axis=-1)
    x = inputs
    L = len(raw)
    for l, (w, b) in enumerate(raw):
        if l in skip_in:
            x = jnp.concatenate([x, inputs], axis=1) / math.sqrt(2.0)
        x = x @ w + b
        if l < L - 1:
            x = _softplus100(x, jnp.float32)
    return jnp.concatenate([x[:, :1] / scale, x[:, 1:]], axis=-1)


if __name__ == "__main__":
    # Small config consistent with SDFNetwork (no positional encoding):
    d_in_1, d_in_2, d_out = 3, 2, 9          # xyz, topo code, (sdf + feature dims)
    d_hidden, n_layers, skip_in = 128, 5, (4,)
    scale = 1.5
    batch = 1000

    key = jax.random.PRNGKey(0)
    k_pts, k_topo, k_par = jax.random.split(key, 3)
    input_pts = jax.random.normal(k_pts, (batch, d_in_1), jnp.float32)
    topo_coord = jax.random.normal(k_topo, (batch, d_in_2), jnp.float32)
    alpha_ratio = 1.0   # unused when multires == 0

    raw = init_raw_params(k_par, d_in_1, d_in_2, d_out, d_hidden, n_layers, skip_in)
    params = prepare_params(raw, d_in_1, d_in_2, skip_in, scale)

    out = sdf_forward(input_pts, topo_coord, params, d_out, alpha_ratio,
                      block_m=1024)
    out = jax.block_until_ready(out)

    ref = sdf_reference(input_pts, topo_coord, raw, skip_in, scale)
    assert out.shape == (batch, d_out), out.shape
    max_err = float(jnp.max(jnp.abs(out - ref)))
    # bf16 MXU operands (+ bf16 softplus on v6e/v7x) vs pure-f32 reference.
    assert jnp.allclose(out, ref, atol=3e-2, rtol=3e-2), f"max abs err = {max_err}"
    print("KERNEL_OK")
</pallas_src>

<mosaic_0001>
module attributes {stable_mosaic.version = 11 : i64} {
  func.func @kernel(%arg0: i32, %arg1: memref<504x8xf32, #tpu.memory_space<vmem>>, %arg2: memref<2x8x128xf32, #tpu.memory_space<vmem>>, %arg3: memref<5x128x128xbf16, #tpu.memory_space<vmem>>, %arg4: memref<6x128xf32, #tpu.memory_space<vmem>>, %arg5: memref<504x128xf32, #tpu.memory_space<vmem>>) attributes {dimension_semantics = [#tpu.dimension_semantics<parallel>], iteration_bounds = array<i64: 2>, scalar_prefetch = 0 : i64, scratch_operands = 0 : i64, tpu.core_type = #tpu.core_type<tc>, window_params = [{transform_indices = @transform_0, window_bounds = array<i64: 504, 8>}, {pipeline_mode = #tpu.pipeline_mode<synchronous>, transform_indices = @transform_1, window_bounds = array<i64: 2, 8, 128>}, {pipeline_mode = #tpu.pipeline_mode<synchronous>, transform_indices = @transform_2, window_bounds = array<i64: 5, 128, 128>}, {pipeline_mode = #tpu.pipeline_mode<synchronous>, transform_indices = @transform_3, window_bounds = array<i64: 6, 128>}, {transform_indices = @transform_4, window_bounds = array<i64: 504, 128>}]} {
    %c0 = arith.constant 0 : index
    %c0_0 = arith.constant 0 : index
    %0 = vector.load %arg1[%c0, %c0_0] : memref<504x8xf32, #tpu.memory_space<vmem>>, vector<504x8xf32>
    %c0_1 = arith.constant 0 : index
    %c0_2 = arith.constant 0 : index
    %1 = vector.load %arg4[%c0_1, %c0_2] : memref<6x128xf32, #tpu.memory_space<vmem>>, vector<6x128xf32>
    %2 = vector.extract_strided_slice %1 {offsets = [0, 0], sizes = [1, 128], strides = [1, 1]} : vector<6x128xf32> to vector<1x128xf32>
    %c0_3 = arith.constant 0 : index
    %c0_4 = arith.constant 0 : index
    %c0_5 = arith.constant 0 : index
    %3 = vector.load %arg2[%c0_3, %c0_4, %c0_5] : memref<2x8x128xf32, #tpu.memory_space<vmem>>, vector<1x8x128xf32>
    %4 = vector.shape_cast %3 : vector<1x8x128xf32> to vector<8x128xf32>
    %cst = arith.constant dense<0.000000e+00> : vector<504x128xf32>
    %5 = tpu.matmul %0, %4, %cst {dimension_numbers = #tpu.dot_dimension_numbers<[1], [0], [0], [1], [0, 0, 1, 1], [], []>} : vector<504x8xf32>, vector<8x128xf32>, vector<504x128xf32> -> vector<504x128xf32>
    %6 = vector.broadcast %2 : vector<1x128xf32> to vector<504x128xf32>
    %7 = arith.addf %5, %6 : vector<504x128xf32>
    %8 = arith.truncf %7 : vector<504x128xf32> to vector<504x128xbf16>
    %cst_6 = arith.constant 1.000000e+02 : bf16
    %9 = vector.broadcast %cst_6 : bf16 to vector<504x128xbf16>
    %10 = arith.mulf %8, %9 : vector<504x128xbf16>
    %cst_7 = arith.constant 2.000000e+01 : bf16
    %11 = vector.broadcast %cst_7 : bf16 to vector<504x128xbf16>
    %12 = arith.minimumf %10, %11 : vector<504x128xbf16>
    %13 = math.exp %12 : vector<504x128xbf16>
    %cst_8 = arith.constant 1.000000e+00 : bf16
    %14 = vector.broadcast %cst_8 : bf16 to vector<504x128xbf16>
    %15 = arith.addf %14, %13 : vector<504x128xbf16>
    %16 = math.log %15 : vector<504x128xbf16>
    %cst_9 = arith.constant 1.000980e-02 : bf16
    %17 = vector.broadcast %cst_9 : bf16 to vector<504x128xbf16>
    %18 = arith.mulf %16, %17 : vector<504x128xbf16>
    %cst_10 = arith.constant 2.000000e+01 : bf16
    %19 = vector.broadcast %cst_10 : bf16 to vector<504x128xbf16>
    %20 = arith.cmpf ogt, %10, %19 : vector<504x128xbf16>
    %21 = arith.select %20, %8, %18 : vector<504x128xi1>, vector<504x128xbf16>
    %22 = vector.extract_strided_slice %1 {offsets = [1, 0], sizes = [1, 128], strides = [1, 1]} : vector<6x128xf32> to vector<1x128xf32>
    %c0_11 = arith.constant 0 : index
    %c0_12 = arith.constant 0 : index
    %c0_13 = arith.constant 0 : index
    %23 = vector.load %arg3[%c0_11, %c0_12, %c0_13] : memref<5x128x128xbf16, #tpu.memory_space<vmem>>, vector<1x128x128xbf16>
    %24 = vector.shape_cast %23 : vector<1x128x128xbf16> to vector<128x128xbf16>
    %cst_14 = arith.constant dense<0.000000e+00> : vector<504x128xf32>
    %25 = tpu.matmul %21, %24, %cst_14 {dimension_numbers = #tpu.dot_dimension_numbers<[1], [0], [0], [1], [0, 0, 1, 1], [], []>} : vector<504x128xbf16>, vector<128x128xbf16>, vector<504x128xf32> -> vector<504x128xf32>
    %26 = vector.broadcast %22 : vector<1x128xf32> to vector<504x128xf32>
    %27 = arith.addf %25, %26 : vector<504x128xf32>
    %28 = arith.truncf %27 : vector<504x128xf32> to vector<504x128xbf16>
    %cst_15 = arith.constant 1.000000e+02 : bf16
    %29 = vector.broadcast %cst_15 : bf16 to vector<504x128xbf16>
    %30 = arith.mulf %28, %29 : vector<504x128xbf16>
    %cst_16 = arith.constant 2.000000e+01 : bf16
    %31 = vector.broadcast %cst_16 : bf16 to vector<504x128xbf16>
    %32 = arith.minimumf %30, %31 : vector<504x128xbf16>
    %33 = math.exp %32 : vector<504x128xbf16>
    %cst_17 = arith.constant 1.000000e+00 : bf16
    %34 = vector.broadcast %cst_17 : bf16 to vector<504x128xbf16>
    %35 = arith.addf %34, %33 : vector<504x128xbf16>
    %36 = math.log %35 : vector<504x128xbf16>
    %cst_18 = arith.constant 1.000980e-02 : bf16
    %37 = vector.broadcast %cst_18 : bf16 to vector<504x128xbf16>
    %38 = arith.mulf %36, %37 : vector<504x128xbf16>
    %cst_19 = arith.constant 2.000000e+01 : bf16
    %39 = vector.broadcast %cst_19 : bf16 to vector<504x128xbf16>
    %40 = arith.cmpf ogt, %30, %39 : vector<504x128xbf16>
    %41 = arith.select %40, %28, %38 : vector<504x128xi1>, vector<504x128xbf16>
    %42 = vector.extract_strided_slice %1 {offsets = [2, 0], sizes = [1, 128], strides = [1, 1]} : vector<6x128xf32> to vector<1x128xf32>
    %c1 = arith.constant 1 : index
    %c0_20 = arith.constant 0 : index
    %c0_21 = arith.constant 0 : index
    %43 = vector.load %arg3[%c1, %c0_20, %c0_21] : memref<5x128x128xbf16, #tpu.memory_space<vmem>>, vector<1x128x128xbf16>
    %44 = vector.shape_cast %43 : vector<1x128x128xbf16> to vector<128x128xbf16>
    %cst_22 = arith.constant dense<0.000000e+00> : vector<504x128xf32>
    %45 = tpu.matmul %41, %44, %cst_22 {dimension_numbers = #tpu.dot_dimension_numbers<[1], [0], [0], [1], [0, 0, 1, 1], [], []>} : vector<504x128xbf16>, vector<128x128xbf16>, vector<504x128xf32> -> vector<504x128xf32>
    %46 = vector.broadcast %42 : vector<1x128xf32> to vector<504x128xf32>
    %47 = arith.addf %45, %46 : vector<504x128xf32>
    %48 = arith.truncf %47 : vector<504x128xf32> to vector<504x128xbf16>
    %cst_23 = arith.constant 1.000000e+02 : bf16
    %49 = vector.broadcast %cst_23 : bf16 to vector<504x128xbf16>
    %50 = arith.mulf %48, %49 : vector<504x128xbf16>
    %cst_24 = arith.constant 2.000000e+01 : bf16
    %51 = vector.broadcast %cst_24 : bf16 to vector<504x128xbf16>
    %52 = arith.minimumf %50, %51 : vector<504x128xbf16>
    %53 = math.exp %52 : vector<504x128xbf16>
    %cst_25 = arith.constant 1.000000e+00 : bf16
    %54 = vector.broadcast %cst_25 : bf16 to vector<504x128xbf16>
    %55 = arith.addf %54, %53 : vector<504x128xbf16>
    %56 = math.log %55 : vector<504x128xbf16>
    %cst_26 = arith.constant 1.000980e-02 : bf16
    %57 = vector.broadcast %cst_26 : bf16 to vector<504x128xbf16>
    %58 = arith.mulf %56, %57 : vector<504x128xbf16>
    %cst_27 = arith.constant 2.000000e+01 : bf16
    %59 = vector.broadcast %cst_27 : bf16 to vector<504x128xbf16>
    %60 = arith.cmpf ogt, %50, %59 : vector<504x128xbf16>
    %61 = arith.select %60, %48, %58 : vector<504x128xi1>, vector<504x128xbf16>
    %62 = vector.extract_strided_slice %1 {offsets = [3, 0], sizes = [1, 128], strides = [1, 1]} : vector<6x128xf32> to vector<1x128xf32>
    %c2 = arith.constant 2 : index
    %c0_28 = arith.constant 0 : index
    %c0_29 = arith.constant 0 : index
    %63 = vector.load %arg3[%c2, %c0_28, %c0_29] : memref<5x128x128xbf16, #tpu.memory_space<vmem>>, vector<1x128x128xbf16>
    %64 = vector.shape_cast %63 : vector<1x128x128xbf16> to vector<128x128xbf16>
    %cst_30 = arith.constant dense<0.000000e+00> : vector<504x128xf32>
    %65 = tpu.matmul %61, %64, %cst_30 {dimension_numbers = #tpu.dot_dimension_numbers<[1], [0], [0], [1], [0, 0, 1, 1], [], []>} : vector<504x128xbf16>, vector<128x128xbf16>, vector<504x128xf32> -> vector<504x128xf32>
    %66 = vector.broadcast %62 : vector<1x128xf32> to vector<504x128xf32>
    %67 = arith.addf %65, %66 : vector<504x128xf32>
    %68 = arith.truncf %67 : vector<504x128xf32> to vector<504x128xbf16>
    %cst_31 = arith.constant 1.000000e+02 : bf16
    %69 = vector.broadcast %cst_31 : bf16 to vector<504x128xbf16>
    %70 = arith.mulf %68, %69 : vector<504x128xbf16>
    %cst_32 = arith.constant 2.000000e+01 : bf16
    %71 = vector.broadcast %cst_32 : bf16 to vector<504x128xbf16>
    %72 = arith.minimumf %70, %71 : vector<504x128xbf16>
    %73 = math.exp %72 : vector<504x128xbf16>
    %cst_33 = arith.constant 1.000000e+00 : bf16
    %74 = vector.broadcast %cst_33 : bf16 to vector<504x128xbf16>
    %75 = arith.addf %74, %73 : vector<504x128xbf16>
    %76 = math.log %75 : vector<504x128xbf16>
    %cst_34 = arith.constant 1.000980e-02 : bf16
    %77 = vector.broadcast %cst_34 : bf16 to vector<504x128xbf16>
    %78 = arith.mulf %76, %77 : vector<504x128xbf16>
    %cst_35 = arith.constant 2.000000e+01 : bf16
    %79 = vector.broadcast %cst_35 : bf16 to vector<504x128xbf16>
    %80 = arith.cmpf ogt, %70, %79 : vector<504x128xbf16>
    %81 = arith.select %80, %68, %78 : vector<504x128xi1>, vector<504x128xbf16>
    %82 = vector.extract_strided_slice %1 {offsets = [4, 0], sizes = [1, 128], strides = [1, 1]} : vector<6x128xf32> to vector<1x128xf32>
    %c3 = arith.constant 3 : index
    %c0_36 = arith.constant 0 : index
    %c0_37 = arith.constant 0 : index
    %83 = vector.load %arg3[%c3, %c0_36, %c0_37] : memref<5x128x128xbf16, #tpu.memory_space<vmem>>, vector<1x128x128xbf16>
    %84 = vector.shape_cast %83 : vector<1x128x128xbf16> to vector<128x128xbf16>
    %c1_38 = arith.constant 1 : index
    %c0_39 = arith.constant 0 : index
    %c0_40 = arith.constant 0 : index
    %85 = vector.load %arg2[%c1_38, %c0_39, %c0_40] : memref<2x8x128xf32, #tpu.memory_space<vmem>>, vector<1x8x128xf32>
    %86 = vector.shape_cast %85 : vector<1x8x128xf32> to vector<8x128xf32>
    %cst_41 = arith.constant dense<0.000000e+00> : vector<504x128xf32>
    %87 = tpu.matmul %81, %84, %cst_41 {dimension_numbers = #tpu.dot_dimension_numbers<[1], [0], [0], [1], [0, 0, 1, 1], [], []>} : vector<504x128xbf16>, vector<128x128xbf16>, vector<504x128xf32> -> vector<504x128xf32>
    %cst_42 = arith.constant dense<0.000000e+00> : vector<504x128xf32>
    %88 = tpu.matmul %0, %86, %cst_42 {dimension_numbers = #tpu.dot_dimension_numbers<[1], [0], [0], [1], [0, 0, 1, 1], [], []>} : vector<504x8xf32>, vector<8x128xf32>, vector<504x128xf32> -> vector<504x128xf32>
    %89 = arith.addf %87, %88 : vector<504x128xf32>
    %90 = vector.broadcast %82 : vector<1x128xf32> to vector<504x128xf32>
    %91 = arith.addf %89, %90 : vector<504x128xf32>
    %92 = arith.truncf %91 : vector<504x128xf32> to vector<504x128xbf16>
    %cst_43 = arith.constant 1.000000e+02 : bf16
    %93 = vector.broadcast %cst_43 : bf16 to vector<504x128xbf16>
    %94 = arith.mulf %92, %93 : vector<504x128xbf16>
    %cst_44 = arith.constant 2.000000e+01 : bf16
    %95 = vector.broadcast %cst_44 : bf16 to vector<504x128xbf16>
    %96 = arith.minimumf %94, %95 : vector<504x128xbf16>
    %97 = math.exp %96 : vector<504x128xbf16>
    %cst_45 = arith.constant 1.000000e+00 : bf16
    %98 = vector.broadcast %cst_45 : bf16 to vector<504x128xbf16>
    %99 = arith.addf %98, %97 : vector<504x128xbf16>
    %100 = math.log %99 : vector<504x128xbf16>
    %cst_46 = arith.constant 1.000980e-02 : bf16
    %101 = vector.broadcast %cst_46 : bf16 to vector<504x128xbf16>
    %102 = arith.mulf %100, %101 : vector<504x128xbf16>
    %cst_47 = arith.constant 2.000000e+01 : bf16
    %103 = vector.broadcast %cst_47 : bf16 to vector<504x128xbf16>
    %104 = arith.cmpf ogt, %94, %103 : vector<504x128xbf16>
    %105 = arith.select %104, %92, %102 : vector<504x128xi1>, vector<504x128xbf16>
    %106 = vector.extract_strided_slice %1 {offsets = [5, 0], sizes = [1, 128], strides = [1, 1]} : vector<6x128xf32> to vector<1x128xf32>
    %c4 = arith.constant 4 : index
    %c0_48 = arith.constant 0 : index
    %c0_49 = arith.constant 0 : index
    %107 = vector.load %arg3[%c4, %c0_48, %c0_49] : memref<5x128x128xbf16, #tpu.memory_space<vmem>>, vector<1x128x128xbf16>
    %108 = vector.shape_cast %107 : vector<1x128x128xbf16> to vector<128x128xbf16>
    %cst_50 = arith.constant dense<0.000000e+00> : vector<504x128xf32>
    %109 = tpu.matmul %105, %108, %cst_50 {dimension_numbers = #tpu.dot_dimension_numbers<[1], [0], [0], [1], [0, 0, 1, 1], [], []>} : vector<504x128xbf16>, vector<128x128xbf16>, vector<504x128xf32> -> vector<504x128xf32>
    %110 = vector.broadcast %106 : vector<1x128xf32> to vector<504x128xf32>
    %111 = arith.addf %109, %110 : vector<504x128xf32>
    %c0_51 = arith.constant 0 : index
    %c0_52 = arith.constant 0 : index
    %112 = vector.load %arg5[%c0_51, %c0_52] : memref<504x128xf32, #tpu.memory_space<vmem>>, vector<504x128xf32>
    tpu.vector_store %arg5[%c0_51, %c0_52], %111 {strides = array<i32>} : memref<504x128xf32, #tpu.memory_space<vmem>>, vector<504x128xf32>,
    return
  }
  func.func @transform_0(%arg0: i32) -> (i32, i32) {
    %c0_i32 = arith.constant 0 : i32
    %c0_i32_0 = arith.constant 0 : i32
    return %arg0, %c0_i32 : i32, i32
  }
  func.func @transform_1(%arg0: i32) -> (i32, i32, i32) {
    %c0_i32 = arith.constant 0 : i32
    %c0_i32_0 = arith.constant 0 : i32
    %c0_i32_1 = arith.constant 0 : i32
    %c0_i32_2 = arith.constant 0 : i32
    return %c0_i32, %c0_i32_0, %c0_i32_1 : i32, i32, i32
  }
  func.func @transform_2(%arg0: i32) -> (i32, i32, i32) {
    %c0_i32 = arith.constant 0 : i32
    %c0_i32_0 = arith.constant 0 : i32
    %c0_i32_1 = arith.constant 0 : i32
    %c0_i32_2 = arith.constant 0 : i32
    return %c0_i32, %c0_i32_0, %c0_i32_1 : i32, i32, i32
  }
  func.func @transform_3(%arg0: i32) -> (i32, i32) {
    %c0_i32 = arith.constant 0 : i32
    %c0_i32_0 = arith.constant 0 : i32
    %c0_i32_1 = arith.constant 0 : i32
    return %c0_i32, %c0_i32_0 : i32, i32
  }
  func.func @transform_4(%arg0: i32) -> (i32, i32) {
    %c0_i32 = arith.constant 0 : i32
    %c0_i32_0 = arith.constant 0 : i32
    return %arg0, %c0_i32 : i32, i32
  }
}

</mosaic_0001>

<llo_original>
// kernel: tpu_custom_call.1
$region0: #{tpu_custom_call.1}
  #allocation0 [shape = 'u32[]', space=smem, size = 0x4, offset = 0x4, fixed_abs, tag = 'smem constant byte address 0x4 - core index']
  #allocation1 [shape = 'u32[144,128]{1,0:T(1,128)}', space=vmem, size = 0x12000, scoped, tag = 'internal scratch']
  %s0 = inlined_call_operand.vmem [shape: f32[1008,8], index: 0, kind: input, shape index: {}]
  %s1 = inlined_call_operand.vmem [shape: f32[2,8,128], index: 1, kind: input, shape index: {}]
  %s2 = inlined_call_operand.vmem [shape: bf16[5,128,128], index: 2, kind: input, shape index: {}]
  %s3 = inlined_call_operand.vmem [shape: f32[6,128], index: 3, kind: input, shape index: {}]
  %s4 = inlined_call_operand.hbm [shape: f32[1008,128], index: 4, kind: output, shape index: {}]
  %s5 = sld [smem:[#allocation0]]
  $region49: #{tpu_custom_call.1} parent=0
    _
  %s7 = ssub.s32 1, %s5
  %s8 = scalar_select 0, %s7, %s5
  $region1: #{tpu_custom_call.1} parent=0
    #allocation2 [shape = 'u8[516096]{0}', space=vmem, size = 0x7e000, scoped, tag = 'output window, operand 0']
    #allocation3 [shape = 's32[2]{0}', space=sflag, size = 0x8, scoped, tag = 'scoped memory for tpu_custom_call.1']
    %9 = vsyncpa [#allocation3], 0
    %s10 = scalar_lea.sflag [#allocation3], 1
    %11 = vsyncpa %s10, 0
    loop: start=0, step=1, limit=4
    $region2: #{tpu_custom_call.1} parent=1 // loop_pre_header
      _
    $region3: #{tpu_custom_call.1} parent=1 // loop_header
      %s13 = sphi 0, %s17
      %p14 = scmp.ge.s32.totalorder %s13, 4
      %s23 = sphi 0, %s25
      %s26 = sphi 0, %s23
      %s27 = sphi 0, %s26
      %s43 = sphi 0, %s27
      %s47 = sphi 0, %s47
      %s49 = sphi 0, %s47
      %s50 = sphi 0, %s49
      %s64 = sphi 0, %s50
      %s68 = sphi 0, %s68
      %s70 = sphi 0, %s68
      %s71 = sphi 0, %s70
      %s85 = sphi 0, %s71
      %s89 = sphi 0, %s89
      %s91 = sphi 0, %s89
      %s92 = sphi 0, %s91
      %s106 = sphi 0, %s92
      %s112 = sphi 0, %s114
      %s115 = sphi 0, %s112
      %s116 = sphi 0, %s115
      %s132 = sphi 0, %s116
    $region4: #{tpu_custom_call.1} parent=1 // loop_header_branch
      %16 = sbr.rel (%p14) target = $region8
    $region5: #{tpu_custom_call.1} parent=1 // loop_body
      %s18 = ssub.s32 %s13, 1
      %s19 = ssub.s32 %s13, 2
      %s20 = sadd.s32 %s13, 1
      %s21 = ssub.s32 %s13, %s20
      %p22 = scmp.eq.s32.totalorder %s21, 0
      %s24 = sadd.s32 %s23, 1
      %s25 = scalar_select %p22, %s23, %s24
      %p28 = pneg %p22
      %p29 = scmp.eq.s32.totalorder %s13, 1
      %p30 = por %p28, %p29
      %p31 = scmp.ne.s32.totalorder %s23, %s26
      %p32 = scmp.eq.s32.totalorder %s13, 0
      %p33 = por %p31, %p32
      %p34 = scmp.ne.s32.totalorder %s23, %s26
      %p35 = scmp.eq.s32.totalorder %s18, 1
      %p36 = por %p34, %p35
      %p37 = scmp.ne.s32.totalorder %s26, %s27
      %p38 = scmp.eq.s32.totalorder %s18, 0
      %p39 = por %p37, %p38
      %p40 = scmp.ne.s32.totalorder %s26, %s27
      %p41 = scmp.eq.s32.totalorder %s19, 1
      %p42 = por %p40, %p41
      %p44 = scmp.ne.s32.totalorder %s27, %s43
      %p45 = scmp.eq.s32.totalorder %s19, 0
      %p46 = por %p44, %p45
      %s48 = sadd.s32 %s47, 1
      %p51 = scmp.eq.s32.totalorder %s13, 1
      %p52 = scmp.ne.s32.totalorder %s47, %s49
      %p53 = scmp.eq.s32.totalorder %s13, 0
      %p54 = por %p52, %p53
      %p55 = scmp.ne.s32.totalorder %s47, %s49
      %p56 = scmp.eq.s32.totalorder %s18, 1
      %p57 = por %p55, %p56
      %p58 = scmp.ne.s32.totalorder %s49, %s50
      %p59 = scmp.eq.s32.totalorder %s18, 0
      %p60 = por %p58, %p59
      %p61 = scmp.ne.s32.totalorder %s49, %s50
      %p62 = scmp.eq.s32.totalorder %s19, 1
      %p63 = por %p61, %p62
      %p65 = scmp.ne.s32.totalorder %s50, %s64
      %p66 = scmp.eq.s32.totalorder %s19, 0
      %p67 = por %p65, %p66
      %s69 = sadd.s32 %s68, 1
      %p72 = scmp.eq.s32.totalorder %s13, 1
      %p73 = scmp.ne.s32.totalorder %s68, %s70
      %p74 = scmp.eq.s32.totalorder %s13, 0
      %p75 = por %p73, %p74
      %p76 = scmp.ne.s32.totalorder %s68, %s70
      %p77 = scmp.eq.s32.totalorder %s18, 1
      %p78 = por %p76, %p77
      %p79 = scmp.ne.s32.totalorder %s70, %s71
      %p80 = scmp.eq.s32.totalorder %s18, 0
      %p81 = por %p79, %p80
      %p82 = scmp.ne.s32.totalorder %s70, %s71
      %p83 = scmp.eq.s32.totalorder %s19, 1
      %p84 = por %p82, %p83
      %p86 = scmp.ne.s32.totalorder %s71, %s85
      %p87 = scmp.eq.s32.totalorder %s19, 0
      %p88 = por %p86, %p87
      %s90 = sadd.s32 %s89, 1
      %p93 = scmp.eq.s32.totalorder %s13, 1
      %p94 = scmp.ne.s32.totalorder %s89, %s91
      %p95 = scmp.eq.s32.totalorder %s13, 0
      %p96 = por %p94, %p95
      %p97 = scmp.ne.s32.totalorder %s89, %s91
      %p98 = scmp.eq.s32.totalorder %s18, 1
      %p99 = por %p97, %p98
      %p100 = scmp.ne.s32.totalorder %s91, %s92
      %p101 = scmp.eq.s32.totalorder %s18, 0
      %p102 = por %p100, %p101
      %p103 = scmp.ne.s32.totalorder %s91, %s92
      %p104 = scmp.eq.s32.totalorder %s19, 1
      %p105 = por %p103, %p104
      %p107 = scmp.ne.s32.totalorder %s92, %s106
      %p108 = scmp.eq.s32.totalorder %s19, 0
      %p109 = por %p107, %p108
      %s110 = ssub.s32 %s13, %s20
      %p111 = scmp.eq.s32.totalorder %s110, 0
      %s113 = sadd.s32 %s112, 1
      %s114 = scalar_select %p111, %s112, %s113
      %p117 = pneg %p111
      %p118 = scmp.eq.s32.totalorder %s13, 1
      %p119 = por %p117, %p118
      %p120 = scmp.ne.s32.totalorder %s112, %s115
      %p121 = scmp.eq.s32.totalorder %s13, 0
      %p122 = por %p120, %p121
      %p123 = scmp.ne.s32.totalorder %s112, %s115
      %p124 = scmp.eq.s32.totalorder %s18, 1
      %p125 = por %p123, %p124
      %p126 = scmp.ne.s32.totalorder %s115, %s116
      %p127 = scmp.eq.s32.totalorder %s18, 0
      %p128 = por %p126, %p127
      %p129 = scmp.ne.s32.totalorder %s115, %s116
      %p130 = scmp.eq.s32.totalorder %s19, 1
      %p131 = por %p129, %p130
      %p133 = scmp.ne.s32.totalorder %s116, %s132
      %p134 = scmp.eq.s32.totalorder %s19, 0
      %p135 = por %p133, %p134
      %p136 = scmp.le.s32.totalorder 1, %s13
      %p137 = scmp.lt.s32.totalorder %s13, 3
      %p138 = pnand %p136, %p137
      %p139 = pneg %p138
      // Predicated region
      $region9: #{tpu_custom_call.1} parent=5 // pred_check
        _
      $region10: #{tpu_custom_call.1} parent=5 // pred_check_branch
        %141 = sbr.rel (%p138) target = $region12
      $region11: #{tpu_custom_call.1} parent=5 // pred_region
        %s142 = ssub.s32 %s13, 1
        // Predicated region
        $region13: #{tpu_custom_call.1} parent=11 // pred_check
          %p143 = pneg %p60
        $region14: #{tpu_custom_call.1} parent=11 // pred_check_branch
          %145 = sbr.rel (%p143) target = $region16
        $region15: #{tpu_custom_call.1} parent=11 // pred_region
          _
        $region16: #{tpu_custom_call.1} parent=11 // pred_fallthru
          _
        // Predicated region
        $region17: #{tpu_custom_call.1} parent=11 // pred_check
          %p146 = pneg %p81
        $region18: #{tpu_custom_call.1} parent=11 // pred_check_branch
          %148 = sbr.rel (%p146) target = $region20
        $region19: #{tpu_custom_call.1} parent=11 // pred_region
          _
        $region20: #{tpu_custom_call.1} parent=11 // pred_fallthru
          _
        // Predicated region
        $region21: #{tpu_custom_call.1} parent=11 // pred_check
          %p149 = pneg %p102
        $region22: #{tpu_custom_call.1} parent=11 // pred_check_branch
          %151 = sbr.rel (%p149) target = $region24
        $region23: #{tpu_custom_call.1} parent=11 // pred_region
          _
        $region24: #{tpu_custom_call.1} parent=11 // pred_fallthru
          _
      $region12: #{tpu_custom_call.1} parent=5 // pred_fallthru
        _
      %p152 = scmp.lt.s32.totalorder %s13, 2
      // Predicated region
      $region25: #{tpu_custom_call.1} parent=5 // pred_check
        %p153 = pneg %p152
      $region26: #{tpu_custom_call.1} parent=5 // pred_check_branch
        %155 = sbr.rel (%p153) target = $region28
      $region27: #{tpu_custom_call.1} parent=5 // pred_region
        // Predicated region
        $region29: #{tpu_custom_call.1} parent=27 // pred_check
          %p156 = pneg %p33
        $region30: #{tpu_custom_call.1} parent=27 // pred_check_branch
          %158 = sbr.rel (%p156) target = $region32
        $region31: #{tpu_custom_call.1} parent=27 // pred_region
          %s159 = smul.u32 63, %s13
          %p160 = scmp.lt.s32.totalorder %s159, 125
          %s161 = scalar_select %p160, %s159, 125
          %s162 = smul.addr %s161, 8
          %s163 = scalar_lea.vmem %s0, %s162
          %s164 = smul.u32 63, %s13
        $region32: #{tpu_custom_call.1} parent=27 // pred_fallthru
          _
      $region28: #{tpu_custom_call.1} parent=5 // pred_fallthru
        _
      %p165 = scmp.le.s32.totalorder 1, %s13
      %p166 = scmp.lt.s32.totalorder %s13, 3
      %p167 = pnand %p165, %p166
      %p168 = pneg %p167
      // Predicated region
      $region33: #{tpu_custom_call.1} parent=5 // pred_check
        _
      $region34: #{tpu_custom_call.1} parent=5 // pred_check_branch
        %170 = sbr.rel (%p167) target = $region36
      $region35: #{tpu_custom_call.1} parent=5 // pred_region
        %s171 = ssub.s32 %s13, 1
        %s172 = smul.u32 63, %s18
        %p173 = scmp.lt.s32.totalorder %s172, 125
        %s174 = scalar_select %p173, %s172, 125
        %s175 = smul.addr %s174, 8
        %s176 = scalar_lea.vmem %s0, %s175
        %p177 = pneg %p39
        %p178 = pneg %p36
        %p179 = pneg %p60
        %p180 = pneg %p57
        %p181 = pneg %p81
        %p182 = pneg %p78
        %p183 = pneg %p102
        %p184 = pneg %p99
        %p185 = pneg %p128
        %p186 = pneg %p125
        %s187 = sand.u32 %s115, 1
        %s188 = scalar_lea.sflag [#allocation3], %s187
        %s189 = sand.u32 %s115, 1
        %s190 = smul.addr %s189, 504
        %s191 = scalar_lea.vmem [#allocation2], %s190
        %s192 = smul.u32 63, %s18
        %p193 = scmp.lt.s32.totalorder %s192, 125
        %s194 = scalar_select %p193, %s192, 125
        %s195 = smul.addr %s194, 8
        %s196 = scalar_lea.vmem %s0, %s195
        %s197 = smul.u32 63, %s18
        %s198 = smul.u32 63, %s18
        %v204 = vld [vmem:[%s196] sm:$0xff]
        %v205 = vld [vmem:[%s196 + $0x8] sm:$0xff]
        %v206 = vld [vmem:[%s196 + $0x10] sm:$0xff]
        %v207 = vld [vmem:[%s196 + $0x18] sm:$0xff]
        %v208 = vld [vmem:[%s196 + $0x20] sm:$0xff]
        %v209 = vld [vmem:[%s196 + $0x28] sm:$0xff]
        %v210 = vld [vmem:[%s196 + $0x30] sm:$0xff]
        %v211 = vld [vmem:[%s196 + $0x38] sm:$0xff]
        %v212 = vld [vmem:[%s196 + $0x40] sm:$0xff]
        %v213 = vld [vmem:[%s196 + $0x48] sm:$0xff]
        %v214 = vld [vmem:[%s196 + $0x50] sm:$0xff]
        %v215 = vld [vmem:[%s196 + $0x58] sm:$0xff]
        %v216 = vld [vmem:[%s196 + $0x60] sm:$0xff]
        %v217 = vld [vmem:[%s196 + $0x68] sm:$0xff]
        %v218 = vld [vmem:[%s196 + $0x70] sm:$0xff]
        %v219 = vld [vmem:[%s196 + $0x78] sm:$0xff]
        %v220 = vld [vmem:[%s196 + $0x80] sm:$0xff]
        %v221 = vld [vmem:[%s196 + $0x88] sm:$0xff]
        %v222 = vld [vmem:[%s196 + $0x90] sm:$0xff]
        %v223 = vld [vmem:[%s196 + $0x98] sm:$0xff]
        %v224 = vld [vmem:[%s196 + $0xa0] sm:$0xff]
        %v225 = vld [vmem:[%s196 + $0xa8] sm:$0xff]
        %v226 = vld [vmem:[%s196 + $0xb0] sm:$0xff]
        %v227 = vld [vmem:[%s196 + $0xb8] sm:$0xff]
        %v228 = vld [vmem:[%s196 + $0xc0] sm:$0xff]
        %v229 = vld [vmem:[%s196 + $0xc8] sm:$0xff]
        %v230 = vld [vmem:[%s196 + $0xd0] sm:$0xff]
        %v231 = vld [vmem:[%s196 + $0xd8] sm:$0xff]
        %v232 = vld [vmem:[%s196 + $0xe0] sm:$0xff]
        %v233 = vld [vmem:[%s196 + $0xe8] sm:$0xff]
        %v234 = vld [vmem:[%s196 + $0xf0] sm:$0xff]
        %v235 = vld [vmem:[%s196 + $0xf8] sm:$0xff]
        %v236 = vld [vmem:[%s196 + $0x100] sm:$0xff]
        %v237 = vld [vmem:[%s196 + $0x108] sm:$0xff]
        %v238 = vld [vmem:[%s196 + $0x110] sm:$0xff]
        %v239 = vld [vmem:[%s196 + $0x118] sm:$0xff]
        %v240 = vld [vmem:[%s196 + $0x120] sm:$0xff]
        %v241 = vld [vmem:[%s196 + $0x128] sm:$0xff]
        %v242 = vld [vmem:[%s196 + $0x130] sm:$0xff]
        %v243 = vld [vmem:[%s196 + $0x138] sm:$0xff]
        %v244 = vld [vmem:[%s196 + $0x140] sm:$0xff]
        %v245 = vld [vmem:[%s196 + $0x148] sm:$0xff]
        %v246 = vld [vmem:[%s196 + $0x150] sm:$0xff]
        %v247 = vld [vmem:[%s196 + $0x158] sm:$0xff]
        %v248 = vld [vmem:[%s196 + $0x160] sm:$0xff]
        %v249 = vld [vmem:[%s196 + $0x168] sm:$0xff]
        %v250 = vld [vmem:[%s196 + $0x170] sm:$0xff]
        %v251 = vld [vmem:[%s196 + $0x178] sm:$0xff]
        %v252 = vld [vmem:[%s196 + $0x180] sm:$0xff]
        %v253 = vld [vmem:[%s196 + $0x188] sm:$0xff]
        %v254 = vld [vmem:[%s196 + $0x190] sm:$0xff]
        %v255 = vld [vmem:[%s196 + $0x198] sm:$0xff]
        %v256 = vld [vmem:[%s196 + $0x1a0] sm:$0xff]
        %v257 = vld [vmem:[%s196 + $0x1a8] sm:$0xff]
        %v258 = vld [vmem:[%s196 + $0x1b0] sm:$0xff]
        %v259 = vld [vmem:[%s196 + $0x1b8] sm:$0xff]
        %v260 = vld [vmem:[%s196 + $0x1c0] sm:$0xff]
        %v261 = vld [vmem:[%s196 + $0x1c8] sm:$0xff]
        %v262 = vld [vmem:[%s196 + $0x1d0] sm:$0xff]
        %v263 = vld [vmem:[%s196 + $0x1d8] sm:$0xff]
        %v264 = vld [vmem:[%s196 + $0x1e0] sm:$0xff]
        %v265 = vld [vmem:[%s196 + $0x1e8] sm:$0xff]
        %v266 = vld [vmem:[%s196 + $0x1f0] sm:$0xff]
        %v267 = vld [vmem:[%s3] sm:$0x3f]
        %v268 = vld [vmem:[%s1] sm:$0xff]
        %v269 = vlaneseq
        %v270 = vshrl.u32 %v269, 7
        %v271 = vsub.s32 0, %v270
        %v272 = vrot.slane %v267, %v271
        %vm273 = vcmask 64512
        %v275 = vsel %vm273, %v204, 0
        %v278 = vsel %vm273, %v205, 0
        %v281 = vsel %vm273, %v206, 0
        %v284 = vsel %vm273, %v207, 0
        %v287 = vsel %vm273, %v208, 0
        %v290 = vsel %vm273, %v209, 0
        %v293 = vsel %vm273, %v210, 0
        %v296 = vsel %vm273, %v211, 0
        %v299 = vsel %vm273, %v212, 0
        %v302 = vsel %vm273, %v213, 0
        %v305 = vsel %vm273, %v214, 0
        %v308 = vsel %vm273, %v215, 0
        %v311 = vsel %vm273, %v216, 0
        %v314 = vsel %vm273, %v217, 0
        %v317 = vsel %vm273, %v218, 0
        %v320 = vsel %vm273, %v219, 0
        %v323 = vsel %vm273, %v220, 0
        %v326 = vsel %vm273, %v221, 0
        %v329 = vsel %vm273, %v222, 0
        %v332 = vsel %vm273, %v223, 0
        %v335 = vsel %vm273, %v224, 0
        %v338 = vsel %vm273, %v225, 0
        %v341 = vsel %vm273, %v226, 0
        %v344 = vsel %vm273, %v227, 0
        %v347 = vsel %vm273, %v228, 0
        %v350 = vsel %vm273, %v229, 0
        %v353 = vsel %vm273, %v230, 0
        %v356 = vsel %vm273, %v231, 0
        %v359 = vsel %vm273, %v232, 0
        %v362 = vsel %vm273, %v233, 0
        %v365 = vsel %vm273, %v234, 0
        %v368 = vsel %vm273, %v235, 0
        %v371 = vsel %vm273, %v236, 0
        %v374 = vsel %vm273, %v237, 0
        %v377 = vsel %vm273, %v238, 0
        %v380 = vsel %vm273, %v239, 0
        %v383 = vsel %vm273, %v240, 0
        %v386 = vsel %vm273, %v241, 0
        %v389 = vsel %vm273, %v242, 0
        %v392 = vsel %vm273, %v243, 0
        %v395 = vsel %vm273, %v244, 0
        %v398 = vsel %vm273, %v245, 0
        %v401 = vsel %vm273, %v246, 0
        %v404 = vsel %vm273, %v247, 0
        %v407 = vsel %vm273, %v248, 0
        %v410 = vsel %vm273, %v249, 0
        %v413 = vsel %vm273, %v250, 0
        %v416 = vsel %vm273, %v251, 0
        %v419 = vsel %vm273, %v252, 0
        %v422 = vsel %vm273, %v253, 0
        %v425 = vsel %vm273, %v254, 0
        %v428 = vsel %vm273, %v255, 0
        %v431 = vsel %vm273, %v256, 0
        %v434 = vsel %vm273, %v257, 0
        %v437 = vsel %vm273, %v258, 0
        %v440 = vsel %vm273, %v259, 0
        %v443 = vsel %vm273, %v260, 0
        %v446 = vsel %vm273, %v261, 0
        %v449 = vsel %vm273, %v262, 0
        %v452 = vsel %vm273, %v263, 0
        %v455 = vsel %vm273, %v264, 0
        %v458 = vsel %vm273, %v265, 0
        %v461 = vsel %vm273, %v266, 0
        %463 = vmatprep.subr.mxu0 0.0
        %464 = vmatpush1.msra.mxu0 %v268
        %465 = vmatprep.subr.mxu0 0.0
        %466 = vmatpush1.msra.mxu0 0.0
        %467 = vmatprep.subr.mxu0 0.0
        %468 = vmatpush1.msra.mxu0 0.0
        %469 = vmatprep.subr.mxu0 0.0
        %470 = vmatpush1.msra.mxu0 0.0
        %471 = vmatprep.subr.mxu0 0.0
        %472 = vmatpush1.msra.mxu0 0.0
        %473 = vmatprep.subr.mxu0 0.0
        %474 = vmatpush1.msra.mxu0 0.0
        %475 = vmatprep.subr.mxu0 0.0
        %476 = vmatpush1.msra.mxu0 0.0
        %477 = vmatprep.subr.mxu0 0.0
        %478 = vmatpush1.msra.mxu0 0.0
        %479 = vmatprep.subr.mxu0 0.0
        %480 = vmatpush1.msra.mxu0 0.0
        %481 = vmatprep.subr.mxu0 0.0
        %482 = vmatpush1.msra.mxu0 0.0
        %483 = vmatprep.subr.mxu0 0.0
        %484 = vmatpush1.msra.mxu0 0.0
        %485 = vmatprep.subr.mxu0 0.0
        %486 = vmatpush1.msra.mxu0 0.0
        %487 = vmatprep.subr.mxu0 0.0
        %488 = vmatpush1.msra.mxu0 0.0
        %489 = vmatprep.subr.mxu0 0.0
        %490 = vmatpush1.msra.mxu0 0.0
        %491 = vmatprep.subr.mxu0 0.0
        %492 = vmatpush1.msra.mxu0 0.0
        %493 = vmatprep.subr.mxu0 0.0
        %494 = vmatpush1.msra.mxu0 0.0
        %495 = vmatprep.subr.mxu0 0.0
        %496 = vmatpush1.msra.mxu0 0.0
        %497 = vmatprep.subr.mxu0 0.0
        %498 = vmatpush1.msra.mxu0 0.0
        %499 = vmatprep.subr.mxu0 0.0
        %500 = vmatpush1.msra.mxu0 0.0
        %501 = vmatprep.subr.mxu0 0.0
        %502 = vmatpush1.msra.mxu0 0.0
        %503 = vmatprep.subr.mxu0 0.0
        %504 = vmatpush1.msra.mxu0 0.0
        %505 = vmatprep.subr.mxu0 0.0
        %506 = vmatpush1.msra.mxu0 0.0
        %507 = vmatprep.subr.mxu0 0.0
        %508 = vmatpush1.msra.mxu0 0.0
        %509 = vmatprep.subr.mxu0 0.0
        %510 = vmatpush1.msra.mxu0 0.0
        %511 = vmatprep.subr.mxu0 0.0
        %512 = vmatpush1.msra.mxu0 0.0
        %513 = vmatprep.subr.mxu0 0.0
        %514 = vmatpush1.msra.mxu0 0.0
        %515 = vmatprep.subr.mxu0 0.0
        %516 = vmatpush1.msra.mxu0 0.0
        %517 = vmatprep.subr.mxu0 0.0
        %518 = vmatpush1.msra.mxu0 0.0
        %519 = vmatprep.subr.mxu0 0.0
        %520 = vmatpush1.msra.mxu0 0.0
        %521 = vmatprep.subr.mxu0 0.0
        %522 = vmatpush1.msra.mxu0 0.0
        %523 = vmatprep.subr.mxu0 0.0
        %524 = vmatpush1.msra.mxu0 0.0
        %525 = vmatprep.subr.mxu0 0.0
        %526 = vmatpush1.msra.mxu0 0.0
        %527 = vmatprep.mubr.f32.mxu0 0.0
        %528 = vmatmul.mubr.f32.gmra.mrb[0].mxu0 %v275
        %v529 = vpop.f32.mrb[0].mxu0
        %v530 = vadd.f32 %v272, %v529
        %v531 = vpop.f32.mrb[0].mxu0
        %532 = vmatprep.mubr.f32.mxu0 0.0
        %533 = vmatmul.mubr.f32.gmra.mrb[0].mxu0 %v278
        %v534 = vpop.f32.mrb[0].mxu0
        %v535 = vadd.f32 %v272, %v534
        %v536 = vpop.f32.mrb[0].mxu0
        %537 = vmatprep.mubr.f32.mxu0 0.0
        %538 = vmatmul.mubr.f32.gmra.mrb[0].mxu0 %v281
        %v539 = vpop.f32.mrb[0].mxu0
        %v540 = vadd.f32 %v272, %v539
        %v541 = vpop.f32.mrb[0].mxu0
        %542 = vmatprep.mubr.f32.mxu0 0.0
        %543 = vmatmul.mubr.f32.gmra.mrb[0].mxu0 %v284
        %v544 = vpop.f32.mrb[0].mxu0
        %v545 = vadd.f32 %v272, %v544
        %v546 = vpop.f32.mrb[0].mxu0
        %547 = vmatprep.mubr.f32.mxu0 0.0
        %548 = vmatmul.mubr.f32.gmra.mrb[0].mxu0 %v287
        %v549 = vpop.f32.mrb[0].mxu0
        %v550 = vadd.f32 %v272, %v549
        %v551 = vpop.f32.mrb[0].mxu0
        %552 = vmatprep.mubr.f32.mxu0 0.0
        %553 = vmatmul.mubr.f32.gmra.mrb[0].mxu0 %v290
        %v554 = vpop.f32.mrb[0].mxu0
        %v555 = vadd.f32 %v272, %v554
        %v556 = vpop.f32.mrb[0].mxu0
        %557 = vmatprep.mubr.f32.mxu0 0.0
        %558 = vmatmul.mubr.f32.gmra.mrb[0].mxu0 %v293
        %v559 = vpop.f32.mrb[0].mxu0
        %v560 = vadd.f32 %v272, %v559
        %v561 = vpop.f32.mrb[0].mxu0
        %562 = vmatprep.mubr.f32.mxu0 0.0
        %563 = vmatmul.mubr.f32.gmra.mrb[0].mxu0 %v296
        %v564 = vpop.f32.mrb[0].mxu0
        %v565 = vadd.f32 %v272, %v564
        %v566 = vpop.f32.mrb[0].mxu0
        %567 = vmatprep.mubr.f32.mxu0 0.0
        %568 = vmatmul.mubr.f32.gmra.mrb[0].mxu0 %v299
        %v569 = vpop.f32.mrb[0].mxu0
        %v570 = vadd.f32 %v272, %v569
        %v571 = vpop.f32.mrb[0].mxu0
        %572 = vmatprep.mubr.f32.mxu0 0.0
        %573 = vmatmul.mubr.f32.gmra.mrb[0].mxu0 %v302
        %v574 = vpop.f32.mrb[0].mxu0
        %v575 = vadd.f32 %v272, %v574
        %v576 = vpop.f32.mrb[0].mxu0
        %577 = vmatprep.mubr.f32.mxu0 0.0
        %578 = vmatmul.mubr.f32.gmra.mrb[0].mxu0 %v305
        %v579 = vpop.f32.mrb[0].mxu0
        %v580 = vadd.f32 %v272, %v579
        %v581 = vpop.f32.mrb[0].mxu0
        %582 = vmatprep.mubr.f32.mxu0 0.0
        %583 = vmatmul.mubr.f32.gmra.mrb[0].mxu0 %v308
        %v584 = vpop.f32.mrb[0].mxu0
        %v585 = vadd.f32 %v272, %v584
        %v586 = vpop.f32.mrb[0].mxu0
        %587 = vmatprep.mubr.f32.mxu0 0.0
        %588 = vmatmul.mubr.f32.gmra.mrb[0].mxu0 %v311
        %v589 = vpop.f32.mrb[0].mxu0
        %v590 = vadd.f32 %v272, %v589
        %v591 = vpop.f32.mrb[0].mxu0
        %592 = vmatprep.mubr.f32.mxu0 0.0
        %593 = vmatmul.mubr.f32.gmra.mrb[0].mxu0 %v314
        %v594 = vpop.f32.mrb[0].mxu0
        %v595 = vadd.f32 %v272, %v594
        %v596 = vpop.f32.mrb[0].mxu0
        %597 = vmatprep.mubr.f32.mxu0 0.0
        %598 = vmatmul.mubr.f32.gmra.mrb[0].mxu0 %v317
        %v599 = vpop.f32.mrb[0].mxu0
        %v600 = vadd.f32 %v272, %v599
        %v601 = vpop.f32.mrb[0].mxu0
        %602 = vmatprep.mubr.f32.mxu0 0.0
        %603 = vmatmul.mubr.f32.gmra.mrb[0].mxu0 %v320
        %v604 = vpop.f32.mrb[0].mxu0
        %v605 = vadd.f32 %v272, %v604
        %v606 = vpop.f32.mrb[0].mxu0
        %607 = vmatprep.mubr.f32.mxu0 0.0
        %608 = vmatmul.mubr.f32.gmra.mrb[0].mxu0 %v323
        %v609 = vpop.f32.mrb[0].mxu0
        %v610 = vadd.f32 %v272, %v609
        %v611 = vpop.f32.mrb[0].mxu0
        %612 = vmatprep.mubr.f32.mxu0 0.0
        %613 = vmatmul.mubr.f32.gmra.mrb[0].mxu0 %v326
        %v614 = vpop.f32.mrb[0].mxu0
        %v615 = vadd.f32 %v272, %v614
        %v616 = vpop.f32.mrb[0].mxu0
        %617 = vmatprep.mubr.f32.mxu0 0.0
        %618 = vmatmul.mubr.f32.gmra.mrb[0].mxu0 %v329
        %v619 = vpop.f32.mrb[0].mxu0
        %v620 = vadd.f32 %v272, %v619
        %v621 = vpop.f32.mrb[0].mxu0
        %622 = vmatprep.mubr.f32.mxu0 0.0
        %623 = vmatmul.mubr.f32.gmra.mrb[0].mxu0 %v332
        %v624 = vpop.f32.mrb[0].mxu0
        %v625 = vadd.f32 %v272, %v624
        %v626 = vpop.f32.mrb[0].mxu0
        %627 = vmatprep.mubr.f32.mxu0 0.0
        %628 = vmatmul.mubr.f32.gmra.mrb[0].mxu0 %v335
        %v629 = vpop.f32.mrb[0].mxu0
        %v630 = vadd.f32 %v272, %v629
        %v631 = vpop.f32.mrb[0].mxu0
        %632 = vmatprep.mubr.f32.mxu0 0.0
        %633 = vmatmul.mubr.f32.gmra.mrb[0].mxu0 %v338
        %v634 = vpop.f32.mrb[0].mxu0
        %v635 = vadd.f32 %v272, %v634
        %v636 = vpop.f32.mrb[0].mxu0
        %637 = vmatprep.mubr.f32.mxu0 0.0
        %638 = vmatmul.mubr.f32.gmra.mrb[0].mxu0 %v341
        %v639 = vpop.f32.mrb[0].mxu0
        %v640 = vadd.f32 %v272, %v639
        %v641 = vpop.f32.mrb[0].mxu0
        %642 = vmatprep.mubr.f32.mxu0 0.0
        %643 = vmatmul.mubr.f32.gmra.mrb[0].mxu0 %v344
        %v644 = vpop.f32.mrb[0].mxu0
        %v645 = vadd.f32 %v272, %v644
        %v646 = vpop.f32.mrb[0].mxu0
        %647 = vmatprep.mubr.f32.mxu0 0.0
        %648 = vmatmul.mubr.f32.gmra.mrb[0].mxu0 %v347
        %v649 = vpop.f32.mrb[0].mxu0
        %v650 = vadd.f32 %v272, %v649
        %v651 = vpop.f32.mrb[0].mxu0
        %652 = vmatprep.mubr.f32.mxu0 0.0
        %653 = vmatmul.mubr.f32.gmra.mrb[0].mxu0 %v350
        %v654 = vpop.f32.mrb[0].mxu0
        %v655 = vadd.f32 %v272, %v654
        %v656 = vpop.f32.mrb[0].mxu0
        %657 = vmatprep.mubr.f32.mxu0 0.0
        %658 = vmatmul.mubr.f32.gmra.mrb[0].mxu0 %v353
        %v659 = vpop.f32.mrb[0].mxu0
        %v660 = vadd.f32 %v272, %v659
        %v661 = vpop.f32.mrb[0].mxu0
        %662 = vmatprep.mubr.f32.mxu0 0.0
        %663 = vmatmul.mubr.f32.gmra.mrb[0].mxu0 %v356
        %v664 = vpop.f32.mrb[0].mxu0
        %v665 = vadd.f32 %v272, %v664
        %v666 = vpop.f32.mrb[0].mxu0
        %667 = vmatprep.mubr.f32.mxu0 0.0
        %668 = vmatmul.mubr.f32.gmra.mrb[0].mxu0 %v359
        %v669 = vpop.f32.mrb[0].mxu0
        %v670 = vadd.f32 %v272, %v669
        %v671 = vpop.f32.mrb[0].mxu0
        %672 = vmatprep.mubr.f32.mxu0 0.0
        %673 = vmatmul.mubr.f32.gmra.mrb[0].mxu0 %v362
        %v674 = vpop.f32.mrb[0].mxu0
        %v675 = vadd.f32 %v272, %v674
        %v676 = vpop.f32.mrb[0].mxu0
        %677 = vmatprep.mubr.f32.mxu0 0.0
        %678 = vmatmul.mubr.f32.gmra.mrb[0].mxu0 %v365
        %v679 = vpop.f32.mrb[0].mxu0
        %v680 = vadd.f32 %v272, %v679
        %v681 = vpop.f32.mrb[0].mxu0
        %682 = vmatprep.mubr.f32.mxu0 0.0
        %683 = vmatmul.mubr.f32.gmra.mrb[0].mxu0 %v368
        %v684 = vpop.f32.mrb[0].mxu0
        %v685 = vadd.f32 %v272, %v684
        %v686 = vpop.f32.mrb[0].mxu0
        %687 = vmatprep.mubr.f32.mxu0 0.0
        %688 = vmatmul.mubr.f32.gmra.mrb[0].mxu0 %v371
        %v689 = vpop.f32.mrb[0].mxu0
        %v690 = vadd.f32 %v272, %v689
        %v691 = vpop.f32.mrb[0].mxu0
        %692 = vmatprep.mubr.f32.mxu0 0.0
        %693 = vmatmul.mubr.f32.gmra.mrb[0].mxu0 %v374
        %v694 = vpop.f32.mrb[0].mxu0
        %v695 = vadd.f32 %v272, %v694
        %v696 = vpop.f32.mrb[0].mxu0
        %697 = vmatprep.mubr.f32.mxu0 0.0
        %698 = vmatmul.mubr.f32.gmra.mrb[0].mxu0 %v377
        %v699 = vpop.f32.mrb[0].mxu0
        %v700 = vadd.f32 %v272, %v699
        %v701 = vpop.f32.mrb[0].mxu0
        %702 = vmatprep.mubr.f32.mxu0 0.0
        %703 = vmatmul.mubr.f32.gmra.mrb[0].mxu0 %v380
        %v704 = vpop.f32.mrb[0].mxu0
        %v705 = vadd.f32 %v272, %v704
        %v706 = vpop.f32.mrb[0].mxu0
        %707 = vmatprep.mubr.f32.mxu0 0.0
        %708 = vmatmul.mubr.f32.gmra.mrb[0].mxu0 %v383
        %v709 = vpop.f32.mrb[0].mxu0
        %v710 = vadd.f32 %v272, %v709
        %v711 = vpop.f32.mrb[0].mxu0
        %712 = vmatprep.mubr.f32.mxu0 0.0
        %713 = vmatmul.mubr.f32.gmra.mrb[0].mxu0 %v386
        %v714 = vpop.f32.mrb[0].mxu0
        %v715 = vadd.f32 %v272, %v714
        %v716 = vpop.f32.mrb[0].mxu0
        %717 = vmatprep.mubr.f32.mxu0 0.0
        %718 = vmatmul.mubr.f32.gmra.mrb[0].mxu0 %v389
        %v719 = vpop.f32.mrb[0].mxu0
        %v720 = vadd.f32 %v272, %v719
        %v721 = vpop.f32.mrb[0].mxu0
        %722 = vmatprep.mubr.f32.mxu0 0.0
        %723 = vmatmul.mubr.f32.gmra.mrb[0].mxu0 %v392
        %v724 = vpop.f32.mrb[0].mxu0
        %v725 = vadd.f32 %v272, %v724
        %v726 = vpop.f32.mrb[0].mxu0
        %727 = vmatprep.mubr.f32.mxu0 0.0
        %728 = vmatmul.mubr.f32.gmra.mrb[0].mxu0 %v395
        %v729 = vpop.f32.mrb[0].mxu0
        %v730 = vadd.f32 %v272, %v729
        %v731 = vpop.f32.mrb[0].mxu0
        %732 = vmatprep.mubr.f32.mxu0 0.0
        %733 = vmatmul.mubr.f32.gmra.mrb[0].mxu0 %v398
        %v734 = vpop.f32.mrb[0].mxu0
        %v735 = vadd.f32 %v272, %v734
        %v736 = vpop.f32.mrb[0].mxu0
        %737 = vmatprep.mubr.f32.mxu0 0.0
        %738 = vmatmul.mubr.f32.gmra.mrb[0].mxu0 %v401
        %v739 = vpop.f32.mrb[0].mxu0
        %v740 = vadd.f32 %v272, %v739
        %v741 = vpop.f32.mrb[0].mxu0
        %742 = vmatprep.mubr.f32.mxu0 0.0
        %743 = vmatmul.mubr.f32.gmra.mrb[0].mxu0 %v404
        %v744 = vpop.f32.mrb[0].mxu0
        %v745 = vadd.f32 %v272, %v744
        %v746 = vpop.f32.mrb[0].mxu0
        %747 = vmatprep.mubr.f32.mxu0 0.0
        %748 = vmatmul.mubr.f32.gmra.mrb[0].mxu0 %v407
        %v749 = vpop.f32.mrb[0].mxu0
        %v750 = vadd.f32 %v272, %v749
        %v751 = vpop.f32.mrb[0].mxu0
        %752 = vmatprep.mubr.f32.mxu0 0.0
        %753 = vmatmul.mubr.f32.gmra.mrb[0].mxu0 %v410
        %v754 = vpop.f32.mrb[0].mxu0
        %v755 = vadd.f32 %v272, %v754
        %v756 = vpop.f32.mrb[0].mxu0
        %757 = vmatprep.mubr.f32.mxu0 0.0
        %758 = vmatmul.mubr.f32.gmra.mrb[0].mxu0 %v413
        %v759 = vpop.f32.mrb[0].mxu0
        %v760 = vadd.f32 %v272, %v759
        %v761 = vpop.f32.mrb[0].mxu0
        %762 = vmatprep.mubr.f32.mxu0 0.0
        %763 = vmatmul.mubr.f32.gmra.mrb[0].mxu0 %v416
        %v764 = vpop.f32.mrb[0].mxu0
        %v765 = vadd.f32 %v272, %v764
        %v766 = vpop.f32.mrb[0].mxu0
        %767 = vmatprep.mubr.f32.mxu0 0.0
        %768 = vmatmul.mubr.f32.gmra.mrb[0].mxu0 %v419
        %v769 = vpop.f32.mrb[0].mxu0
        %v770 = vadd.f32 %v272, %v769
        %v771 = vpop.f32.mrb[0].mxu0
        %772 = vmatprep.mubr.f32.mxu0 0.0
        %773 = vmatmul.mubr.f32.gmra.mrb[0].mxu0 %v422
        %v774 = vpop.f32.mrb[0].mxu0
        %v775 = vadd.f32 %v272, %v774
        %v776 = vpop.f32.mrb[0].mxu0
        %777 = vmatprep.mubr.f32.mxu0 0.0
        %778 = vmatmul.mubr.f32.gmra.mrb[0].mxu0 %v425
        %v779 = vpop.f32.mrb[0].mxu0
        %v780 = vadd.f32 %v272, %v779
        %v781 = vpop.f32.mrb[0].mxu0
        %782 = vmatprep.mubr.f32.mxu0 0.0
        %783 = vmatmul.mubr.f32.gmra.mrb[0].mxu0 %v428
        %v784 = vpop.f32.mrb[0].mxu0
        %v785 = vadd.f32 %v272, %v784
        %v786 = vpop.f32.mrb[0].mxu0
        %787 = vmatprep.mubr.f32.mxu0 0.0
        %788 = vmatmul.mubr.f32.gmra.mrb[0].mxu0 %v431
        %v789 = vpop.f32.mrb[0].mxu0
        %v790 = vadd.f32 %v272, %v789
        %v791 = vpop.f32.mrb[0].mxu0
        %792 = vmatprep.mubr.f32.mxu0 0.0
        %793 = vmatmul.mubr.f32.gmra.mrb[0].mxu0 %v434
        %v794 = vpop.f32.mrb[0].mxu0
        %v795 = vadd.f32 %v272, %v794
        %v796 = vpop.f32.mrb[0].mxu0
        %797 = vmatprep.mubr.f32.mxu0 0.0
        %798 = vmatmul.mubr.f32.gmra.mrb[0].mxu0 %v437
        %v799 = vpop.f32.mrb[0].mxu0
        %v800 = vadd.f32 %v272, %v799
        %v801 = vpop.f32.mrb[0].mxu0
        %802 = vmatprep.mubr.f32.mxu0 0.0
        %803 = vmatmul.mubr.f32.gmra.mrb[0].mxu0 %v440
        %v804 = vpop.f32.mrb[0].mxu0
        %v805 = vadd.f32 %v272, %v804
        %v806 = vpop.f32.mrb[0].mxu0
        %807 = vmatprep.mubr.f32.mxu0 0.0
        %808 = vmatmul.mubr.f32.gmra.mrb[0].mxu0 %v443
        %v809 = vpop.f32.mrb[0].mxu0
        %v810 = vadd.f32 %v272, %v809
        %v811 = vpop.f32.mrb[0].mxu0
        %812 = vmatprep.mubr.f32.mxu0 0.0
        %813 = vmatmul.mubr.f32.gmra.mrb[0].mxu0 %v446
        %v814 = vpop.f32.mrb[0].mxu0
        %v815 = vadd.f32 %v272, %v814
        %v816 = vpop.f32.mrb[0].mxu0
        %817 = vmatprep.mubr.f32.mxu0 0.0
        %818 = vmatmul.mubr.f32.gmra.mrb[0].mxu0 %v449
        %v819 = vpop.f32.mrb[0].mxu0
        %v820 = vadd.f32 %v272, %v819
        %v821 = vpop.f32.mrb[0].mxu0
        %822 = vmatprep.mubr.f32.mxu0 0.0
        %823 = vmatmul.mubr.f32.gmra.mrb[0].mxu0 %v452
        %v824 = vpop.f32.mrb[0].mxu0
        %v825 = vadd.f32 %v272, %v824
        %v826 = vpop.f32.mrb[0].mxu0
        %827 = vmatprep.mubr.f32.mxu0 0.0
        %828 = vmatmul.mubr.f32.gmra.mrb[0].mxu0 %v455
        %v829 = vpop.f32.mrb[0].mxu0
        %v830 = vadd.f32 %v272, %v829
        %v831 = vpop.f32.mrb[0].mxu0
        %832 = vmatprep.mubr.f32.mxu0 0.0
        %833 = vmatmul.mubr.f32.gmra.mrb[0].mxu0 %v458
        %v834 = vpop.f32.mrb[0].mxu0
        %v835 = vadd.f32 %v272, %v834
        %v836 = vpop.f32.mrb[0].mxu0
        %837 = vmatprep.mubr.f32.mxu0 0.0
        %838 = vmatmul.mubr.f32.gmra.mrb[0].mxu0 %v461
        %v839 = vpop.f32.mrb[0].mxu0
        %v840 = vadd.f32 %v272, %v839
        %v841 = vpop.f32.mrb[0].mxu0
        %842 = vdwg.mxu0
        %v843 = vpack.c.bf16 %v535, %v530
        %v844 = vpack.c.bf16 %v545, %v540
        %v845 = vpack.c.bf16 %v555, %v550
        %v846 = vpack.c.bf16 %v565, %v560
        %v847 = vpack.c.bf16 %v575, %v570
        %v848 = vpack.c.bf16 %v585, %v580
        %v849 = vpack.c.bf16 %v595, %v590
        %v850 = vpack.c.bf16 %v605, %v600
        %v851 = vpack.c.bf16 %v615, %v610
        %v852 = vpack.c.bf16 %v625, %v620
        %v853 = vpack.c.bf16 %v635, %v630
        %v854 = vpack.c.bf16 %v645, %v640
        %v855 = vpack.c.bf16 %v655, %v650
        %v856 = vpack.c.bf16 %v665, %v660
        %v857 = vpack.c.bf16 %v675, %v670
        %v858 = vpack.c.bf16 %v685, %v680
        %v859 = vpack.c.bf16 %v695, %v690
        %v860 = vpack.c.bf16 %v705, %v700
        %v861 = vpack.c.bf16 %v715, %v710
        %v862 = vpack.c.bf16 %v725, %v720
        %v863 = vpack.c.bf16 %v735, %v730
        %v864 = vpack.c.bf16 %v745, %v740
        %v865 = vpack.c.bf16 %v755, %v750
        %v866 = vpack.c.bf16 %v765, %v760
        %v867 = vpack.c.bf16 %v775, %v770
        %v868 = vpack.c.bf16 %v785, %v780
        %v869 = vpack.c.bf16 %v795, %v790
        %v870 = vpack.c.bf16 %v805, %v800
        %v871 = vpack.c.bf16 %v815, %v810
        %v872 = vpack.c.bf16 %v825, %v820
        %v873 = vpack.c.bf16 %v835, %v830
        %v874 = vpack.c.bf16 %v840, %v840
        %v875 = vmul.bf16 %v843, 1120420552
        %v876 = vmul.bf16 %v844, 1120420552
        %v877 = vmul.bf16 %v845, 1120420552
        %v878 = vmul.bf16 %v846, 1120420552
        %v879 = vmul.bf16 %v847, 1120420552
        %v880 = vmul.bf16 %v848, 1120420552
        %v881 = vmul.bf16 %v849, 1120420552
        %v882 = vmul.bf16 %v850, 1120420552
        %v883 = vmul.bf16 %v851, 1120420552
        %v884 = vmul.bf16 %v852, 1120420552
        %v885 = vmul.bf16 %v853, 1120420552
        %v886 = vmul.bf16 %v854, 1120420552
        %v887 = vmul.bf16 %v855, 1120420552
        %v888 = vmul.bf16 %v856, 1120420552
        %v889 = vmul.bf16 %v857, 1120420552
        %v890 = vmul.bf16 %v858, 1120420552
        %v891 = vmul.bf16 %v859, 1120420552
        %v892 = vmul.bf16 %v860, 1120420552
        %v893 = vmul.bf16 %v861, 1120420552
        %v894 = vmul.bf16 %v862, 1120420552
        %v895 = vmul.bf16 %v863, 1120420552
        %v896 = vmul.bf16 %v864, 1120420552
        %v897 = vmul.bf16 %v865, 1120420552
        %v898 = vmul.bf16 %v866, 1120420552
        %v899 = vmul.bf16 %v867, 1120420552
        %v900 = vmul.bf16 %v868, 1120420552
        %v901 = vmul.bf16 %v869, 1120420552
        %v902 = vmul.bf16 %v870, 1120420552
        %v903 = vmul.bf16 %v871, 1120420552
        %v904 = vmul.bf16 %v872, 1120420552
        %v905 = vmul.bf16 %v873, 1120420552
        %v906 = vmul.bf16 %v874, 1120420552
        %v907 = vmin.bf16 %v875, 1101021600
        %v908 = vmin.bf16 %v876, 1101021600
        %v909 = vmin.bf16 %v877, 1101021600
        %v910 = vmin.bf16 %v878, 1101021600
        %v911 = vmin.bf16 %v879, 1101021600
        %v912 = vmin.bf16 %v880, 1101021600
        %v913 = vmin.bf16 %v881, 1101021600
        %v914 = vmin.bf16 %v882, 1101021600
        %v915 = vmin.bf16 %v883, 1101021600
        %v916 = vmin.bf16 %v884, 1101021600
        %v917 = vmin.bf16 %v885, 1101021600
        %v918 = vmin.bf16 %v886, 1101021600
        %v919 = vmin.bf16 %v887, 1101021600
        %v920 = vmin.bf16 %v888, 1101021600
        %v921 = vmin.bf16 %v889, 1101021600
        %v922 = vmin.bf16 %v890, 1101021600
        %v923 = vmin.bf16 %v891, 1101021600
        %v924 = vmin.bf16 %v892, 1101021600
        %v925 = vmin.bf16 %v893, 1101021600
        %v926 = vmin.bf16 %v894, 1101021600
        %v927 = vmin.bf16 %v895, 1101021600
        %v928 = vmin.bf16 %v896, 1101021600
        %v929 = vmin.bf16 %v897, 1101021600
        %v930 = vmin.bf16 %v898, 1101021600
        %v931 = vmin.bf16 %v899, 1101021600
        %v932 = vmin.bf16 %v900, 1101021600
        %v933 = vmin.bf16 %v901, 1101021600
        %v934 = vmin.bf16 %v902, 1101021600
        %v935 = vmin.bf16 %v903, 1101021600
        %v936 = vmin.bf16 %v904, 1101021600
        %v937 = vmin.bf16 %v905, 1101021600
        %v938 = vmin.bf16 %v906, 1101021600
        %v940 = vmul.bf16 %v907, 1069105081
        %v941 = vpow.bf16.pop %v940
        %v943 = vmul.bf16 %v908, 1069105081
        %v944 = vpow.bf16.pop %v943
        %v946 = vmul.bf16 %v909, 1069105081
        %v947 = vpow.bf16.pop %v946
        %v949 = vmul.bf16 %v910, 1069105081
        %v950 = vpow.bf16.pop %v949
        %v952 = vmul.bf16 %v911, 1069105081
        %v953 = vpow.bf16.pop %v952
        %v955 = vmul.bf16 %v912, 1069105081
        %v956 = vpow.bf16.pop %v955
        %v958 = vmul.bf16 %v913, 1069105081
        %v959 = vpow.bf16.pop %v958
        %v961 = vmul.bf16 %v914, 1069105081
        %v962 = vpow.bf16.pop %v961
        %v964 = vmul.bf16 %v915, 1069105081
        %v965 = vpow.bf16.pop %v964
        %v967 = vmul.bf16 %v916, 1069105081
        %v968 = vpow.bf16.pop %v967
        %v970 = vmul.bf16 %v917, 1069105081
        %v971 = vpow.bf16.pop %v970
        %v973 = vmul.bf16 %v918, 1069105081
        %v974 = vpow.bf16.pop %v973
        %v976 = vmul.bf16 %v919, 1069105081
        %v977 = vpow.bf16.pop %v976
        %v979 = vmul.bf16 %v920, 1069105081
        %v980 = vpow.bf16.pop %v979
        %v982 = vmul.bf16 %v921, 1069105081
        %v983 = vpow.bf16.pop %v982
        %v985 = vmul.bf16 %v922, 1069105081
        %v986 = vpow.bf16.pop %v985
        %v988 = vmul.bf16 %v923, 1069105081
        %v989 = vpow.bf16.pop %v988
        %v991 = vmul.bf16 %v924, 1069105081
        %v992 = vpow.bf16.pop %v991
        %v994 = vmul.bf16 %v925, 1069105081
        %v995 = vpow.bf16.pop %v994
        %v997 = vmul.bf16 %v926, 1069105081
        %v998 = vpow.bf16.pop %v997
        %v1000 = vmul.bf16 %v927, 1069105081
        %v1001 = vpow.bf16.pop %v1000
        %v1003 = vmul.bf16 %v928, 1069105081
        %v1004 = vpow.bf16.pop %v1003
        %v1006 = vmul.bf16 %v929, 1069105081
        %v1007 = vpow.bf16.pop %v1006
        %v1009 = vmul.bf16 %v930, 1069105081
        %v1010 = vpow.bf16.pop %v1009
        %v1012 = vmul.bf16 %v931, 1069105081
        %v1013 = vpow.bf16.pop %v1012
        %v1015 = vmul.bf16 %v932, 1069105081
        %v1016 = vpow.bf16.pop %v1015
        %v1018 = vmul.bf16 %v933, 1069105081
        %v1019 = vpow.bf16.pop %v1018
        %v1021 = vmul.bf16 %v934, 1069105081
        %v1022 = vpow.bf16.pop %v1021
        %v1024 = vmul.bf16 %v935, 1069105081
        %v1025 = vpow.bf16.pop %v1024
        %v1027 = vmul.bf16 %v936, 1069105081
        %v1028 = vpow.bf16.pop %v1027
        %v1030 = vmul.bf16 %v937, 1069105081
        %v1031 = vpow.bf16.pop %v1030
        %v1033 = vmul.bf16 %v938, 1069105081
        %v1034 = vpow.bf16.pop %v1033
        %v1035 = vadd.bf16 %v941, 1065369472
        %v1036 = vadd.bf16 %v944, 1065369472
        %v1037 = vadd.bf16 %v947, 1065369472
        %v1038 = vadd.bf16 %v950, 1065369472
        %v1039 = vadd.bf16 %v953, 1065369472
        %v1040 = vadd.bf16 %v956, 1065369472
        %v1041 = vadd.bf16 %v959, 1065369472
        %v1042 = vadd.bf16 %v962, 1065369472
        %v1043 = vadd.bf16 %v965, 1065369472
        %v1044 = vadd.bf16 %v968, 1065369472
        %v1045 = vadd.bf16 %v971, 1065369472
        %v1046 = vadd.bf16 %v974, 1065369472
        %v1047 = vadd.bf16 %v977, 1065369472
        %v1048 = vadd.bf16 %v980, 1065369472
        %v1049 = vadd.bf16 %v983, 1065369472
        %v1050 = vadd.bf16 %v986, 1065369472
        %v1051 = vadd.bf16 %v989, 1065369472
        %v1052 = vadd.bf16 %v992, 1065369472
        %v1053 = vadd.bf16 %v995, 1065369472
        %v1054 = vadd.bf16 %v998, 1065369472
        %v1055 = vadd.bf16 %v1001, 1065369472
        %v1056 = vadd.bf16 %v1004, 1065369472
        %v1057 = vadd.bf16 %v1007, 1065369472
        %v1058 = vadd.bf16 %v1010, 1065369472
        %v1059 = vadd.bf16 %v1013, 1065369472
        %v1060 = vadd.bf16 %v1016, 1065369472
        %v1061 = vadd.bf16 %v1019, 1065369472
        %v1062 = vadd.bf16 %v1022, 1065369472
        %v1063 = vadd.bf16 %v1025, 1065369472
        %v1064 = vadd.bf16 %v1028, 1065369472
        %v1065 = vadd.bf16 %v1031, 1065369472
        %v1066 = vadd.bf16 %v1034, 1065369472
        %v1067 = vlog2.bf16.pop %v1035
        %v1069 = vmul.bf16 %v1067, 1060192049
        %v1070 = vlog2.bf16.pop %v1036
        %v1072 = vmul.bf16 %v1070, 1060192049
        %v1073 = vlog2.bf16.pop %v1037
        %v1075 = vmul.bf16 %v1073, 1060192049
        %v1076 = vlog2.bf16.pop %v1038
        %v1078 = vmul.bf16 %v1076, 1060192049
        %v1079 = vlog2.bf16.pop %v1039
        %v1081 = vmul.bf16 %v1079, 1060192049
        %v1082 = vlog2.bf16.pop %v1040
        %v1084 = vmul.bf16 %v1082, 1060192049
        %v1085 = vlog2.bf16.pop %v1041
        %v1087 = vmul.bf16 %v1085, 1060192049
        %v1088 = vlog2.bf16.pop %v1042
        %v1090 = vmul.bf16 %v1088, 1060192049
        %v1091 = vlog2.bf16.pop %v1043
        %v1093 = vmul.bf16 %v1091, 1060192049
        %v1094 = vlog2.bf16.pop %v1044
        %v1096 = vmul.bf16 %v1094, 1060192049
        %v1097 = vlog2.bf16.pop %v1045
        %v1099 = vmul.bf16 %v1097, 1060192049
        %v1100 = vlog2.bf16.pop %v1046
        %v1102 = vmul.bf16 %v1100, 1060192049
        %v1103 = vlog2.bf16.pop %v1047
        %v1105 = vmul.bf16 %v1103, 1060192049
        %v1106 = vlog2.bf16.pop %v1048
        %v1108 = vmul.bf16 %v1106, 1060192049
        %v1109 = vlog2.bf16.pop %v1049
        %v1111 = vmul.bf16 %v1109, 1060192049
        %v1112 = vlog2.bf16.pop %v1050
        %v1114 = vmul.bf16 %v1112, 1060192049
        %v1115 = vlog2.bf16.pop %v1051
        %v1117 = vmul.bf16 %v1115, 1060192049
        %v1118 = vlog2.bf16.pop %v1052
        %v1120 = vmul.bf16 %v1118, 1060192049
        %v1121 = vlog2.bf16.pop %v1053
        %v1123 = vmul.bf16 %v1121, 1060192049
        %v1124 = vlog2.bf16.pop %v1054
        %v1126 = vmul.bf16 %v1124, 1060192049
        %v1127 = vlog2.bf16.pop %v1055
        %v1129 = vmul.bf16 %v1127, 1060192049
        %v1130 = vlog2.bf16.pop %v1056
        %v1132 = vmul.bf16 %v1130, 1060192049
        %v1133 = vlog2.bf16.pop %v1057
        %v1135 = vmul.bf16 %v1133, 1060192049
        %v1136 = vlog2.bf16.pop %v1058
        %v1138 = vmul.bf16 %v1136, 1060192049
        %v1139 = vlog2.bf16.pop %v1059
        %v1141 = vmul.bf16 %v1139, 1060192049
        %v1142 = vlog2.bf16.pop %v1060
        %v1144 = vmul.bf16 %v1142, 1060192049
        %v1145 = vlog2.bf16.pop %v1061
        %v1147 = vmul.bf16 %v1145, 1060192049
        %v1148 = vlog2.bf16.pop %v1062
        %v1150 = vmul.bf16 %v1148, 1060192049
        %v1151 = vlog2.bf16.pop %v1063
        %v1153 = vmul.bf16 %v1151, 1060192049
        %v1154 = vlog2.bf16.pop %v1064
        %v1156 = vmul.bf16 %v1154, 1060192049
        %v1157 = vlog2.bf16.pop %v1065
        %v1159 = vmul.bf16 %v1157, 1060192049
        %v1160 = vlog2.bf16.pop %v1066
        %v1162 = vmul.bf16 %v1160, 1060192049
        %v1163 = vmul.bf16 %v1069, 1009007652
        %v1164 = vmul.bf16 %v1072, 1009007652
        %v1165 = vmul.bf16 %v1075, 1009007652
        %v1166 = vmul.bf16 %v1078, 1009007652
        %v1167 = vmul.bf16 %v1081, 1009007652
        %v1168 = vmul.bf16 %v1084, 1009007652
        %v1169 = vmul.bf16 %v1087, 1009007652
        %v1170 = vmul.bf16 %v1090, 1009007652
        %v1171 = vmul.bf16 %v1093, 1009007652
        %v1172 = vmul.bf16 %v1096, 1009007652
        %v1173 = vmul.bf16 %v1099, 1009007652
        %v1174 = vmul.bf16 %v1102, 1009007652
        %v1175 = vmul.bf16 %v1105, 1009007652
        %v1176 = vmul.bf16 %v1108, 1009007652
        %v1177 = vmul.bf16 %v1111, 1009007652
        %v1178 = vmul.bf16 %v1114, 1009007652
        %v1179 = vmul.bf16 %v1117, 1009007652
        %v1180 = vmul.bf16 %v1120, 1009007652
        %v1181 = vmul.bf16 %v1123, 1009007652
        %v1182 = vmul.bf16 %v1126, 1009007652
        %v1183 = vmul.bf16 %v1129, 1009007652
        %v1184 = vmul.bf16 %v1132, 1009007652
        %v1185 = vmul.bf16 %v1135, 1009007652
        %v1186 = vmul.bf16 %v1138, 1009007652
        %v1187 = vmul.bf16 %v1141, 1009007652
        %v1188 = vmul.bf16 %v1144, 1009007652
        %v1189 = vmul.bf16 %v1147, 1009007652
        %v1190 = vmul.bf16 %v1150, 1009007652
        %v1191 = vmul.bf16 %v1153, 1009007652
        %v1192 = vmul.bf16 %v1156, 1009007652
        %v1193 = vmul.bf16 %v1159, 1009007652
        %v1194 = vmul.bf16 %v1162, 1009007652
        %vm1195 = vcmp.gt.bf16.partialorder %v875, 1101021600
        %vm1196 = vcmp.gt.bf16.partialorder %v876, 1101021600
        %vm1197 = vcmp.gt.bf16.partialorder %v877, 1101021600
        %vm1198 = vcmp.gt.bf16.partialorder %v878, 1101021600
        %vm1199 = vcmp.gt.bf16.partialorder %v879, 1101021600
        %vm1200 = vcmp.gt.bf16.partialorder %v880, 1101021600
        %vm1201 = vcmp.gt.bf16.partialorder %v881, 1101021600
        %vm1202 = vcmp.gt.bf16.partialorder %v882, 1101021600
        %vm1203 = vcmp.gt.bf16.partialorder %v883, 1101021600
        %vm1204 = vcmp.gt.bf16.partialorder %v884, 1101021600
        %vm1205 = vcmp.gt.bf16.partialorder %v885, 1101021600
        %vm1206 = vcmp.gt.bf16.partialorder %v886, 1101021600
        %vm1207 = vcmp.gt.bf16.partialorder %v887, 1101021600
        %vm1208 = vcmp.gt.bf16.partialorder %v888, 1101021600
        %vm1209 = vcmp.gt.bf16.partialorder %v889, 1101021600
        %vm1210 = vcmp.gt.bf16.partialorder %v890, 1101021600
        %vm1211 = vcmp.gt.bf16.partialorder %v891, 1101021600
        %vm1212 = vcmp.gt.bf16.partialorder %v892, 1101021600
        %vm1213 = vcmp.gt.bf16.partialorder %v893, 1101021600
        %vm1214 = vcmp.gt.bf16.partialorder %v894, 1101021600
        %vm1215 = vcmp.gt.bf16.partialorder %v895, 1101021600
        %vm1216 = vcmp.gt.bf16.partialorder %v896, 1101021600
        %vm1217 = vcmp.gt.bf16.partialorder %v897, 1101021600
        %vm1218 = vcmp.gt.bf16.partialorder %v898, 1101021600
        %vm1219 = vcmp.gt.bf16.partialorder %v899, 1101021600
        %vm1220 = vcmp.gt.bf16.partialorder %v900, 1101021600
        %vm1221 = vcmp.gt.bf16.partialorder %v901, 1101021600
        %vm1222 = vcmp.gt.bf16.partialorder %v902, 1101021600
        %vm1223 = vcmp.gt.bf16.partialorder %v903, 1101021600
        %vm1224 = vcmp.gt.bf16.partialorder %v904, 1101021600
        %vm1225 = vcmp.gt.bf16.partialorder %v905, 1101021600
        %vm1226 = vcmp.gt.bf16.partialorder %v906, 1101021600
        %v1227 = vsel %vm1195, %v843, %v1163
        %v1228 = vsel %vm1196, %v844, %v1164
        %v1229 = vsel %vm1197, %v845, %v1165
        %v1230 = vsel %vm1198, %v846, %v1166
        %v1231 = vsel %vm1199, %v847, %v1167
        %v1232 = vsel %vm1200, %v848, %v1168
        %v1233 = vsel %vm1201, %v849, %v1169
        %v1234 = vsel %vm1202, %v850, %v1170
        %v1235 = vsel %vm1203, %v851, %v1171
        %v1236 = vsel %vm1204, %v852, %v1172
        %v1237 = vsel %vm1205, %v853, %v1173
        %v1238 = vsel %vm1206, %v854, %v1174
        %v1239 = vsel %vm1207, %v855, %v1175
        %v1240 = vsel %vm1208, %v856, %v1176
        %v1241 = vsel %vm1209, %v857, %v1177
        %v1242 = vsel %vm1210, %v858, %v1178
        %v1243 = vsel %vm1211, %v859, %v1179
        %v1244 = vsel %vm1212, %v860, %v1180
        %v1245 = vsel %vm1213, %v861, %v1181
        %v1246 = vsel %vm1214, %v862, %v1182
        %v1247 = vsel %vm1215, %v863, %v1183
        %v1248 = vsel %vm1216, %v864, %v1184
        %v1249 = vsel %vm1217, %v865, %v1185
        %v1250 = vsel %vm1218, %v866, %v1186
        %v1251 = vsel %vm1219, %v867, %v1187
        %v1252 = vsel %vm1220, %v868, %v1188
        %v1253 = vsel %vm1221, %v869, %v1189
        %v1254 = vsel %vm1222, %v870, %v1190
        %v1255 = vsel %vm1223, %v871, %v1191
        %v1256 = vsel %vm1224, %v872, %v1192
        %v1257 = vsel %vm1225, %v873, %v1193
        %v1258 = vsel %vm1226, %v874, %v1194
        %v1259 = vld [vmem:[%s2] sm:$0xf]
        %v1260 = vld [vmem:[%s2 + $0x4] sm:$0xf]
        %v1261 = vld [vmem:[%s2 + $0x8] sm:$0xf]
        %v1262 = vld [vmem:[%s2 + $0xc] sm:$0xf]
        %v1263 = vld [vmem:[%s2 + $0x10] sm:$0xf]
        %v1264 = vld [vmem:[%s2 + $0x14] sm:$0xf]
        %v1265 = vld [vmem:[%s2 + $0x18] sm:$0xf]
        %v1266 = vld [vmem:[%s2 + $0x1c] sm:$0xf]
        %v1267 = vld [vmem:[%s2 + $0x20] sm:$0xf]
        %v1268 = vld [vmem:[%s2 + $0x24] sm:$0xf]
        %v1269 = vld [vmem:[%s2 + $0x28] sm:$0xf]
        %v1270 = vld [vmem:[%s2 + $0x2c] sm:$0xf]
        %v1271 = vld [vmem:[%s2 + $0x30] sm:$0xf]
        %v1272 = vld [vmem:[%s2 + $0x34] sm:$0xf]
        %v1273 = vld [vmem:[%s2 + $0x38] sm:$0xf]
        %v1274 = vld [vmem:[%s2 + $0x3c] sm:$0xf]
        %v1275 = vlaneseq
        %v1276 = vshrl.u32 %v1275, 7
        %v1277 = vsub.s32 1, %v1276
        %v1278 = vrot.slane %v267, %v1277
        %v1295 = vunpack.c.l.b16 %v1259
        %v1296 = vunpack.c.l.b16 %v1260
        %v1297 = vunpack.c.l.b16 %v1261
        %v1298 = vunpack.c.l.b16 %v1262
        %v1299 = vunpack.c.l.b16 %v1263
        %v1300 = vunpack.c.l.b16 %v1264
        %v1301 = vunpack.c.l.b16 %v1265
        %v1302 = vunpack.c.l.b16 %v1266
        %v1303 = vunpack.c.l.b16 %v1267
        %v1304 = vunpack.c.l.b16 %v1268
        %v1305 = vunpack.c.l.b16 %v1269
        %v1306 = vunpack.c.l.b16 %v1270
        %v1307 = vunpack.c.l.b16 %v1271
        %v1308 = vunpack.c.l.b16 %v1272
        %v1309 = vunpack.c.l.b16 %v1273
        %v1310 = vunpack.c.l.b16 %v1274
        %v1311 = vpack.c.b16 %v1296, %v1295
        %v1312 = vpack.c.b16 %v1298, %v1297
        %v1313 = vpack.c.b16 %v1300, %v1299
        %v1314 = vpack.c.b16 %v1302, %v1301
        %v1315 = vpack.c.b16 %v1304, %v1303
        %v1316 = vpack.c.b16 %v1306, %v1305
        %v1317 = vpack.c.b16 %v1308, %v1307
        %v1318 = vpack.c.b16 %v1310, %v1309
        %1327 = vmatprep.subr.bf16.mxu0 0
        %1328 = vmatpush1.bf16.msra.mxu0 %v1311
        %1329 = vmatprep.subr.bf16.mxu0 0
        %1330 = vmatpush1.bf16.msra.mxu0 %v1312
        %1331 = vmatprep.subr.bf16.mxu0 0
        %1332 = vmatpush1.bf16.msra.mxu0 %v1313
        %1333 = vmatprep.subr.bf16.mxu0 0
        %1334 = vmatpush1.bf16.msra.mxu0 %v1314
        %1335 = vmatprep.subr.bf16.mxu0 0
        %1336 = vmatpush1.bf16.msra.mxu0 %v1315
        %1337 = vmatprep.subr.bf16.mxu0 0
        %1338 = vmatpush1.bf16.msra.mxu0 %v1316
        %1339 = vmatprep.subr.bf16.mxu0 0
        %1340 = vmatpush1.bf16.msra.mxu0 %v1317
        %1341 = vmatprep.subr.bf16.mxu0 0
        %1342 = vmatpush1.bf16.msra.mxu0 %v1318
        %1343 = vmatprep.subr.bf16.mxu0 0
        %1344 = vmatpush1.bf16.msra.mxu0 0
        %1345 = vmatprep.subr.bf16.mxu0 0
        %1346 = vmatpush1.bf16.msra.mxu0 0
        %1347 = vmatprep.subr.bf16.mxu0 0
        %1348 = vmatpush1.bf16.msra.mxu0 0
        %1349 = vmatprep.subr.bf16.mxu0 0
        %1350 = vmatpush1.bf16.msra.mxu0 0
        %1351 = vmatprep.subr.bf16.mxu0 0
        %1352 = vmatpush1.bf16.msra.mxu0 0
        %1353 = vmatprep.subr.bf16.mxu0 0
        %1354 = vmatpush1.bf16.msra.mxu0 0
        %1355 = vmatprep.subr.bf16.mxu0 0
        %1356 = vmatpush1.bf16.msra.mxu0 0
        %1357 = vmatprep.subr.bf16.mxu0 0
        %1358 = vmatpush1.bf16.msra.mxu0 0
        %1359 = vmatprep.mubr.bf16.mxu0 0
        %1360 = vmatmul.mubr.bf16.gmra.mrb[0].mxu0 %v1227
        %v1361 = vpop.f32.mrb[0].mxu0
        %v1362 = vadd.f32 %v1278, %v1361
        %v1363 = vpop.f32.mrb[0].mxu0
        %v1364 = vpop.f32.mrb[0].mxu0
        %v1365 = vadd.f32 %v1278, %v1364
        %v1366 = vpop.f32.mrb[0].mxu0
        %1367 = vmatprep.mubr.bf16.mxu0 0
        %1368 = vmatmul.mubr.bf16.gmra.mrb[0].mxu0 %v1228
        %v1369 = vpop.f32.mrb[0].mxu0
        %v1370 = vadd.f32 %v1278, %v1369
        %v1371 = vpop.f32.mrb[0].mxu0
        %v1372 = vpop.f32.mrb[0].mxu0
        %v1373 = vadd.f32 %v1278, %v1372
        %v1374 = vpop.f32.mrb[0].mxu0
        %1375 = vmatprep.mubr.bf16.mxu0 0
        %1376 = vmatmul.mubr.bf16.gmra.mrb[0].mxu0 %v1229
        %v1377 = vpop.f32.mrb[0].mxu0
        %v1378 = vadd.f32 %v1278, %v1377
        %v1379 = vpop.f32.mrb[0].mxu0
        %v1380 = vpop.f32.mrb[0].mxu0
        %v1381 = vadd.f32 %v1278, %v1380
        %v1382 = vpop.f32.mrb[0].mxu0
        %1383 = vmatprep.mubr.bf16.mxu0 0
        %1384 = vmatmul.mubr.bf16.gmra.mrb[0].mxu0 %v1230
        %v1385 = vpop.f32.mrb[0].mxu0
        %v1386 = vadd.f32 %v1278, %v1385
        %v1387 = vpop.f32.mrb[0].mxu0
        %v1388 = vpop.f32.mrb[0].mxu0
        %v1389 = vadd.f32 %v1278, %v1388
        %v1390 = vpop.f32.mrb[0].mxu0
        %1391 = vmatprep.mubr.bf16.mxu0 0
        %1392 = vmatmul.mubr.bf16.gmra.mrb[0].mxu0 %v1231
        %v1393 = vpop.f32.mrb[0].mxu0
        %v1394 = vadd.f32 %v1278, %v1393
        %v1395 = vpop.f32.mrb[0].mxu0
        %v1396 = vpop.f32.mrb[0].mxu0
        %v1397 = vadd.f32 %v1278, %v1396
        %v1398 = vpop.f32.mrb[0].mxu0
        %1399 = vmatprep.mubr.bf16.mxu0 0
        %1400 = vmatmul.mubr.bf16.gmra.mrb[0].mxu0 %v1232
        %v1401 = vpop.f32.mrb[0].mxu0
        %v1402 = vadd.f32 %v1278, %v1401
        %v1403 = vpop.f32.mrb[0].mxu0
        %v1404 = vpop.f32.mrb[0].mxu0
        %v1405 = vadd.f32 %v1278, %v1404
        %v1406 = vpop.f32.mrb[0].mxu0
        %1407 = vmatprep.mubr.bf16.mxu0 0
        %1408 = vmatmul.mubr.bf16.gmra.mrb[0].mxu0 %v1233
        %v1409 = vpop.f32.mrb[0].mxu0
        %v1410 = vadd.f32 %v1278, %v1409
        %v1411 = vpop.f32.mrb[0].mxu0
        %v1412 = vpop.f32.mrb[0].mxu0
        %v1413 = vadd.f32 %v1278, %v1412
        %v1414 = vpop.f32.mrb[0].mxu0
        %1415 = vmatprep.mubr.bf16.mxu0 0
        %1416 = vmatmul.mubr.bf16.gmra.mrb[0].mxu0 %v1234
        %v1417 = vpop.f32.mrb[0].mxu0
        %v1418 = vadd.f32 %v1278, %v1417
        %v1419 = vpop.f32.mrb[0].mxu0
        %v1420 = vpop.f32.mrb[0].mxu0
        %v1421 = vadd.f32 %v1278, %v1420
        %v1422 = vpop.f32.mrb[0].mxu0
        %1423 = vmatprep.mubr.bf16.mxu0 0
        %1424 = vmatmul.mubr.bf16.gmra.mrb[0].mxu0 %v1235
        %v1425 = vpop.f32.mrb[0].mxu0
        %v1426 = vadd.f32 %v1278, %v1425
        %v1427 = vpop.f32.mrb[0].mxu0
        %v1428 = vpop.f32.mrb[0].mxu0
        %v1429 = vadd.f32 %v1278, %v1428
        %v1430 = vpop.f32.mrb[0].mxu0
        %1431 = vmatprep.mubr.bf16.mxu0 0
        %1432 = vmatmul.mubr.bf16.gmra.mrb[0].mxu0 %v1236
        %v1433 = vpop.f32.mrb[0].mxu0
        %v1434 = vadd.f32 %v1278, %v1433
        %v1435 = vpop.f32.mrb[0].mxu0
        %v1436 = vpop.f32.mrb[0].mxu0
        %v1437 = vadd.f32 %v1278, %v1436
        %v1438 = vpop.f32.mrb[0].mxu0
        %1439 = vmatprep.mubr.bf16.mxu0 0
        %1440 = vmatmul.mubr.bf16.gmra.mrb[0].mxu0 %v1237
        %v1441 = vpop.f32.mrb[0].mxu0
        %v1442 = vadd.f32 %v1278, %v1441
        %v1443 = vpop.f32.mrb[0].mxu0
        %v1444 = vpop.f32.mrb[0].mxu0
        %v1445 = vadd.f32 %v1278, %v1444
        %v1446 = vpop.f32.mrb[0].mxu0
        %1447 = vmatprep.mubr.bf16.mxu0 0
        %1448 = vmatmul.mubr.bf16.gmra.mrb[0].mxu0 %v1238
        %v1449 = vpop.f32.mrb[0].mxu0
        %v1450 = vadd.f32 %v1278, %v1449
        %v1451 = vpop.f32.mrb[0].mxu0
        %v1452 = vpop.f32.mrb[0].mxu0
        %v1453 = vadd.f32 %v1278, %v1452
        %v1454 = vpop.f32.mrb[0].mxu0
        %1455 = vmatprep.mubr.bf16.mxu0 0
        %1456 = vmatmul.mubr.bf16.gmra.mrb[0].mxu0 %v1239
        %v1457 = vpop.f32.mrb[0].mxu0
        %v1458 = vadd.f32 %v1278, %v1457
        %v1459 = vpop.f32.mrb[0].mxu0
        %v1460 = vpop.f32.mrb[0].mxu0
        %v1461 = vadd.f32 %v1278, %v1460
        %v1462 = vpop.f32.mrb[0].mxu0
        %1463 = vmatprep.mubr.bf16.mxu0 0
        %1464 = vmatmul.mubr.bf16.gmra.mrb[0].mxu0 %v1240
        %v1465 = vpop.f32.mrb[0].mxu0
        %v1466 = vadd.f32 %v1278, %v1465
        %v1467 = vpop.f32.mrb[0].mxu0
        %v1468 = vpop.f32.mrb[0].mxu0
        %v1469 = vadd.f32 %v1278, %v1468
        %v1470 = vpop.f32.mrb[0].mxu0
        %1471 = vmatprep.mubr.bf16.mxu0 0
        %1472 = vmatmul.mubr.bf16.gmra.mrb[0].mxu0 %v1241
        %v1473 = vpop.f32.mrb[0].mxu0
        %v1474 = vadd.f32 %v1278, %v1473
        %v1475 = vpop.f32.mrb[0].mxu0
        %v1476 = vpop.f32.mrb[0].mxu0
        %v1477 = vadd.f32 %v1278, %v1476
        %v1478 = vpop.f32.mrb[0].mxu0
        %1479 = vmatprep.mubr.bf16.mxu0 0
        %1480 = vmatmul.mubr.bf16.gmra.mrb[0].mxu0 %v1242
        %v1481 = vpop.f32.mrb[0].mxu0
        %v1482 = vadd.f32 %v1278, %v1481
        %v1483 = vpop.f32.mrb[0].mxu0
        %v1484 = vpop.f32.mrb[0].mxu0
        %v1485 = vadd.f32 %v1278, %v1484
        %v1486 = vpop.f32.mrb[0].mxu0
        %1487 = vmatprep.mubr.bf16.mxu0 0
        %1488 = vmatmul.mubr.bf16.gmra.mrb[0].mxu0 %v1243
        %v1489 = vpop.f32.mrb[0].mxu0
        %v1490 = vadd.f32 %v1278, %v1489
        %v1491 = vpop.f32.mrb[0].mxu0
        %v1492 = vpop.f32.mrb[0].mxu0
        %v1493 = vadd.f32 %v1278, %v1492
        %v1494 = vpop.f32.mrb[0].mxu0
        %1495 = vmatprep.mubr.bf16.mxu0 0
        %1496 = vmatmul.mubr.bf16.gmra.mrb[0].mxu0 %v1244
        %v1497 = vpop.f32.mrb[0].mxu0
        %v1498 = vadd.f32 %v1278, %v1497
        %v1499 = vpop.f32.mrb[0].mxu0
        %v1500 = vpop.f32.mrb[0].mxu0
        %v1501 = vadd.f32 %v1278, %v1500
        %v1502 = vpop.f32.mrb[0].mxu0
        %1503 = vmatprep.mubr.bf16.mxu0 0
        %1504 = vmatmul.mubr.bf16.gmra.mrb[0].mxu0 %v1245
        %v1505 = vpop.f32.mrb[0].mxu0
        %v1506 = vadd.f32 %v1278, %v1505
        %v1507 = vpop.f32.mrb[0].mxu0
        %v1508 = vpop.f32.mrb[0].mxu0
        %v1509 = vadd.f32 %v1278, %v1508
        %v1510 = vpop.f32.mrb[0].mxu0
        %1511 = vmatprep.mubr.bf16.mxu0 0
        %1512 = vmatmul.mubr.bf16.gmra.mrb[0].mxu0 %v1246
        %v1513 = vpop.f32.mrb[0].mxu0
        %v1514 = vadd.f32 %v1278, %v1513
        %v1515 = vpop.f32.mrb[0].mxu0
        %v1516 = vpop.f32.mrb[0].mxu0
        %v1517 = vadd.f32 %v1278, %v1516
        %v1518 = vpop.f32.mrb[0].mxu0
        %1519 = vmatprep.mubr.bf16.mxu0 0
        %1520 = vmatmul.mubr.bf16.gmra.mrb[0].mxu0 %v1247
        %v1521 = vpop.f32.mrb[0].mxu0
        %v1522 = vadd.f32 %v1278, %v1521
        %v1523 = vpop.f32.mrb[0].mxu0
        %v1524 = vpop.f32.mrb[0].mxu0
        %v1525 = vadd.f32 %v1278, %v1524
        %v1526 = vpop.f32.mrb[0].mxu0
        %1527 = vmatprep.mubr.bf16.mxu0 0
        %1528 = vmatmul.mubr.bf16.gmra.mrb[0].mxu0 %v1248
        %v1529 = vpop.f32.mrb[0].mxu0
        %v1530 = vadd.f32 %v1278, %v1529
        %v1531 = vpop.f32.mrb[0].mxu0
        %v1532 = vpop.f32.mrb[0].mxu0
        %v1533 = vadd.f32 %v1278, %v1532
        %v1534 = vpop.f32.mrb[0].mxu0
        %1535 = vmatprep.mubr.bf16.mxu0 0
        %1536 = vmatmul.mubr.bf16.gmra.mrb[0].mxu0 %v1249
        %v1537 = vpop.f32.mrb[0].mxu0
        %v1538 = vadd.f32 %v1278, %v1537
        %v1539 = vpop.f32.mrb[0].mxu0
        %v1540 = vpop.f32.mrb[0].mxu0
        %v1541 = vadd.f32 %v1278, %v1540
        %v1542 = vpop.f32.mrb[0].mxu0
        %1543 = vmatprep.mubr.bf16.mxu0 0
        %1544 = vmatmul.mubr.bf16.gmra.mrb[0].mxu0 %v1250
        %v1545 = vpop.f32.mrb[0].mxu0
        %v1546 = vadd.f32 %v1278, %v1545
        %v1547 = vpop.f32.mrb[0].mxu0
        %v1548 = vpop.f32.mrb[0].mxu0
        %v1549 = vadd.f32 %v1278, %v1548
        %v1550 = vpop.f32.mrb[0].mxu0
        %1551 = vmatprep.mubr.bf16.mxu0 0
        %1552 = vmatmul.mubr.bf16.gmra.mrb[0].mxu0 %v1251
        %v1553 = vpop.f32.mrb[0].mxu0
        %v1554 = vadd.f32 %v1278, %v1553
        %v1555 = vpop.f32.mrb[0].mxu0
        %v1556 = vpop.f32.mrb[0].mxu0
        %v1557 = vadd.f32 %v1278, %v1556
        %v1558 = vpop.f32.mrb[0].mxu0
        %1559 = vmatprep.mubr.bf16.mxu0 0
        %1560 = vmatmul.mubr.bf16.gmra.mrb[0].mxu0 %v1252
        %v1561 = vpop.f32.mrb[0].mxu0
        %v1562 = vadd.f32 %v1278, %v1561
        %v1563 = vpop.f32.mrb[0].mxu0
        %v1564 = vpop.f32.mrb[0].mxu0
        %v1565 = vadd.f32 %v1278, %v1564
        %v1566 = vpop.f32.mrb[0].mxu0
        %1567 = vmatprep.mubr.bf16.mxu0 0
        %1568 = vmatmul.mubr.bf16.gmra.mrb[0].mxu0 %v1253
        %v1569 = vpop.f32.mrb[0].mxu0
        %v1570 = vadd.f32 %v1278, %v1569
        %v1571 = vpop.f32.mrb[0].mxu0
        %v1572 = vpop.f32.mrb[0].mxu0
        %v1573 = vadd.f32 %v1278, %v1572
        %v1574 = vpop.f32.mrb[0].mxu0
        %1575 = vmatprep.mubr.bf16.mxu0 0
        %1576 = vmatmul.mubr.bf16.gmra.mrb[0].mxu0 %v1254
        %v1577 = vpop.f32.mrb[0].mxu0
        %v1578 = vadd.f32 %v1278, %v1577
        %v1579 = vpop.f32.mrb[0].mxu0
        %v1580 = vpop.f32.mrb[0].mxu0
        %v1581 = vadd.f32 %v1278, %v1580
        %v1582 = vpop.f32.mrb[0].mxu0
        %1583 = vmatprep.mubr.bf16.mxu0 0
        %1584 = vmatmul.mubr.bf16.gmra.mrb[0].mxu0 %v1255
        %v1585 = vpop.f32.mrb[0].mxu0
        %v1586 = vadd.f32 %v1278, %v1585
        %v1587 = vpop.f32.mrb[0].mxu0
        %v1588 = vpop.f32.mrb[0].mxu0
        %v1589 = vadd.f32 %v1278, %v1588
        %v1590 = vpop.f32.mrb[0].mxu0
        %1591 = vmatprep.mubr.bf16.mxu0 0
        %1592 = vmatmul.mubr.bf16.gmra.mrb[0].mxu0 %v1256
        %v1593 = vpop.f32.mrb[0].mxu0
        %v1594 = vadd.f32 %v1278, %v1593
        %v1595 = vpop.f32.mrb[0].mxu0
        %v1596 = vpop.f32.mrb[0].mxu0
        %v1597 = vadd.f32 %v1278, %v1596
        %v1598 = vpop.f32.mrb[0].mxu0
        %1599 = vmatprep.mubr.bf16.mxu0 0
        %1600 = vmatmul.mubr.bf16.gmra.mrb[0].mxu0 %v1257
        %v1601 = vpop.f32.mrb[0].mxu0
        %v1602 = vadd.f32 %v1278, %v1601
        %v1603 = vpop.f32.mrb[0].mxu0
        %v1604 = vpop.f32.mrb[0].mxu0
        %v1605 = vadd.f32 %v1278, %v1604
        %v1606 = vpop.f32.mrb[0].mxu0
        %1607 = vmatprep.mubr.bf16.mxu0 0
        %1608 = vmatmul.mubr.bf16.gmra.mrb[0].mxu0 %v1258
        %v1609 = vpop.f32.mrb[0].mxu0
        %v1610 = vadd.f32 %v1278, %v1609
        %v1611 = vpop.f32.mrb[0].mxu0
        %v1612 = vpop.f32.mrb[0].mxu0
        %v1613 = vpop.f32.mrb[0].mxu0
        %1614 = vdwg.mxu0
        %v1615 = vpack.c.bf16 %v1365, %v1362
        %v1616 = vpack.c.bf16 %v1373, %v1370
        %v1617 = vpack.c.bf16 %v1381, %v1378
        %v1618 = vpack.c.bf16 %v1389, %v1386
        %v1619 = vpack.c.bf16 %v1397, %v1394
        %v1620 = vpack.c.bf16 %v1405, %v1402
        %v1621 = vpack.c.bf16 %v1413, %v1410
        %v1622 = vpack.c.bf16 %v1421, %v1418
        %v1623 = vpack.c.bf16 %v1429, %v1426
        %v1624 = vpack.c.bf16 %v1437, %v1434
        %v1625 = vpack.c.bf16 %v1445, %v1442
        %v1626 = vpack.c.bf16 %v1453, %v1450
        %v1627 = vpack.c.bf16 %v1461, %v1458
        %v1628 = vpack.c.bf16 %v1469, %v1466
        %v1629 = vpack.c.bf16 %v1477, %v1474
        %v1630 = vpack.c.bf16 %v1485, %v1482
        %v1631 = vpack.c.bf16 %v1493, %v1490
        %v1632 = vpack.c.bf16 %v1501, %v1498
        %v1633 = vpack.c.bf16 %v1509, %v1506
        %v1634 = vpack.c.bf16 %v1517, %v1514
        %v1635 = vpack.c.bf16 %v1525, %v1522
        %v1636 = vpack.c.bf16 %v1533, %v1530
        %v1637 = vpack.c.bf16 %v1541, %v1538
        %v1638 = vpack.c.bf16 %v1549, %v1546
        %v1639 = vpack.c.bf16 %v1557, %v1554
        %v1640 = vpack.c.bf16 %v1565, %v1562
        %v1641 = vpack.c.bf16 %v1573, %v1570
        %v1642 = vpack.c.bf16 %v1581, %v1578
        %v1643 = vpack.c.bf16 %v1589, %v1586
        %v1644 = vpack.c.bf16 %v1597, %v1594
        %v1645 = vpack.c.bf16 %v1605, %v1602
        %v1646 = vpack.c.bf16 %v1610, %v1610
        %v1647 = vmul.bf16 %v1615, 1120420552
        %v1648 = vmul.bf16 %v1616, 1120420552
        %v1649 = vmul.bf16 %v1617, 1120420552
        %v1650 = vmul.bf16 %v1618, 1120420552
        %v1651 = vmul.bf16 %v1619, 1120420552
        %v1652 = vmul.bf16 %v1620, 1120420552
        %v1653 = vmul.bf16 %v1621, 1120420552
        %v1654 = vmul.bf16 %v1622, 1120420552
        %v1655 = vmul.bf16 %v1623, 1120420552
        %v1656 = vmul.bf16 %v1624, 1120420552
        %v1657 = vmul.bf16 %v1625, 1120420552
        %v1658 = vmul.bf16 %v1626, 1120420552
        %v1659 = vmul.bf16 %v1627, 1120420552
        %v1660 = vmul.bf16 %v1628, 1120420552
        %v1661 = vmul.bf16 %v1629, 1120420552
        %v1662 = vmul.bf16 %v1630, 1120420552
        %v1663 = vmul.bf16 %v1631, 1120420552
        %v1664 = vmul.bf16 %v1632, 1120420552
        %v1665 = vmul.bf16 %v1633, 1120420552
        %v1666 = vmul.bf16 %v1634, 1120420552
        %v1667 = vmul.bf16 %v1635, 1120420552
        %v1668 = vmul.bf16 %v1636, 1120420552
        %v1669 = vmul.bf16 %v1637, 1120420552
        %v1670 = vmul.bf16 %v1638, 1120420552
        %v1671 = vmul.bf16 %v1639, 1120420552
        %v1672 = vmul.bf16 %v1640, 1120420552
        %v1673 = vmul.bf16 %v1641, 1120420552
        %v1674 = vmul.bf16 %v1642, 1120420552
        %v1675 = vmul.bf16 %v1643, 1120420552
        %v1676 = vmul.bf16 %v1644, 1120420552
        %v1677 = vmul.bf16 %v1645, 1120420552
        %v1678 = vmul.bf16 %v1646, 1120420552
        %v1679 = vmin.bf16 %v1647, 1101021600
        %v1680 = vmin.bf16 %v1648, 1101021600
        %v1681 = vmin.bf16 %v1649, 1101021600
        %v1682 = vmin.bf16 %v1650, 1101021600
        %v1683 = vmin.bf16 %v1651, 1101021600
        %v1684 = vmin.bf16 %v1652, 1101021600
        %v1685 = vmin.bf16 %v1653, 1101021600
        %v1686 = vmin.bf16 %v1654, 1101021600
        %v1687 = vmin.bf16 %v1655, 1101021600
        %v1688 = vmin.bf16 %v1656, 1101021600
        %v1689 = vmin.bf16 %v1657, 1101021600
        %v1690 = vmin.bf16 %v1658, 1101021600
        %v1691 = vmin.bf16 %v1659, 1101021600
        %v1692 = vmin.bf16 %v1660, 1101021600
        %v1693 = vmin.bf16 %v1661, 1101021600
        %v1694 = vmin.bf16 %v1662, 1101021600
        %v1695 = vmin.bf16 %v1663, 1101021600
        %v1696 = vmin.bf16 %v1664, 1101021600
        %v1697 = vmin.bf16 %v1665, 1101021600
        %v1698 = vmin.bf16 %v1666, 1101021600
        %v1699 = vmin.bf16 %v1667, 1101021600
        %v1700 = vmin.bf16 %v1668, 1101021600
        %v1701 = vmin.bf16 %v1669, 1101021600
        %v1702 = vmin.bf16 %v1670, 1101021600
        %v1703 = vmin.bf16 %v1671, 1101021600
        %v1704 = vmin.bf16 %v1672, 1101021600
        %v1705 = vmin.bf16 %v1673, 1101021600
        %v1706 = vmin.bf16 %v1674, 1101021600
        %v1707 = vmin.bf16 %v1675, 1101021600
        %v1708 = vmin.bf16 %v1676, 1101021600
        %v1709 = vmin.bf16 %v1677, 1101021600
        %v1710 = vmin.bf16 %v1678, 1101021600
        %v1712 = vmul.bf16 %v1679, 1069105081
        %v1713 = vpow.bf16.pop %v1712
        %v1715 = vmul.bf16 %v1680, 1069105081
        %v1716 = vpow.bf16.pop %v1715
        %v1718 = vmul.bf16 %v1681, 1069105081
        %v1719 = vpow.bf16.pop %v1718
        %v1721 = vmul.bf16 %v1682, 1069105081
        %v1722 = vpow.bf16.pop %v1721
        %v1724 = vmul.bf16 %v1683, 1069105081
        %v1725 = vpow.bf16.pop %v1724
        %v1727 = vmul.bf16 %v1684, 1069105081
        %v1728 = vpow.bf16.pop %v1727
        %v1730 = vmul.bf16 %v1685, 1069105081
        %v1731 = vpow.bf16.pop %v1730
        %v1733 = vmul.bf16 %v1686, 1069105081
        %v1734 = vpow.bf16.pop %v1733
        %v1736 = vmul.bf16 %v1687, 1069105081
        %v1737 = vpow.bf16.pop %v1736
        %v1739 = vmul.bf16 %v1688, 1069105081
        %v1740 = vpow.bf16.pop %v1739
        %v1742 = vmul.bf16 %v1689, 1069105081
        %v1743 = vpow.bf16.pop %v1742
        %v1745 = vmul.bf16 %v1690, 1069105081
        %v1746 = vpow.bf16.pop %v1745
        %v1748 = vmul.bf16 %v1691, 1069105081
        %v1749 = vpow.bf16.pop %v1748
        %v1751 = vmul.bf16 %v1692, 1069105081
        %v1752 = vpow.bf16.pop %v1751
        %v1754 = vmul.bf16 %v1693, 1069105081
        %v1755 = vpow.bf16.pop %v1754
        %v1757 = vmul.bf16 %v1694, 1069105081
        %v1758 = vpow.bf16.pop %v1757
        %v1760 = vmul.bf16 %v1695, 1069105081
        %v1761 = vpow.bf16.pop %v1760
        %v1763 = vmul.bf16 %v1696, 1069105081
        %v1764 = vpow.bf16.pop %v1763
        %v1766 = vmul.bf16 %v1697, 1069105081
        %v1767 = vpow.bf16.pop %v1766
        %v1769 = vmul.bf16 %v1698, 1069105081
        %v1770 = vpow.bf16.pop %v1769
        %v1772 = vmul.bf16 %v1699, 1069105081
        %v1773 = vpow.bf16.pop %v1772
        %v1775 = vmul.bf16 %v1700, 1069105081
        %v1776 = vpow.bf16.pop %v1775
        %v1778 = vmul.bf16 %v1701, 1069105081
        %v1779 = vpow.bf16.pop %v1778
        %v1781 = vmul.bf16 %v1702, 1069105081
        %v1782 = vpow.bf16.pop %v1781
        %v1784 = vmul.bf16 %v1703, 1069105081
        %v1785 = vpow.bf16.pop %v1784
        %v1787 = vmul.bf16 %v1704, 1069105081
        %v1788 = vpow.bf16.pop %v1787
        %v1790 = vmul.bf16 %v1705, 1069105081
        %v1791 = vpow.bf16.pop %v1790
        %v1793 = vmul.bf16 %v1706, 1069105081
        %v1794 = vpow.bf16.pop %v1793
        %v1796 = vmul.bf16 %v1707, 1069105081
        %v1797 = vpow.bf16.pop %v1796
        %v1799 = vmul.bf16 %v1708, 1069105081
        %v1800 = vpow.bf16.pop %v1799
        %v1802 = vmul.bf16 %v1709, 1069105081
        %v1803 = vpow.bf16.pop %v1802
        %v1805 = vmul.bf16 %v1710, 1069105081
        %v1806 = vpow.bf16.pop %v1805
        %v1807 = vadd.bf16 %v1713, 1065369472
        %v1808 = vadd.bf16 %v1716, 1065369472
        %v1809 = vadd.bf16 %v1719, 1065369472
        %v1810 = vadd.bf16 %v1722, 1065369472
        %v1811 = vadd.bf16 %v1725, 1065369472
        %v1812 = vadd.bf16 %v1728, 1065369472
        %v1813 = vadd.bf16 %v1731, 1065369472
        %v1814 = vadd.bf16 %v1734, 1065369472
        %v1815 = vadd.bf16 %v1737, 1065369472
        %v1816 = vadd.bf16 %v1740, 1065369472
        %v1817 = vadd.bf16 %v1743, 1065369472
        %v1818 = vadd.bf16 %v1746, 1065369472
        %v1819 = vadd.bf16 %v1749, 1065369472
        %v1820 = vadd.bf16 %v1752, 1065369472
        %v1821 = vadd.bf16 %v1755, 1065369472
        %v1822 = vadd.bf16 %v1758, 1065369472
        %v1823 = vadd.bf16 %v1761, 1065369472
        %v1824 = vadd.bf16 %v1764, 1065369472
        %v1825 = vadd.bf16 %v1767, 1065369472
        %v1826 = vadd.bf16 %v1770, 1065369472
        %v1827 = vadd.bf16 %v1773, 1065369472
        %v1828 = vadd.bf16 %v1776, 1065369472
        %v1829 = vadd.bf16 %v1779, 1065369472
        %v1830 = vadd.bf16 %v1782, 1065369472
        %v1831 = vadd.bf16 %v1785, 1065369472
        %v1832 = vadd.bf16 %v1788, 1065369472
        %v1833 = vadd.bf16 %v1791, 1065369472
        %v1834 = vadd.bf16 %v1794, 1065369472
        %v1835 = vadd.bf16 %v1797, 1065369472
        %v1836 = vadd.bf16 %v1800, 1065369472
        %v1837 = vadd.bf16 %v1803, 1065369472
        %v1838 = vadd.bf16 %v1806, 1065369472
        %v1839 = vlog2.bf16.pop %v1807
        %v1841 = vmul.bf16 %v1839, 1060192049
        %v1842 = vlog2.bf16.pop %v1808
        %v1844 = vmul.bf16 %v1842, 1060192049
        %v1845 = vlog2.bf16.pop %v1809
        %v1847 = vmul.bf16 %v1845, 1060192049
        %v1848 = vlog2.bf16.pop %v1810
        %v1850 = vmul.bf16 %v1848, 1060192049
        %v1851 = vlog2.bf16.pop %v1811
        %v1853 = vmul.bf16 %v1851, 1060192049
        %v1854 = vlog2.bf16.pop %v1812
        %v1856 = vmul.bf16 %v1854, 1060192049
        %v1857 = vlog2.bf16.pop %v1813
        %v1859 = vmul.bf16 %v1857, 1060192049
        %v1860 = vlog2.bf16.pop %v1814
        %v1862 = vmul.bf16 %v1860, 1060192049
        %v1863 = vlog2.bf16.pop %v1815
        %v1865 = vmul.bf16 %v1863, 1060192049
        %v1866 = vlog2.bf16.pop %v1816
        %v1868 = vmul.bf16 %v1866, 1060192049
        %v1869 = vlog2.bf16.pop %v1817
        %v1871 = vmul.bf16 %v1869, 1060192049
        %v1872 = vlog2.bf16.pop %v1818
        %v1874 = vmul.bf16 %v1872, 1060192049
        %v1875 = vlog2.bf16.pop %v1819
        %v1877 = vmul.bf16 %v1875, 1060192049
        %v1878 = vlog2.bf16.pop %v1820
        %v1880 = vmul.bf16 %v1878, 1060192049
        %v1881 = vlog2.bf16.pop %v1821
        %v1883 = vmul.bf16 %v1881, 1060192049
        %v1884 = vlog2.bf16.pop %v1822
        %v1886 = vmul.bf16 %v1884, 1060192049
        %v1887 = vlog2.bf16.pop %v1823
        %v1889 = vmul.bf16 %v1887, 1060192049
        %v1890 = vlog2.bf16.pop %v1824
        %v1892 = vmul.bf16 %v1890, 1060192049
        %v1893 = vlog2.bf16.pop %v1825
        %v1895 = vmul.bf16 %v1893, 1060192049
        %v1896 = vlog2.bf16.pop %v1826
        %v1898 = vmul.bf16 %v1896, 1060192049
        %v1899 = vlog2.bf16.pop %v1827
        %v1901 = vmul.bf16 %v1899, 1060192049
        %v1902 = vlog2.bf16.pop %v1828
        %v1904 = vmul.bf16 %v1902, 1060192049
        %v1905 = vlog2.bf16.pop %v1829
        %v1907 = vmul.bf16 %v1905, 1060192049
        %v1908 = vlog2.bf16.pop %v1830
        %v1910 = vmul.bf16 %v1908, 1060192049
        %v1911 = vlog2.bf16.pop %v1831
        %v1913 = vmul.bf16 %v1911, 1060192049
        %v1914 = vlog2.bf16.pop %v1832
        %v1916 = vmul.bf16 %v1914, 1060192049
        %v1917 = vlog2.bf16.pop %v1833
        %v1919 = vmul.bf16 %v1917, 1060192049
        %v1920 = vlog2.bf16.pop %v1834
        %v1922 = vmul.bf16 %v1920, 1060192049
        %v1923 = vlog2.bf16.pop %v1835
        %v1925 = vmul.bf16 %v1923, 1060192049
        %v1926 = vlog2.bf16.pop %v1836
        %v1928 = vmul.bf16 %v1926, 1060192049
        %v1929 = vlog2.bf16.pop %v1837
        %v1931 = vmul.bf16 %v1929, 1060192049
        %v1932 = vlog2.bf16.pop %v1838
        %v1934 = vmul.bf16 %v1932, 1060192049
        %v1935 = vmul.bf16 %v1841, 1009007652
        %v1936 = vmul.bf16 %v1844, 1009007652
        %v1937 = vmul.bf16 %v1847, 1009007652
        %v1938 = vmul.bf16 %v1850, 1009007652
        %v1939 = vmul.bf16 %v1853, 1009007652
        %v1940 = vmul.bf16 %v1856, 1009007652
        %v1941 = vmul.bf16 %v1859, 1009007652
        %v1942 = vmul.bf16 %v1862, 1009007652
        %v1943 = vmul.bf16 %v1865, 1009007652
        %v1944 = vmul.bf16 %v1868, 1009007652
        %v1945 = vmul.bf16 %v1871, 1009007652
        %v1946 = vmul.bf16 %v1874, 1009007652
        %v1947 = vmul.bf16 %v1877, 1009007652
        %v1948 = vmul.bf16 %v1880, 1009007652
        %v1949 = vmul.bf16 %v1883, 1009007652
        %v1950 = vmul.bf16 %v1886, 1009007652
        %v1951 = vmul.bf16 %v1889, 1009007652
        %v1952 = vmul.bf16 %v1892, 1009007652
        %v1953 = vmul.bf16 %v1895, 1009007652
        %v1954 = vmul.bf16 %v1898, 1009007652
        %v1955 = vmul.bf16 %v1901, 1009007652
        %v1956 = vmul.bf16 %v1904, 1009007652
        %v1957 = vmul.bf16 %v1907, 1009007652
        %v1958 = vmul.bf16 %v1910, 1009007652
        %v1959 = vmul.bf16 %v1913, 1009007652
        %v1960 = vmul.bf16 %v1916, 1009007652
        %v1961 = vmul.bf16 %v1919, 1009007652
        %v1962 = vmul.bf16 %v1922, 1009007652
        %v1963 = vmul.bf16 %v1925, 1009007652
        %v1964 = vmul.bf16 %v1928, 1009007652
        %v1965 = vmul.bf16 %v1931, 1009007652
        %v1966 = vmul.bf16 %v1934, 1009007652
        %vm1967 = vcmp.gt.bf16.partialorder %v1647, 1101021600
        %vm1968 = vcmp.gt.bf16.partialorder %v1648, 1101021600
        %vm1969 = vcmp.gt.bf16.partialorder %v1649, 1101021600
        %vm1970 = vcmp.gt.bf16.partialorder %v1650, 1101021600
        %vm1971 = vcmp.gt.bf16.partialorder %v1651, 1101021600
        %vm1972 = vcmp.gt.bf16.partialorder %v1652, 1101021600
        %vm1973 = vcmp.gt.bf16.partialorder %v1653, 1101021600
        %vm1974 = vcmp.gt.bf16.partialorder %v1654, 1101021600
        %vm1975 = vcmp.gt.bf16.partialorder %v1655, 1101021600
        %vm1976 = vcmp.gt.bf16.partialorder %v1656, 1101021600
        %vm1977 = vcmp.gt.bf16.partialorder %v1657, 1101021600
        %vm1978 = vcmp.gt.bf16.partialorder %v1658, 1101021600
        %vm1979 = vcmp.gt.bf16.partialorder %v1659, 1101021600
        %vm1980 = vcmp.gt.bf16.partialorder %v1660, 1101021600
        %vm1981 = vcmp.gt.bf16.partialorder %v1661, 1101021600
        %vm1982 = vcmp.gt.bf16.partialorder %v1662, 1101021600
        %vm1983 = vcmp.gt.bf16.partialorder %v1663, 1101021600
        %vm1984 = vcmp.gt.bf16.partialorder %v1664, 1101021600
        %vm1985 = vcmp.gt.bf16.partialorder %v1665, 1101021600
        %vm1986 = vcmp.gt.bf16.partialorder %v1666, 1101021600
        %vm1987 = vcmp.gt.bf16.partialorder %v1667, 1101021600
        %vm1988 = vcmp.gt.bf16.partialorder %v1668, 1101021600
        %vm1989 = vcmp.gt.bf16.partialorder %v1669, 1101021600
        %vm1990 = vcmp.gt.bf16.partialorder %v1670, 1101021600
        %vm1991 = vcmp.gt.bf16.partialorder %v1671, 1101021600
        %vm1992 = vcmp.gt.bf16.partialorder %v1672, 1101021600
        %vm1993 = vcmp.gt.bf16.partialorder %v1673, 1101021600
        %vm1994 = vcmp.gt.bf16.partialorder %v1674, 1101021600
        %vm1995 = vcmp.gt.bf16.partialorder %v1675, 1101021600
        %vm1996 = vcmp.gt.bf16.partialorder %v1676, 1101021600
        %vm1997 = vcmp.gt.bf16.partialorder %v1677, 1101021600
        %vm1998 = vcmp.gt.bf16.partialorder %v1678, 1101021600
        %v1999 = vsel %vm1967, %v1615, %v1935
        %v2000 = vsel %vm1968, %v1616, %v1936
        %v2001 = vsel %vm1969, %v1617, %v1937
        %v2002 = vsel %vm1970, %v1618, %v1938
        %v2003 = vsel %vm1971, %v1619, %v1939
        %v2004 = vsel %vm1972, %v1620, %v1940
        %v2005 = vsel %vm1973, %v1621, %v1941
        %v2006 = vsel %vm1974, %v1622, %v1942
        %v2007 = vsel %vm1975, %v1623, %v1943
        %v2008 = vsel %vm1976, %v1624, %v1944
        %v2009 = vsel %vm1977, %v1625, %v1945
        %v2010 = vsel %vm1978, %v1626, %v1946
        %v2011 = vsel %vm1979, %v1627, %v1947
        %v2012 = vsel %vm1980, %v1628, %v1948
        %v2013 = vsel %vm1981, %v1629, %v1949
        %v2014 = vsel %vm1982, %v1630, %v1950
        %v2015 = vsel %vm1983, %v1631, %v1951
        %v2016 = vsel %vm1984, %v1632, %v1952
        %v2017 = vsel %vm1985, %v1633, %v1953
        %v2018 = vsel %vm1986, %v1634, %v1954
        %v2019 = vsel %vm1987, %v1635, %v1955
        %v2020 = vsel %vm1988, %v1636, %v1956
        %v2021 = vsel %vm1989, %v1637, %v1957
        %v2022 = vsel %vm1990, %v1638, %v1958
        %v2023 = vsel %vm1991, %v1639, %v1959
        %v2024 = vsel %vm1992, %v1640, %v1960
        %v2025 = vsel %vm1993, %v1641, %v1961
        %v2026 = vsel %vm1994, %v1642, %v1962
        %v2027 = vsel %vm1995, %v1643, %v1963
        %v2028 = vsel %vm1996, %v1644, %v1964
        %v2029 = vsel %vm1997, %v1645, %v1965
        %v2030 = vsel %vm1998, %v1646, %v1966
        %s2031 = scalar_lea.vmem %s2, 64
        %v2032 = vld [vmem:[%s2031] sm:$0xf]
        %v2033 = vld [vmem:[%s2031 + $0x4] sm:$0xf]
        %v2034 = vld [vmem:[%s2031 + $0x8] sm:$0xf]
        %v2035 = vld [vmem:[%s2031 + $0xc] sm:$0xf]
        %v2036 = vld [vmem:[%s2031 + $0x10] sm:$0xf]
        %v2037 = vld [vmem:[%s2031 + $0x14] sm:$0xf]
        %v2038 = vld [vmem:[%s2031 + $0x18] sm:$0xf]
        %v2039 = vld [vmem:[%s2031 + $0x1c] sm:$0xf]
        %v2040 = vld [vmem:[%s2031 + $0x20] sm:$0xf]
        %v2041 = vld [vmem:[%s2031 + $0x24] sm:$0xf]
        %v2042 = vld [vmem:[%s2031 + $0x28] sm:$0xf]
        %v2043 = vld [vmem:[%s2031 + $0x2c] sm:$0xf]
        %v2044 = vld [vmem:[%s2031 + $0x30] sm:$0xf]
        %v2045 = vld [vmem:[%s2031 + $0x34] sm:$0xf]
        %v2046 = vld [vmem:[%s2031 + $0x38] sm:$0xf]
        %v2047 = vld [vmem:[%s2031 + $0x3c] sm:$0xf]
        %v2048 = vlaneseq
        %v2049 = vshrl.u32 %v2048, 7
        %v2050 = vsub.s32 2, %v2049
        %v2051 = vrot.slane %v267, %v2050
        %v2068 = vunpack.c.l.b16 %v2032
        %v2069 = vunpack.c.l.b16 %v2033
        %v2070 = vunpack.c.l.b16 %v2034
        %v2071 = vunpack.c.l.b16 %v2035
        %v2072 = vunpack.c.l.b16 %v2036
        %v2073 = vunpack.c.l.b16 %v2037
        %v2074 = vunpack.c.l.b16 %v2038
        %v2075 = vunpack.c.l.b16 %v2039
        %v2076 = vunpack.c.l.b16 %v2040
        %v2077 = vunpack.c.l.b16 %v2041
        %v2078 = vunpack.c.l.b16 %v2042
        %v2079 = vunpack.c.l.b16 %v2043
        %v2080 = vunpack.c.l.b16 %v2044
        %v2081 = vunpack.c.l.b16 %v2045
        %v2082 = vunpack.c.l.b16 %v2046
        %v2083 = vunpack.c.l.b16 %v2047
        %v2084 = vpack.c.b16 %v2069, %v2068
        %v2085 = vpack.c.b16 %v2071, %v2070
        %v2086 = vpack.c.b16 %v2073, %v2072
        %v2087 = vpack.c.b16 %v2075, %v2074
        %v2088 = vpack.c.b16 %v2077, %v2076
        %v2089 = vpack.c.b16 %v2079, %v2078
        %v2090 = vpack.c.b16 %v2081, %v2080
        %v2091 = vpack.c.b16 %v2083, %v2082
        %2100 = vmatprep.subr.bf16.mxu0 0
        %2101 = vmatpush1.bf16.msra.mxu0 %v2084
        %2102 = vmatprep.subr.bf16.mxu0 0
        %2103 = vmatpush1.bf16.msra.mxu0 %v2085
        %2104 = vmatprep.subr.bf16.mxu0 0
        %2105 = vmatpush1.bf16.msra.mxu0 %v2086
        %2106 = vmatprep.subr.bf16.mxu0 0
        %2107 = vmatpush1.bf16.msra.mxu0 %v2087
        %2108 = vmatprep.subr.bf16.mxu0 0
        %2109 = vmatpush1.bf16.msra.mxu0 %v2088
        %2110 = vmatprep.subr.bf16.mxu0 0
        %2111 = vmatpush1.bf16.msra.mxu0 %v2089
        %2112 = vmatprep.subr.bf16.mxu0 0
        %2113 = vmatpush1.bf16.msra.mxu0 %v2090
        %2114 = vmatprep.subr.bf16.mxu0 0
        %2115 = vmatpush1.bf16.msra.mxu0 %v2091
        %2116 = vmatprep.subr.bf16.mxu0 0
        %2117 = vmatpush1.bf16.msra.mxu0 0
        %2118 = vmatprep.subr.bf16.mxu0 0
        %2119 = vmatpush1.bf16.msra.mxu0 0
        %2120 = vmatprep.subr.bf16.mxu0 0
        %2121 = vmatpush1.bf16.msra.mxu0 0
        %2122 = vmatprep.subr.bf16.mxu0 0
        %2123 = vmatpush1.bf16.msra.mxu0 0
        %2124 = vmatprep.subr.bf16.mxu0 0
        %2125 = vmatpush1.bf16.msra.mxu0 0
        %2126 = vmatprep.subr.bf16.mxu0 0
        %2127 = vmatpush1.bf16.msra.mxu0 0
        %2128 = vmatprep.subr.bf16.mxu0 0
        %2129 = vmatpush1.bf16.msra.mxu0 0
        %2130 = vmatprep.subr.bf16.mxu0 0
        %2131 = vmatpush1.bf16.msra.mxu0 0
        %2132 = vmatprep.mubr.bf16.mxu0 0
        %2133 = vmatmul.mubr.bf16.gmra.mrb[0].mxu0 %v1999
        %v2134 = vpop.f32.mrb[0].mxu0
        %v2135 = vadd.f32 %v2051, %v2134
        %v2136 = vpop.f32.mrb[0].mxu0
        %v2137 = vpop.f32.mrb[0].mxu0
        %v2138 = vadd.f32 %v2051, %v2137
        %v2139 = vpop.f32.mrb[0].mxu0
        %2140 = vmatprep.mubr.bf16.mxu0 0
        %2141 = vmatmul.mubr.bf16.gmra.mrb[0].mxu0 %v2000
        %v2142 = vpop.f32.mrb[0].mxu0
        %v2143 = vadd.f32 %v2051, %v2142
        %v2144 = vpop.f32.mrb[0].mxu0
        %v2145 = vpop.f32.mrb[0].mxu0
        %v2146 = vadd.f32 %v2051, %v2145
        %v2147 = vpop.f32.mrb[0].mxu0
        %2148 = vmatprep.mubr.bf16.mxu0 0
        %2149 = vmatmul.mubr.bf16.gmra.mrb[0].mxu0 %v2001
        %v2150 = vpop.f32.mrb[0].mxu0
        %v2151 = vadd.f32 %v2051, %v2150
        %v2152 = vpop.f32.mrb[0].mxu0
        %v2153 = vpop.f32.mrb[0].mxu0
        %v2154 = vadd.f32 %v2051, %v2153
        %v2155 = vpop.f32.mrb[0].mxu0
        %2156 = vmatprep.mubr.bf16.mxu0 0
        %2157 = vmatmul.mubr.bf16.gmra.mrb[0].mxu0 %v2002
        %v2158 = vpop.f32.mrb[0].mxu0
        %v2159 = vadd.f32 %v2051, %v2158
        %v2160 = vpop.f32.mrb[0].mxu0
        %v2161 = vpop.f32.mrb[0].mxu0
        %v2162 = vadd.f32 %v2051, %v2161
        %v2163 = vpop.f32.mrb[0].mxu0
        %2164 = vmatprep.mubr.bf16.mxu0 0
        %2165 = vmatmul.mubr.bf16.gmra.mrb[0].mxu0 %v2003
        %v2166 = vpop.f32.mrb[0].mxu0
        %v2167 = vadd.f32 %v2051, %v2166
        %v2168 = vpop.f32.mrb[0].mxu0
        %v2169 = vpop.f32.mrb[0].mxu0
        %v2170 = vadd.f32 %v2051, %v2169
        %v2171 = vpop.f32.mrb[0].mxu0
        %2172 = vmatprep.mubr.bf16.mxu0 0
        %2173 = vmatmul.mubr.bf16.gmra.mrb[0].mxu0 %v2004
        %v2174 = vpop.f32.mrb[0].mxu0
        %v2175 = vadd.f32 %v2051, %v2174
        %v2176 = vpop.f32.mrb[0].mxu0
        %v2177 = vpop.f32.mrb[0].mxu0
        %v2178 = vadd.f32 %v2051, %v2177
        %v2179 = vpop.f32.mrb[0].mxu0
        %2180 = vmatprep.mubr.bf16.mxu0 0
        %2181 = vmatmul.mubr.bf16.gmra.mrb[0].mxu0 %v2005
        %v2182 = vpop.f32.mrb[0].mxu0
        %v2183 = vadd.f32 %v2051, %v2182
        %v2184 = vpop.f32.mrb[0].mxu0
        %v2185 = vpop.f32.mrb[0].mxu0
        %v2186 = vadd.f32 %v2051, %v2185
        %v2187 = vpop.f32.mrb[0].mxu0
        %2188 = vmatprep.mubr.bf16.mxu0 0
        %2189 = vmatmul.mubr.bf16.gmra.mrb[0].mxu0 %v2006
        %v2190 = vpop.f32.mrb[0].mxu0
        %v2191 = vadd.f32 %v2051, %v2190
        %v2192 = vpop.f32.mrb[0].mxu0
        %v2193 = vpop.f32.mrb[0].mxu0
        %v2194 = vadd.f32 %v2051, %v2193
        %v2195 = vpop.f32.mrb[0].mxu0
        %2196 = vmatprep.mubr.bf16.mxu0 0
        %2197 = vmatmul.mubr.bf16.gmra.mrb[0].mxu0 %v2007
        %v2198 = vpop.f32.mrb[0].mxu0
        %v2199 = vadd.f32 %v2051, %v2198
        %v2200 = vpop.f32.mrb[0].mxu0
        %v2201 = vpop.f32.mrb[0].mxu0
        %v2202 = vadd.f32 %v2051, %v2201
        %v2203 = vpop.f32.mrb[0].mxu0
        %2204 = vmatprep.mubr.bf16.mxu0 0
        %2205 = vmatmul.mubr.bf16.gmra.mrb[0].mxu0 %v2008
        %v2206 = vpop.f32.mrb[0].mxu0
        %v2207 = vadd.f32 %v2051, %v2206
        %v2208 = vpop.f32.mrb[0].mxu0
        %v2209 = vpop.f32.mrb[0].mxu0
        %v2210 = vadd.f32 %v2051, %v2209
        %v2211 = vpop.f32.mrb[0].mxu0
        %2212 = vmatprep.mubr.bf16.mxu0 0
        %2213 = vmatmul.mubr.bf16.gmra.mrb[0].mxu0 %v2009
        %v2214 = vpop.f32.mrb[0].mxu0
        %v2215 = vadd.f32 %v2051, %v2214
        %v2216 = vpop.f32.mrb[0].mxu0
        %v2217 = vpop.f32.mrb[0].mxu0
        %v2218 = vadd.f32 %v2051, %v2217
        %v2219 = vpop.f32.mrb[0].mxu0
        %2220 = vmatprep.mubr.bf16.mxu0 0
        %2221 = vmatmul.mubr.bf16.gmra.mrb[0].mxu0 %v2010
        %v2222 = vpop.f32.mrb[0].mxu0
        %v2223 = vadd.f32 %v2051, %v2222
        %v2224 = vpop.f32.mrb[0].mxu0
        %v2225 = vpop.f32.mrb[0].mxu0
        %v2226 = vadd.f32 %v2051, %v2225
        %v2227 = vpop.f32.mrb[0].mxu0
        %2228 = vmatprep.mubr.bf16.mxu0 0
        %2229 = vmatmul.mubr.bf16.gmra.mrb[0].mxu0 %v2011
        %v2230 = vpop.f32.mrb[0].mxu0
        %v2231 = vadd.f32 %v2051, %v2230
        %v2232 = vpop.f32.mrb[0].mxu0
        %v2233 = vpop.f32.mrb[0].mxu0
        %v2234 = vadd.f32 %v2051, %v2233
        %v2235 = vpop.f32.mrb[0].mxu0
        %2236 = vmatprep.mubr.bf16.mxu0 0
        %2237 = vmatmul.mubr.bf16.gmra.mrb[0].mxu0 %v2012
        %v2238 = vpop.f32.mrb[0].mxu0
        %v2239 = vadd.f32 %v2051, %v2238
        %v2240 = vpop.f32.mrb[0].mxu0
        %v2241 = vpop.f32.mrb[0].mxu0
        %v2242 = vadd.f32 %v2051, %v2241
        %v2243 = vpop.f32.mrb[0].mxu0
        %2244 = vmatprep.mubr.bf16.mxu0 0
        %2245 = vmatmul.mubr.bf16.gmra.mrb[0].mxu0 %v2013
        %v2246 = vpop.f32.mrb[0].mxu0
        %v2247 = vadd.f32 %v2051, %v2246
        %v2248 = vpop.f32.mrb[0].mxu0
        %v2249 = vpop.f32.mrb[0].mxu0
        %v2250 = vadd.f32 %v2051, %v2249
        %v2251 = vpop.f32.mrb[0].mxu0
        %2252 = vmatprep.mubr.bf16.mxu0 0
        %2253 = vmatmul.mubr.bf16.gmra.mrb[0].mxu0 %v2014
        %v2254 = vpop.f32.mrb[0].mxu0
        %v2255 = vadd.f32 %v2051, %v2254
        %v2256 = vpop.f32.mrb[0].mxu0
        %v2257 = vpop.f32.mrb[0].mxu0
        %v2258 = vadd.f32 %v2051, %v2257
        %v2259 = vpop.f32.mrb[0].mxu0
        %2260 = vmatprep.mubr.bf16.mxu0 0
        %2261 = vmatmul.mubr.bf16.gmra.mrb[0].mxu0 %v2015
        %v2262 = vpop.f32.mrb[0].mxu0
        %v2263 = vadd.f32 %v2051, %v2262
        %v2264 = vpop.f32.mrb[0].mxu0
        %v2265 = vpop.f32.mrb[0].mxu0
        %v2266 = vadd.f32 %v2051, %v2265
        %v2267 = vpop.f32.mrb[0].mxu0
        %2268 = vmatprep.mubr.bf16.mxu0 0
        %2269 = vmatmul.mubr.bf16.gmra.mrb[0].mxu0 %v2016
        %v2270 = vpop.f32.mrb[0].mxu0
        %v2271 = vadd.f32 %v2051, %v2270
        %v2272 = vpop.f32.mrb[0].mxu0
        %v2273 = vpop.f32.mrb[0].mxu0
        %v2274 = vadd.f32 %v2051, %v2273
        %v2275 = vpop.f32.mrb[0].mxu0
        %2276 = vmatprep.mubr.bf16.mxu0 0
        %2277 = vmatmul.mubr.bf16.gmra.mrb[0].mxu0 %v2017
        %v2278 = vpop.f32.mrb[0].mxu0
        %v2279 = vadd.f32 %v2051, %v2278
        %v2280 = vpop.f32.mrb[0].mxu0
        %v2281 = vpop.f32.mrb[0].mxu0
        %v2282 = vadd.f32 %v2051, %v2281
        %v2283 = vpop.f32.mrb[0].mxu0
        %2284 = vmatprep.mubr.bf16.mxu0 0
        %2285 = vmatmul.mubr.bf16.gmra.mrb[0].mxu0 %v2018
        %v2286 = vpop.f32.mrb[0].mxu0
        %v2287 = vadd.f32 %v2051, %v2286
        %v2288 = vpop.f32.mrb[0].mxu0
        %v2289 = vpop.f32.mrb[0].mxu0
        %v2290 = vadd.f32 %v2051, %v2289
        %v2291 = vpop.f32.mrb[0].mxu0
        %2292 = vmatprep.mubr.bf16.mxu0 0
        %2293 = vmatmul.mubr.bf16.gmra.mrb[0].mxu0 %v2019
        %v2294 = vpop.f32.mrb[0].mxu0
        %v2295 = vadd.f32 %v2051, %v2294
        %v2296 = vpop.f32.mrb[0].mxu0
        %v2297 = vpop.f32.mrb[0].mxu0
        %v2298 = vadd.f32 %v2051, %v2297
        %v2299 = vpop.f32.mrb[0].mxu0
        %2300 = vmatprep.mubr.bf16.mxu0 0
        %2301 = vmatmul.mubr.bf16.gmra.mrb[0].mxu0 %v2020
        %v2302 = vpop.f32.mrb[0].mxu0
        %v2303 = vadd.f32 %v2051, %v2302
        %v2304 = vpop.f32.mrb[0].mxu0
        %v2305 = vpop.f32.mrb[0].mxu0
        %v2306 = vadd.f32 %v2051, %v2305
        %v2307 = vpop.f32.mrb[0].mxu0
        %2308 = vmatprep.mubr.bf16.mxu0 0
        %2309 = vmatmul.mubr.bf16.gmra.mrb[0].mxu0 %v2021
        %v2310 = vpop.f32.mrb[0].mxu0
        %v2311 = vadd.f32 %v2051, %v2310
        %v2312 = vpop.f32.mrb[0].mxu0
        %v2313 = vpop.f32.mrb[0].mxu0
        %v2314 = vadd.f32 %v2051, %v2313
        %v2315 = vpop.f32.mrb[0].mxu0
        %2316 = vmatprep.mubr.bf16.mxu0 0
        %2317 = vmatmul.mubr.bf16.gmra.mrb[0].mxu0 %v2022
        %v2318 = vpop.f32.mrb[0].mxu0
        %v2319 = vadd.f32 %v2051, %v2318
        %v2320 = vpop.f32.mrb[0].mxu0
        %v2321 = vpop.f32.mrb[0].mxu0
        %v2322 = vadd.f32 %v2051, %v2321
        %v2323 = vpop.f32.mrb[0].mxu0
        %2324 = vmatprep.mubr.bf16.mxu0 0
        %2325 = vmatmul.mubr.bf16.gmra.mrb[0].mxu0 %v2023
        %v2326 = vpop.f32.mrb[0].mxu0
        %v2327 = vadd.f32 %v2051, %v2326
        %v2328 = vpop.f32.mrb[0].mxu0
        %v2329 = vpop.f32.mrb[0].mxu0
        %v2330 = vadd.f32 %v2051, %v2329
        %v2331 = vpop.f32.mrb[0].mxu0
        %2332 = vmatprep.mubr.bf16.mxu0 0
        %2333 = vmatmul.mubr.bf16.gmra.mrb[0].mxu0 %v2024
        %v2334 = vpop.f32.mrb[0].mxu0
        %v2335 = vadd.f32 %v2051, %v2334
        %v2336 = vpop.f32.mrb[0].mxu0
        %v2337 = vpop.f32.mrb[0].mxu0
        %v2338 = vadd.f32 %v2051, %v2337
        %v2339 = vpop.f32.mrb[0].mxu0
        %2340 = vmatprep.mubr.bf16.mxu0 0
        %2341 = vmatmul.mubr.bf16.gmra.mrb[0].mxu0 %v2025
        %v2342 = vpop.f32.mrb[0].mxu0
        %v2343 = vadd.f32 %v2051, %v2342
        %v2344 = vpop.f32.mrb[0].mxu0
        %v2345 = vpop.f32.mrb[0].mxu0
        %v2346 = vadd.f32 %v2051, %v2345
        %v2347 = vpop.f32.mrb[0].mxu0
        %2348 = vmatprep.mubr.bf16.mxu0 0
        %2349 = vmatmul.mubr.bf16.gmra.mrb[0].mxu0 %v2026
        %v2350 = vpop.f32.mrb[0].mxu0
        %v2351 = vadd.f32 %v2051, %v2350
        %v2352 = vpop.f32.mrb[0].mxu0
        %v2353 = vpop.f32.mrb[0].mxu0
        %v2354 = vadd.f32 %v2051, %v2353
        %v2355 = vpop.f32.mrb[0].mxu0
        %2356 = vmatprep.mubr.bf16.mxu0 0
        %2357 = vmatmul.mubr.bf16.gmra.mrb[0].mxu0 %v2027
        %v2358 = vpop.f32.mrb[0].mxu0
        %v2359 = vadd.f32 %v2051, %v2358
        %v2360 = vpop.f32.mrb[0].mxu0
        %v2361 = vpop.f32.mrb[0].mxu0
        %v2362 = vadd.f32 %v2051, %v2361
        %v2363 = vpop.f32.mrb[0].mxu0
        %2364 = vmatprep.mubr.bf16.mxu0 0
        %2365 = vmatmul.mubr.bf16.gmra.mrb[0].mxu0 %v2028
        %v2366 = vpop.f32.mrb[0].mxu0
        %v2367 = vadd.f32 %v2051, %v2366
        %v2368 = vpop.f32.mrb[0].mxu0
        %v2369 = vpop.f32.mrb[0].mxu0
        %v2370 = vadd.f32 %v2051, %v2369
        %v2371 = vpop.f32.mrb[0].mxu0
        %2372 = vmatprep.mubr.bf16.mxu0 0
        %2373 = vmatmul.mubr.bf16.gmra.mrb[0].mxu0 %v2029
        %v2374 = vpop.f32.mrb[0].mxu0
        %v2375 = vadd.f32 %v2051, %v2374
        %v2376 = vpop.f32.mrb[0].mxu0
        %v2377 = vpop.f32.mrb[0].mxu0
        %v2378 = vadd.f32 %v2051, %v2377
        %v2379 = vpop.f32.mrb[0].mxu0
        %2380 = vmatprep.mubr.bf16.mxu0 0
        %2381 = vmatmul.mubr.bf16.gmra.mrb[0].mxu0 %v2030
        %v2382 = vpop.f32.mrb[0].mxu0
        %v2383 = vadd.f32 %v2051, %v2382
        %v2384 = vpop.f32.mrb[0].mxu0
        %v2385 = vpop.f32.mrb[0].mxu0
        %v2386 = vpop.f32.mrb[0].mxu0
        %2387 = vdwg.mxu0
        %v2388 = vpack.c.bf16 %v2138, %v2135
        %v2389 = vpack.c.bf16 %v2146, %v2143
        %v2390 = vpack.c.bf16 %v2154, %v2151
        %v2391 = vpack.c.bf16 %v2162, %v2159
        %v2392 = vpack.c.bf16 %v2170, %v2167
        %v2393 = vpack.c.bf16 %v2178, %v2175
        %v2394 = vpack.c.bf16 %v2186, %v2183
        %v2395 = vpack.c.bf16 %v2194, %v2191
        %v2396 = vpack.c.bf16 %v2202, %v2199
        %v2397 = vpack.c.bf16 %v2210, %v2207
        %v2398 = vpack.c.bf16 %v2218, %v2215
        %v2399 = vpack.c.bf16 %v2226, %v2223
        %v2400 = vpack.c.bf16 %v2234, %v2231
        %v2401 = vpack.c.bf16 %v2242, %v2239
        %v2402 = vpack.c.bf16 %v2250, %v2247
        %v2403 = vpack.c.bf16 %v2258, %v2255
        %v2404 = vpack.c.bf16 %v2266, %v2263
        %v2405 = vpack.c.bf16 %v2274, %v2271
        %v2406 = vpack.c.bf16 %v2282, %v2279
        %v2407 = vpack.c.bf16 %v2290, %v2287
        %v2408 = vpack.c.bf16 %v2298, %v2295
        %v2409 = vpack.c.bf16 %v2306, %v2303
        %v2410 = vpack.c.bf16 %v2314, %v2311
        %v2411 = vpack.c.bf16 %v2322, %v2319
        %v2412 = vpack.c.bf16 %v2330, %v2327
        %v2413 = vpack.c.bf16 %v2338, %v2335
        %v2414 = vpack.c.bf16 %v2346, %v2343
        %v2415 = vpack.c.bf16 %v2354, %v2351
        %v2416 = vpack.c.bf16 %v2362, %v2359
        %v2417 = vpack.c.bf16 %v2370, %v2367
        %v2418 = vpack.c.bf16 %v2378, %v2375
        %v2419 = vpack.c.bf16 %v2383, %v2383
        %v2420 = vmul.bf16 %v2388, 1120420552
        %v2421 = vmul.bf16 %v2389, 1120420552
        %v2422 = vmul.bf16 %v2390, 1120420552
        %v2423 = vmul.bf16 %v2391, 1120420552
        %v2424 = vmul.bf16 %v2392, 1120420552
        %v2425 = vmul.bf16 %v2393, 1120420552
        %v2426 = vmul.bf16 %v2394, 1120420552
        %v2427 = vmul.bf16 %v2395, 1120420552
        %v2428 = vmul.bf16 %v2396, 1120420552
        %v2429 = vmul.bf16 %v2397, 1120420552
        %v2430 = vmul.bf16 %v2398, 1120420552
        %v2431 = vmul.bf16 %v2399, 1120420552
        %v2432 = vmul.bf16 %v2400, 1120420552
        %v2433 = vmul.bf16 %v2401, 1120420552
        %v2434 = vmul.bf16 %v2402, 1120420552
        %v2435 = vmul.bf16 %v2403, 1120420552
        %v2436 = vmul.bf16 %v2404, 1120420552
        %v2437 = vmul.bf16 %v2405, 1120420552
        %v2438 = vmul.bf16 %v2406, 1120420552
        %v2439 = vmul.bf16 %v2407, 1120420552
        %v2440 = vmul.bf16 %v2408, 1120420552
        %v2441 = vmul.bf16 %v2409, 1120420552
        %v2442 = vmul.bf16 %v2410, 1120420552
        %v2443 = vmul.bf16 %v2411, 1120420552
        %v2444 = vmul.bf16 %v2412, 1120420552
        %v2445 = vmul.bf16 %v2413, 1120420552
        %v2446 = vmul.bf16 %v2414, 1120420552
        %v2447 = vmul.bf16 %v2415, 1120420552
        %v2448 = vmul.bf16 %v2416, 1120420552
        %v2449 = vmul.bf16 %v2417, 1120420552
        %v2450 = vmul.bf16 %v2418, 1120420552
        %v2451 = vmul.bf16 %v2419, 1120420552
        %v2452 = vmin.bf16 %v2420, 1101021600
        %v2453 = vmin.bf16 %v2421, 1101021600
        %v2454 = vmin.bf16 %v2422, 1101021600
        %v2455 = vmin.bf16 %v2423, 1101021600
        %v2456 = vmin.bf16 %v2424, 1101021600
        %v2457 = vmin.bf16 %v2425, 1101021600
        %v2458 = vmin.bf16 %v2426, 1101021600
        %v2459 = vmin.bf16 %v2427, 1101021600
        %v2460 = vmin.bf16 %v2428, 1101021600
        %v2461 = vmin.bf16 %v2429, 1101021600
        %v2462 = vmin.bf16 %v2430, 1101021600
        %v2463 = vmin.bf16 %v2431, 1101021600
        %v2464 = vmin.bf16 %v2432, 1101021600
        %v2465 = vmin.bf16 %v2433, 1101021600
        %v2466 = vmin.bf16 %v2434, 1101021600
        %v2467 = vmin.bf16 %v2435, 1101021600
        %v2468 = vmin.bf16 %v2436, 1101021600
        %v2469 = vmin.bf16 %v2437, 1101021600
        %v2470 = vmin.bf16 %v2438, 1101021600
        %v2471 = vmin.bf16 %v2439, 1101021600
        %v2472 = vmin.bf16 %v2440, 1101021600
        %v2473 = vmin.bf16 %v2441, 1101021600
        %v2474 = vmin.bf16 %v2442, 1101021600
        %v2475 = vmin.bf16 %v2443, 1101021600
        %v2476 = vmin.bf16 %v2444, 1101021600
        %v2477 = vmin.bf16 %v2445, 1101021600
        %v2478 = vmin.bf16 %v2446, 1101021600
        %v2479 = vmin.bf16 %v2447, 1101021600
        %v2480 = vmin.bf16 %v2448, 1101021600
        %v2481 = vmin.bf16 %v2449, 1101021600
        %v2482 = vmin.bf16 %v2450, 1101021600
        %v2483 = vmin.bf16 %v2451, 1101021600
        %v2485 = vmul.bf16 %v2452, 1069105081
        %v2486 = vpow.bf16.pop %v2485
        %v2488 = vmul.bf16 %v2453, 1069105081
        %v2489 = vpow.bf16.pop %v2488
        %v2491 = vmul.bf16 %v2454, 1069105081
        %v2492 = vpow.bf16.pop %v2491
        %v2494 = vmul.bf16 %v2455, 1069105081
        %v2495 = vpow.bf16.pop %v2494
        %v2497 = vmul.bf16 %v2456, 1069105081
        %v2498 = vpow.bf16.pop %v2497
        %v2500 = vmul.bf16 %v2457, 1069105081
        %v2501 = vpow.bf16.pop %v2500
        %v2503 = vmul.bf16 %v2458, 1069105081
        %v2504 = vpow.bf16.pop %v2503
        %v2506 = vmul.bf16 %v2459, 1069105081
        %v2507 = vpow.bf16.pop %v2506
        %v2509 = vmul.bf16 %v2460, 1069105081
        %v2510 = vpow.bf16.pop %v2509
        %v2512 = vmul.bf16 %v2461, 1069105081
        %v2513 = vpow.bf16.pop %v2512
        %v2515 = vmul.bf16 %v2462, 1069105081
        %v2516 = vpow.bf16.pop %v2515
        %v2518 = vmul.bf16 %v2463, 1069105081
        %v2519 = vpow.bf16.pop %v2518
        %v2521 = vmul.bf16 %v2464, 1069105081
        %v2522 = vpow.bf16.pop %v2521
        %v2524 = vmul.bf16 %v2465, 1069105081
        %v2525 = vpow.bf16.pop %v2524
        %v2527 = vmul.bf16 %v2466, 1069105081
        %v2528 = vpow.bf16.pop %v2527
        %v2530 = vmul.bf16 %v2467, 1069105081
        %v2531 = vpow.bf16.pop %v2530
        %v2533 = vmul.bf16 %v2468, 1069105081
        %v2534 = vpow.bf16.pop %v2533
        %v2536 = vmul.bf16 %v2469, 1069105081
        %v2537 = vpow.bf16.pop %v2536
        %v2539 = vmul.bf16 %v2470, 1069105081
        %v2540 = vpow.bf16.pop %v2539
        %v2542 = vmul.bf16 %v2471, 1069105081
        %v2543 = vpow.bf16.pop %v2542
        %v2545 = vmul.bf16 %v2472, 1069105081
        %v2546 = vpow.bf16.pop %v2545
        %v2548 = vmul.bf16 %v2473, 1069105081
        %v2549 = vpow.bf16.pop %v2548
        %v2551 = vmul.bf16 %v2474, 1069105081
        %v2552 = vpow.bf16.pop %v2551
        %v2554 = vmul.bf16 %v2475, 1069105081
        %v2555 = vpow.bf16.pop %v2554
        %v2557 = vmul.bf16 %v2476, 1069105081
        %v2558 = vpow.bf16.pop %v2557
        %v2560 = vmul.bf16 %v2477, 1069105081
        %v2561 = vpow.bf16.pop %v2560
        %v2563 = vmul.bf16 %v2478, 1069105081
        %v2564 = vpow.bf16.pop %v2563
        %v2566 = vmul.bf16 %v2479, 1069105081
        %v2567 = vpow.bf16.pop %v2566
        %v2569 = vmul.bf16 %v2480, 1069105081
        %v2570 = vpow.bf16.pop %v2569
        %v2572 = vmul.bf16 %v2481, 1069105081
        %v2573 = vpow.bf16.pop %v2572
        %v2575 = vmul.bf16 %v2482, 1069105081
        %v2576 = vpow.bf16.pop %v2575
        %v2578 = vmul.bf16 %v2483, 1069105081
        %v2579 = vpow.bf16.pop %v2578
        %v2580 = vadd.bf16 %v2486, 1065369472
        %v2581 = vadd.bf16 %v2489, 1065369472
        %v2582 = vadd.bf16 %v2492, 1065369472
        %v2583 = vadd.bf16 %v2495, 1065369472
        %v2584 = vadd.bf16 %v2498, 1065369472
        %v2585 = vadd.bf16 %v2501, 1065369472
        %v2586 = vadd.bf16 %v2504, 1065369472
        %v2587 = vadd.bf16 %v2507, 1065369472
        %v2588 = vadd.bf16 %v2510, 1065369472
        %v2589 = vadd.bf16 %v2513, 1065369472
        %v2590 = vadd.bf16 %v2516, 1065369472
        %v2591 = vadd.bf16 %v2519, 1065369472
        %v2592 = vadd.bf16 %v2522, 1065369472
        %v2593 = vadd.bf16 %v2525, 1065369472
        %v2594 = vadd.bf16 %v2528, 1065369472
        %v2595 = vadd.bf16 %v2531, 1065369472
        %v2596 = vadd.bf16 %v2534, 1065369472
        %v2597 = vadd.bf16 %v2537, 1065369472
        %v2598 = vadd.bf16 %v2540, 1065369472
        %v2599 = vadd.bf16 %v2543, 1065369472
        %v2600 = vadd.bf16 %v2546, 1065369472
        %v2601 = vadd.bf16 %v2549, 1065369472
        %v2602 = vadd.bf16 %v2552, 1065369472
        %v2603 = vadd.bf16 %v2555, 1065369472
        %v2604 = vadd.bf16 %v2558, 1065369472
        %v2605 = vadd.bf16 %v2561, 1065369472
        %v2606 = vadd.bf16 %v2564, 1065369472
        %v2607 = vadd.bf16 %v2567, 1065369472
        %v2608 = vadd.bf16 %v2570, 1065369472
        %v2609 = vadd.bf16 %v2573, 1065369472
        %v2610 = vadd.bf16 %v2576, 1065369472
        %v2611 = vadd.bf16 %v2579, 1065369472
        %v2612 = vlog2.bf16.pop %v2580
        %v2614 = vmul.bf16 %v2612, 1060192049
        %v2615 = vlog2.bf16.pop %v2581
        %v2617 = vmul.bf16 %v2615, 1060192049
        %v2618 = vlog2.bf16.pop %v2582
        %v2620 = vmul.bf16 %v2618, 1060192049
        %v2621 = vlog2.bf16.pop %v2583
        %v2623 = vmul.bf16 %v2621, 1060192049
        %v2624 = vlog2.bf16.pop %v2584
        %v2626 = vmul.bf16 %v2624, 1060192049
        %v2627 = vlog2.bf16.pop %v2585
        %v2629 = vmul.bf16 %v2627, 1060192049
        %v2630 = vlog2.bf16.pop %v2586
        %v2632 = vmul.bf16 %v2630, 1060192049
        %v2633 = vlog2.bf16.pop %v2587
        %v2635 = vmul.bf16 %v2633, 1060192049
        %v2636 = vlog2.bf16.pop %v2588
        %v2638 = vmul.bf16 %v2636, 1060192049
        %v2639 = vlog2.bf16.pop %v2589
        %v2641 = vmul.bf16 %v2639, 1060192049
        %v2642 = vlog2.bf16.pop %v2590
        %v2644 = vmul.bf16 %v2642, 1060192049
        %v2645 = vlog2.bf16.pop %v2591
        %v2647 = vmul.bf16 %v2645, 1060192049
        %v2648 = vlog2.bf16.pop %v2592
        %v2650 = vmul.bf16 %v2648, 1060192049
        %v2651 = vlog2.bf16.pop %v2593
        %v2653 = vmul.bf16 %v2651, 1060192049
        %v2654 = vlog2.bf16.pop %v2594
        %v2656 = vmul.bf16 %v2654, 1060192049
        %v2657 = vlog2.bf16.pop %v2595
        %v2659 = vmul.bf16 %v2657, 1060192049
        %v2660 = vlog2.bf16.pop %v2596
        %v2662 = vmul.bf16 %v2660, 1060192049
        %v2663 = vlog2.bf16.pop %v2597
        %v2665 = vmul.bf16 %v2663, 1060192049
        %v2666 = vlog2.bf16.pop %v2598
        %v2668 = vmul.bf16 %v2666, 1060192049
        %v2669 = vlog2.bf16.pop %v2599
        %v2671 = vmul.bf16 %v2669, 1060192049
        %v2672 = vlog2.bf16.pop %v2600
        %v2674 = vmul.bf16 %v2672, 1060192049
        %v2675 = vlog2.bf16.pop %v2601
        %v2677 = vmul.bf16 %v2675, 1060192049
        %v2678 = vlog2.bf16.pop %v2602
        %v2680 = vmul.bf16 %v2678, 1060192049
        %v2681 = vlog2.bf16.pop %v2603
        %v2683 = vmul.bf16 %v2681, 1060192049
        %v2684 = vlog2.bf16.pop %v2604
        %v2686 = vmul.bf16 %v2684, 1060192049
        %v2687 = vlog2.bf16.pop %v2605
        %v2689 = vmul.bf16 %v2687, 1060192049
        %v2690 = vlog2.bf16.pop %v2606
        %v2692 = vmul.bf16 %v2690, 1060192049
        %v2693 = vlog2.bf16.pop %v2607
        %v2695 = vmul.bf16 %v2693, 1060192049
        %v2696 = vlog2.bf16.pop %v2608
        %v2698 = vmul.bf16 %v2696, 1060192049
        %v2699 = vlog2.bf16.pop %v2609
        %v2701 = vmul.bf16 %v2699, 1060192049
        %v2702 = vlog2.bf16.pop %v2610
        %v2704 = vmul.bf16 %v2702, 1060192049
        %v2705 = vlog2.bf16.pop %v2611
        %v2707 = vmul.bf16 %v2705, 1060192049
        %v2708 = vmul.bf16 %v2614, 1009007652
        %v2709 = vmul.bf16 %v2617, 1009007652
        %v2710 = vmul.bf16 %v2620, 1009007652
        %v2711 = vmul.bf16 %v2623, 1009007652
        %v2712 = vmul.bf16 %v2626, 1009007652
        %v2713 = vmul.bf16 %v2629, 1009007652
        %v2714 = vmul.bf16 %v2632, 1009007652
        %v2715 = vmul.bf16 %v2635, 1009007652
        %v2716 = vmul.bf16 %v2638, 1009007652
        %v2717 = vmul.bf16 %v2641, 1009007652
        %v2718 = vmul.bf16 %v2644, 1009007652
        %v2719 = vmul.bf16 %v2647, 1009007652
        %v2720 = vmul.bf16 %v2650, 1009007652
        %v2721 = vmul.bf16 %v2653, 1009007652
        %v2722 = vmul.bf16 %v2656, 1009007652
        %v2723 = vmul.bf16 %v2659, 1009007652
        %v2724 = vmul.bf16 %v2662, 1009007652
        %v2725 = vmul.bf16 %v2665, 1009007652
        %v2726 = vmul.bf16 %v2668, 1009007652
        %v2727 = vmul.bf16 %v2671, 1009007652
        %v2728 = vmul.bf16 %v2674, 1009007652
        %v2729 = vmul.bf16 %v2677, 1009007652
        %v2730 = vmul.bf16 %v2680, 1009007652
        %v2731 = vmul.bf16 %v2683, 1009007652
        %v2732 = vmul.bf16 %v2686, 1009007652
        %v2733 = vmul.bf16 %v2689, 1009007652
        %v2734 = vmul.bf16 %v2692, 1009007652
        %v2735 = vmul.bf16 %v2695, 1009007652
        %v2736 = vmul.bf16 %v2698, 1009007652
        %v2737 = vmul.bf16 %v2701, 1009007652
        %v2738 = vmul.bf16 %v2704, 1009007652
        %v2739 = vmul.bf16 %v2707, 1009007652
        %vm2740 = vcmp.gt.bf16.partialorder %v2420, 1101021600
        %vm2741 = vcmp.gt.bf16.partialorder %v2421, 1101021600
        %vm2742 = vcmp.gt.bf16.partialorder %v2422, 1101021600
        %vm2743 = vcmp.gt.bf16.partialorder %v2423, 1101021600
        %vm2744 = vcmp.gt.bf16.partialorder %v2424, 1101021600
        %vm2745 = vcmp.gt.bf16.partialorder %v2425, 1101021600
        %vm2746 = vcmp.gt.bf16.partialorder %v2426, 1101021600
        %vm2747 = vcmp.gt.bf16.partialorder %v2427, 1101021600
        %vm2748 = vcmp.gt.bf16.partialorder %v2428, 1101021600
        %vm2749 = vcmp.gt.bf16.partialorder %v2429, 1101021600
        %vm2750 = vcmp.gt.bf16.partialorder %v2430, 1101021600
        %vm2751 = vcmp.gt.bf16.partialorder %v2431, 1101021600
        %vm2752 = vcmp.gt.bf16.partialorder %v2432, 1101021600
        %vm2753 = vcmp.gt.bf16.partialorder %v2433, 1101021600
        %vm2754 = vcmp.gt.bf16.partialorder %v2434, 1101021600
        %vm2755 = vcmp.gt.bf16.partialorder %v2435, 1101021600
        %vm2756 = vcmp.gt.bf16.partialorder %v2436, 1101021600
        %vm2757 = vcmp.gt.bf16.partialorder %v2437, 1101021600
        %vm2758 = vcmp.gt.bf16.partialorder %v2438, 1101021600
        %vm2759 = vcmp.gt.bf16.partialorder %v2439, 1101021600
        %vm2760 = vcmp.gt.bf16.partialorder %v2440, 1101021600
        %vm2761 = vcmp.gt.bf16.partialorder %v2441, 1101021600
        %vm2762 = vcmp.gt.bf16.partialorder %v2442, 1101021600
        %vm2763 = vcmp.gt.bf16.partialorder %v2443, 1101021600
        %vm2764 = vcmp.gt.bf16.partialorder %v2444, 1101021600
        %vm2765 = vcmp.gt.bf16.partialorder %v2445, 1101021600
        %vm2766 = vcmp.gt.bf16.partialorder %v2446, 1101021600
        %vm2767 = vcmp.gt.bf16.partialorder %v2447, 1101021600
        %vm2768 = vcmp.gt.bf16.partialorder %v2448, 1101021600
        %vm2769 = vcmp.gt.bf16.partialorder %v2449, 1101021600
        %vm2770 = vcmp.gt.bf16.partialorder %v2450, 1101021600
        %vm2771 = vcmp.gt.bf16.partialorder %v2451, 1101021600
        %v2772 = vsel %vm2740, %v2388, %v2708
        %v2773 = vsel %vm2741, %v2389, %v2709
        %v2774 = vsel %vm2742, %v2390, %v2710
        %v2775 = vsel %vm2743, %v2391, %v2711
        %v2776 = vsel %vm2744, %v2392, %v2712
        %v2777 = vsel %vm2745, %v2393, %v2713
        %v2778 = vsel %vm2746, %v2394, %v2714
        %v2779 = vsel %vm2747, %v2395, %v2715
        %v2780 = vsel %vm2748, %v2396, %v2716
        %v2781 = vsel %vm2749, %v2397, %v2717
        %v2782 = vsel %vm2750, %v2398, %v2718
        %v2783 = vsel %vm2751, %v2399, %v2719
        %v2784 = vsel %vm2752, %v2400, %v2720
        %v2785 = vsel %vm2753, %v2401, %v2721
        %v2786 = vsel %vm2754, %v2402, %v2722
        %v2787 = vsel %vm2755, %v2403, %v2723
        %v2788 = vsel %vm2756, %v2404, %v2724
        %v2789 = vsel %vm2757, %v2405, %v2725
        %v2790 = vsel %vm2758, %v2406, %v2726
        %v2791 = vsel %vm2759, %v2407, %v2727
        %v2792 = vsel %vm2760, %v2408, %v2728
        %v2793 = vsel %vm2761, %v2409, %v2729
        %v2794 = vsel %vm2762, %v2410, %v2730
        %v2795 = vsel %vm2763, %v2411, %v2731
        %v2796 = vsel %vm2764, %v2412, %v2732
        %v2797 = vsel %vm2765, %v2413, %v2733
        %v2798 = vsel %vm2766, %v2414, %v2734
        %v2799 = vsel %vm2767, %v2415, %v2735
        %v2800 = vsel %vm2768, %v2416, %v2736
        %v2801 = vsel %vm2769, %v2417, %v2737
        %v2802 = vsel %vm2770, %v2418, %v2738
        %v2803 = vsel %vm2771, %v2419, %v2739
        %s2804 = scalar_lea.vmem %s2, 128
        %v2805 = vld [vmem:[%s2804] sm:$0xf]
        %v2806 = vld [vmem:[%s2804 + $0x4] sm:$0xf]
        %v2807 = vld [vmem:[%s2804 + $0x8] sm:$0xf]
        %v2808 = vld [vmem:[%s2804 + $0xc] sm:$0xf]
        %v2809 = vld [vmem:[%s2804 + $0x10] sm:$0xf]
        %v2810 = vld [vmem:[%s2804 + $0x14] sm:$0xf]
        %v2811 = vld [vmem:[%s2804 + $0x18] sm:$0xf]
        %v2812 = vld [vmem:[%s2804 + $0x1c] sm:$0xf]
        %v2813 = vld [vmem:[%s2804 + $0x20] sm:$0xf]
        %v2814 = vld [vmem:[%s2804 + $0x24] sm:$0xf]
        %v2815 = vld [vmem:[%s2804 + $0x28] sm:$0xf]
        %v2816 = vld [vmem:[%s2804 + $0x2c] sm:$0xf]
        %v2817 = vld [vmem:[%s2804 + $0x30] sm:$0xf]
        %v2818 = vld [vmem:[%s2804 + $0x34] sm:$0xf]
        %v2819 = vld [vmem:[%s2804 + $0x38] sm:$0xf]
        %v2820 = vld [vmem:[%s2804 + $0x3c] sm:$0xf]
        %v2821 = vlaneseq
        %v2822 = vshrl.u32 %v2821, 7
        %v2823 = vsub.s32 3, %v2822
        %v2824 = vrot.slane %v267, %v2823
        %v2841 = vunpack.c.l.b16 %v2805
        %v2842 = vunpack.c.l.b16 %v2806
        %v2843 = vunpack.c.l.b16 %v2807
        %v2844 = vunpack.c.l.b16 %v2808
        %v2845 = vunpack.c.l.b16 %v2809
        %v2846 = vunpack.c.l.b16 %v2810
        %v2847 = vunpack.c.l.b16 %v2811
        %v2848 = vunpack.c.l.b16 %v2812
        %v2849 = vunpack.c.l.b16 %v2813
        %v2850 = vunpack.c.l.b16 %v2814
        %v2851 = vunpack.c.l.b16 %v2815
        %v2852 = vunpack.c.l.b16 %v2816
        %v2853 = vunpack.c.l.b16 %v2817
        %v2854 = vunpack.c.l.b16 %v2818
        %v2855 = vunpack.c.l.b16 %v2819
        %v2856 = vunpack.c.l.b16 %v2820
        %v2857 = vpack.c.b16 %v2842, %v2841
        %v2858 = vpack.c.b16 %v2844, %v2843
        %v2859 = vpack.c.b16 %v2846, %v2845
        %v2860 = vpack.c.b16 %v2848, %v2847
        %v2861 = vpack.c.b16 %v2850, %v2849
        %v2862 = vpack.c.b16 %v2852, %v2851
        %v2863 = vpack.c.b16 %v2854, %v2853
        %v2864 = vpack.c.b16 %v2856, %v2855
        %2873 = vmatprep.subr.bf16.mxu0 0
        %2874 = vmatpush1.bf16.msra.mxu0 %v2857
        %2875 = vmatprep.subr.bf16.mxu0 0
        %2876 = vmatpush1.bf16.msra.mxu0 %v2858
        %2877 = vmatprep.subr.bf16.mxu0 0
        %2878 = vmatpush1.bf16.msra.mxu0 %v2859
        %2879 = vmatprep.subr.bf16.mxu0 0
        %2880 = vmatpush1.bf16.msra.mxu0 %v2860
        %2881 = vmatprep.subr.bf16.mxu0 0
        %2882 = vmatpush1.bf16.msra.mxu0 %v2861
        %2883 = vmatprep.subr.bf16.mxu0 0
        %2884 = vmatpush1.bf16.msra.mxu0 %v2862
        %2885 = vmatprep.subr.bf16.mxu0 0
        %2886 = vmatpush1.bf16.msra.mxu0 %v2863
        %2887 = vmatprep.subr.bf16.mxu0 0
        %2888 = vmatpush1.bf16.msra.mxu0 %v2864
        %2889 = vmatprep.subr.bf16.mxu0 0
        %2890 = vmatpush1.bf16.msra.mxu0 0
        %2891 = vmatprep.subr.bf16.mxu0 0
        %2892 = vmatpush1.bf16.msra.mxu0 0
        %2893 = vmatprep.subr.bf16.mxu0 0
        %2894 = vmatpush1.bf16.msra.mxu0 0
        %2895 = vmatprep.subr.bf16.mxu0 0
        %2896 = vmatpush1.bf16.msra.mxu0 0
        %2897 = vmatprep.subr.bf16.mxu0 0
        %2898 = vmatpush1.bf16.msra.mxu0 0
        %2899 = vmatprep.subr.bf16.mxu0 0
        %2900 = vmatpush1.bf16.msra.mxu0 0
        %2901 = vmatprep.subr.bf16.mxu0 0
        %2902 = vmatpush1.bf16.msra.mxu0 0
        %2903 = vmatprep.subr.bf16.mxu0 0
        %2904 = vmatpush1.bf16.msra.mxu0 0
        %2905 = vmatprep.mubr.bf16.mxu0 0
        %2906 = vmatmul.mubr.bf16.gmra.mrb[0].mxu0 %v2772
        %v2907 = vpop.f32.mrb[0].mxu0
        %v2908 = vadd.f32 %v2824, %v2907
        %v2909 = vpop.f32.mrb[0].mxu0
        %v2910 = vpop.f32.mrb[0].mxu0
        %v2911 = vadd.f32 %v2824, %v2910
        %v2912 = vpop.f32.mrb[0].mxu0
        %2913 = vmatprep.mubr.bf16.mxu0 0
        %2914 = vmatmul.mubr.bf16.gmra.mrb[0].mxu0 %v2773
        %v2915 = vpop.f32.mrb[0].mxu0
        %v2916 = vadd.f32 %v2824, %v2915
        %v2917 = vpop.f32.mrb[0].mxu0
        %v2918 = vpop.f32.mrb[0].mxu0
        %v2919 = vadd.f32 %v2824, %v2918
        %v2920 = vpop.f32.mrb[0].mxu0
        %2921 = vmatprep.mubr.bf16.mxu0 0
        %2922 = vmatmul.mubr.bf16.gmra.mrb[0].mxu0 %v2774
        %v2923 = vpop.f32.mrb[0].mxu0
        %v2924 = vadd.f32 %v2824, %v2923
        %v2925 = vpop.f32.mrb[0].mxu0
        %v2926 = vpop.f32.mrb[0].mxu0
        %v2927 = vadd.f32 %v2824, %v2926
        %v2928 = vpop.f32.mrb[0].mxu0
        %2929 = vmatprep.mubr.bf16.mxu0 0
        %2930 = vmatmul.mubr.bf16.gmra.mrb[0].mxu0 %v2775
        %v2931 = vpop.f32.mrb[0].mxu0
        %v2932 = vadd.f32 %v2824, %v2931
        %v2933 = vpop.f32.mrb[0].mxu0
        %v2934 = vpop.f32.mrb[0].mxu0
        %v2935 = vadd.f32 %v2824, %v2934
        %v2936 = vpop.f32.mrb[0].mxu0
        %2937 = vmatprep.mubr.bf16.mxu0 0
        %2938 = vmatmul.mubr.bf16.gmra.mrb[0].mxu0 %v2776
        %v2939 = vpop.f32.mrb[0].mxu0
        %v2940 = vadd.f32 %v2824, %v2939
        %v2941 = vpop.f32.mrb[0].mxu0
        %v2942 = vpop.f32.mrb[0].mxu0
        %v2943 = vadd.f32 %v2824, %v2942
        %v2944 = vpop.f32.mrb[0].mxu0
        %2945 = vmatprep.mubr.bf16.mxu0 0
        %2946 = vmatmul.mubr.bf16.gmra.mrb[0].mxu0 %v2777
        %v2947 = vpop.f32.mrb[0].mxu0
        %v2948 = vadd.f32 %v2824, %v2947
        %v2949 = vpop.f32.mrb[0].mxu0
        %v2950 = vpop.f32.mrb[0].mxu0
        %v2951 = vadd.f32 %v2824, %v2950
        %v2952 = vpop.f32.mrb[0].mxu0
        %2953 = vmatprep.mubr.bf16.mxu0 0
        %2954 = vmatmul.mubr.bf16.gmra.mrb[0].mxu0 %v2778
        %v2955 = vpop.f32.mrb[0].mxu0
        %v2956 = vadd.f32 %v2824, %v2955
        %v2957 = vpop.f32.mrb[0].mxu0
        %v2958 = vpop.f32.mrb[0].mxu0
        %v2959 = vadd.f32 %v2824, %v2958
        %v2960 = vpop.f32.mrb[0].mxu0
        %2961 = vmatprep.mubr.bf16.mxu0 0
        %2962 = vmatmul.mubr.bf16.gmra.mrb[0].mxu0 %v2779
        %v2963 = vpop.f32.mrb[0].mxu0
        %v2964 = vadd.f32 %v2824, %v2963
        %v2965 = vpop.f32.mrb[0].mxu0
        %v2966 = vpop.f32.mrb[0].mxu0
        %v2967 = vadd.f32 %v2824, %v2966
        %v2968 = vpop.f32.mrb[0].mxu0
        %2969 = vmatprep.mubr.bf16.mxu0 0
        %2970 = vmatmul.mubr.bf16.gmra.mrb[0].mxu0 %v2780
        %v2971 = vpop.f32.mrb[0].mxu0
        %v2972 = vadd.f32 %v2824, %v2971
        %v2973 = vpop.f32.mrb[0].mxu0
        %v2974 = vpop.f32.mrb[0].mxu0
        %v2975 = vadd.f32 %v2824, %v2974
        %v2976 = vpop.f32.mrb[0].mxu0
        %2977 = vmatprep.mubr.bf16.mxu0 0
        %2978 = vmatmul.mubr.bf16.gmra.mrb[0].mxu0 %v2781
        %v2979 = vpop.f32.mrb[0].mxu0
        %v2980 = vadd.f32 %v2824, %v2979
        %v2981 = vpop.f32.mrb[0].mxu0
        %v2982 = vpop.f32.mrb[0].mxu0
        %v2983 = vadd.f32 %v2824, %v2982
        %v2984 = vpop.f32.mrb[0].mxu0
        %2985 = vmatprep.mubr.bf16.mxu0 0
        %2986 = vmatmul.mubr.bf16.gmra.mrb[0].mxu0 %v2782
        %v2987 = vpop.f32.mrb[0].mxu0
        %v2988 = vadd.f32 %v2824, %v2987
        %v2989 = vpop.f32.mrb[0].mxu0
        %v2990 = vpop.f32.mrb[0].mxu0
        %v2991 = vadd.f32 %v2824, %v2990
        %v2992 = vpop.f32.mrb[0].mxu0
        %2993 = vmatprep.mubr.bf16.mxu0 0
        %2994 = vmatmul.mubr.bf16.gmra.mrb[0].mxu0 %v2783
        %v2995 = vpop.f32.mrb[0].mxu0
        %v2996 = vadd.f32 %v2824, %v2995
        %v2997 = vpop.f32.mrb[0].mxu0
        %v2998 = vpop.f32.mrb[0].mxu0
        %v2999 = vadd.f32 %v2824, %v2998
        %v3000 = vpop.f32.mrb[0].mxu0
        %3001 = vmatprep.mubr.bf16.mxu0 0
        %3002 = vmatmul.mubr.bf16.gmra.mrb[0].mxu0 %v2784
        %v3003 = vpop.f32.mrb[0].mxu0
        %v3004 = vadd.f32 %v2824, %v3003
        %v3005 = vpop.f32.mrb[0].mxu0
        %v3006 = vpop.f32.mrb[0].mxu0
        %v3007 = vadd.f32 %v2824, %v3006
        %v3008 = vpop.f32.mrb[0].mxu0
        %3009 = vmatprep.mubr.bf16.mxu0 0
        %3010 = vmatmul.mubr.bf16.gmra.mrb[0].mxu0 %v2785
        %v3011 = vpop.f32.mrb[0].mxu0
        %v3012 = vadd.f32 %v2824, %v3011
        %v3013 = vpop.f32.mrb[0].mxu0
        %v3014 = vpop.f32.mrb[0].mxu0
        %v3015 = vadd.f32 %v2824, %v3014
        %v3016 = vpop.f32.mrb[0].mxu0
        %3017 = vmatprep.mubr.bf16.mxu0 0
        %3018 = vmatmul.mubr.bf16.gmra.mrb[0].mxu0 %v2786
        %v3019 = vpop.f32.mrb[0].mxu0
        %v3020 = vadd.f32 %v2824, %v3019
        %v3021 = vpop.f32.mrb[0].mxu0
        %v3022 = vpop.f32.mrb[0].mxu0
        %v3023 = vadd.f32 %v2824, %v3022
        %v3024 = vpop.f32.mrb[0].mxu0
        %3025 = vmatprep.mubr.bf16.mxu0 0
        %3026 = vmatmul.mubr.bf16.gmra.mrb[0].mxu0 %v2787
        %v3027 = vpop.f32.mrb[0].mxu0
        %v3028 = vadd.f32 %v2824, %v3027
        %v3029 = vpop.f32.mrb[0].mxu0
        %v3030 = vpop.f32.mrb[0].mxu0
        %v3031 = vadd.f32 %v2824, %v3030
        %v3032 = vpop.f32.mrb[0].mxu0
        %3033 = vmatprep.mubr.bf16.mxu0 0
        %3034 = vmatmul.mubr.bf16.gmra.mrb[0].mxu0 %v2788
        %v3035 = vpop.f32.mrb[0].mxu0
        %v3036 = vadd.f32 %v2824, %v3035
        %v3037 = vpop.f32.mrb[0].mxu0
        %v3038 = vpop.f32.mrb[0].mxu0
        %v3039 = vadd.f32 %v2824, %v3038
        %v3040 = vpop.f32.mrb[0].mxu0
        %3041 = vmatprep.mubr.bf16.mxu0 0
        %3042 = vmatmul.mubr.bf16.gmra.mrb[0].mxu0 %v2789
        %v3043 = vpop.f32.mrb[0].mxu0
        %v3044 = vadd.f32 %v2824, %v3043
        %v3045 = vpop.f32.mrb[0].mxu0
        %v3046 = vpop.f32.mrb[0].mxu0
        %v3047 = vadd.f32 %v2824, %v3046
        %v3048 = vpop.f32.mrb[0].mxu0
        %3049 = vmatprep.mubr.bf16.mxu0 0
        %3050 = vmatmul.mubr.bf16.gmra.mrb[0].mxu0 %v2790
        %v3051 = vpop.f32.mrb[0].mxu0
        %v3052 = vadd.f32 %v2824, %v3051
        %v3053 = vpop.f32.mrb[0].mxu0
        %v3054 = vpop.f32.mrb[0].mxu0
        %v3055 = vadd.f32 %v2824, %v3054
        %v3056 = vpop.f32.mrb[0].mxu0
        %3057 = vmatprep.mubr.bf16.mxu0 0
        %3058 = vmatmul.mubr.bf16.gmra.mrb[0].mxu0 %v2791
        %v3059 = vpop.f32.mrb[0].mxu0
        %v3060 = vadd.f32 %v2824, %v3059
        %v3061 = vpop.f32.mrb[0].mxu0
        %v3062 = vpop.f32.mrb[0].mxu0
        %v3063 = vadd.f32 %v2824, %v3062
        %v3064 = vpop.f32.mrb[0].mxu0
        %3065 = vmatprep.mubr.bf16.mxu0 0
        %3066 = vmatmul.mubr.bf16.gmra.mrb[0].mxu0 %v2792
        %v3067 = vpop.f32.mrb[0].mxu0
        %v3068 = vadd.f32 %v2824, %v3067
        %v3069 = vpop.f32.mrb[0].mxu0
        %v3070 = vpop.f32.mrb[0].mxu0
        %v3071 = vadd.f32 %v2824, %v3070
        %v3072 = vpop.f32.mrb[0].mxu0
        %3073 = vmatprep.mubr.bf16.mxu0 0
        %3074 = vmatmul.mubr.bf16.gmra.mrb[0].mxu0 %v2793
        %v3075 = vpop.f32.mrb[0].mxu0
        %v3076 = vadd.f32 %v2824, %v3075
        %v3077 = vpop.f32.mrb[0].mxu0
        %v3078 = vpop.f32.mrb[0].mxu0
        %v3079 = vadd.f32 %v2824, %v3078
        %v3080 = vpop.f32.mrb[0].mxu0
        %3081 = vmatprep.mubr.bf16.mxu0 0
        %3082 = vmatmul.mubr.bf16.gmra.mrb[0].mxu0 %v2794
        %v3083 = vpop.f32.mrb[0].mxu0
        %v3084 = vadd.f32 %v2824, %v3083
        %v3085 = vpop.f32.mrb[0].mxu0
        %v3086 = vpop.f32.mrb[0].mxu0
        %v3087 = vadd.f32 %v2824, %v3086
        %v3088 = vpop.f32.mrb[0].mxu0
        %3089 = vmatprep.mubr.bf16.mxu0 0
        %3090 = vmatmul.mubr.bf16.gmra.mrb[0].mxu0 %v2795
        %v3091 = vpop.f32.mrb[0].mxu0
        %v3092 = vadd.f32 %v2824, %v3091
        %v3093 = vpop.f32.mrb[0].mxu0
        %v3094 = vpop.f32.mrb[0].mxu0
        %v3095 = vadd.f32 %v2824, %v3094
        %v3096 = vpop.f32.mrb[0].mxu0
        %3097 = vmatprep.mubr.bf16.mxu0 0
        %3098 = vmatmul.mubr.bf16.gmra.mrb[0].mxu0 %v2796
        %v3099 = vpop.f32.mrb[0].mxu0
        %v3100 = vadd.f32 %v2824, %v3099
        %v3101 = vpop.f32.mrb[0].mxu0
        %v3102 = vpop.f32.mrb[0].mxu0
        %v3103 = vadd.f32 %v2824, %v3102
        %v3104 = vpop.f32.mrb[0].mxu0
        %3105 = vmatprep.mubr.bf16.mxu0 0
        %3106 = vmatmul.mubr.bf16.gmra.mrb[0].mxu0 %v2797
        %v3107 = vpop.f32.mrb[0].mxu0
        %v3108 = vadd.f32 %v2824, %v3107
        %v3109 = vpop.f32.mrb[0].mxu0
        %v3110 = vpop.f32.mrb[0].mxu0
        %v3111 = vadd.f32 %v2824, %v3110
        %v3112 = vpop.f32.mrb[0].mxu0
        %3113 = vmatprep.mubr.bf16.mxu0 0
        %3114 = vmatmul.mubr.bf16.gmra.mrb[0].mxu0 %v2798
        %v3115 = vpop.f32.mrb[0].mxu0
        %v3116 = vadd.f32 %v2824, %v3115
        %v3117 = vpop.f32.mrb[0].mxu0
        %v3118 = vpop.f32.mrb[0].mxu0
        %v3119 = vadd.f32 %v2824, %v3118
        %v3120 = vpop.f32.mrb[0].mxu0
        %3121 = vmatprep.mubr.bf16.mxu0 0
        %3122 = vmatmul.mubr.bf16.gmra.mrb[0].mxu0 %v2799
        %v3123 = vpop.f32.mrb[0].mxu0
        %v3124 = vadd.f32 %v2824, %v3123
        %v3125 = vpop.f32.mrb[0].mxu0
        %v3126 = vpop.f32.mrb[0].mxu0
        %v3127 = vadd.f32 %v2824, %v3126
        %v3128 = vpop.f32.mrb[0].mxu0
        %3129 = vmatprep.mubr.bf16.mxu0 0
        %3130 = vmatmul.mubr.bf16.gmra.mrb[0].mxu0 %v2800
        %v3131 = vpop.f32.mrb[0].mxu0
        %v3132 = vadd.f32 %v2824, %v3131
        %v3133 = vpop.f32.mrb[0].mxu0
        %v3134 = vpop.f32.mrb[0].mxu0
        %v3135 = vadd.f32 %v2824, %v3134
        %v3136 = vpop.f32.mrb[0].mxu0
        %3137 = vmatprep.mubr.bf16.mxu0 0
        %3138 = vmatmul.mubr.bf16.gmra.mrb[0].mxu0 %v2801
        %v3139 = vpop.f32.mrb[0].mxu0
        %v3140 = vadd.f32 %v2824, %v3139
        %v3141 = vpop.f32.mrb[0].mxu0
        %v3142 = vpop.f32.mrb[0].mxu0
        %v3143 = vadd.f32 %v2824, %v3142
        %v3144 = vpop.f32.mrb[0].mxu0
        %3145 = vmatprep.mubr.bf16.mxu0 0
        %3146 = vmatmul.mubr.bf16.gmra.mrb[0].mxu0 %v2802
        %v3147 = vpop.f32.mrb[0].mxu0
        %v3148 = vadd.f32 %v2824, %v3147
        %v3149 = vpop.f32.mrb[0].mxu0
        %v3150 = vpop.f32.mrb[0].mxu0
        %v3151 = vadd.f32 %v2824, %v3150
        %v3152 = vpop.f32.mrb[0].mxu0
        %3153 = vmatprep.mubr.bf16.mxu0 0
        %3154 = vmatmul.mubr.bf16.gmra.mrb[0].mxu0 %v2803
        %v3155 = vpop.f32.mrb[0].mxu0
        %v3156 = vadd.f32 %v2824, %v3155
        %v3157 = vpop.f32.mrb[0].mxu0
        %v3158 = vpop.f32.mrb[0].mxu0
        %v3159 = vpop.f32.mrb[0].mxu0
        %3160 = vdwg.mxu0
        %v3161 = vpack.c.bf16 %v2911, %v2908
        %v3162 = vpack.c.bf16 %v2919, %v2916
        %v3163 = vpack.c.bf16 %v2927, %v2924
        %v3164 = vpack.c.bf16 %v2935, %v2932
        %v3165 = vpack.c.bf16 %v2943, %v2940
        %v3166 = vpack.c.bf16 %v2951, %v2948
        %v3167 = vpack.c.bf16 %v2959, %v2956
        %v3168 = vpack.c.bf16 %v2967, %v2964
        %v3169 = vpack.c.bf16 %v2975, %v2972
        %v3170 = vpack.c.bf16 %v2983, %v2980
        %v3171 = vpack.c.bf16 %v2991, %v2988
        %v3172 = vpack.c.bf16 %v2999, %v2996
        %v3173 = vpack.c.bf16 %v3007, %v3004
        %v3174 = vpack.c.bf16 %v3015, %v3012
        %v3175 = vpack.c.bf16 %v3023, %v3020
        %v3176 = vpack.c.bf16 %v3031, %v3028
        %v3177 = vpack.c.bf16 %v3039, %v3036
        %v3178 = vpack.c.bf16 %v3047, %v3044
        %v3179 = vpack.c.bf16 %v3055, %v3052
        %v3180 = vpack.c.bf16 %v3063, %v3060
        %v3181 = vpack.c.bf16 %v3071, %v3068
        %v3182 = vpack.c.bf16 %v3079, %v3076
        %v3183 = vpack.c.bf16 %v3087, %v3084
        %v3184 = vpack.c.bf16 %v3095, %v3092
        %v3185 = vpack.c.bf16 %v3103, %v3100
        %v3186 = vpack.c.bf16 %v3111, %v3108
        %v3187 = vpack.c.bf16 %v3119, %v3116
        %v3188 = vpack.c.bf16 %v3127, %v3124
        %v3189 = vpack.c.bf16 %v3135, %v3132
        %v3190 = vpack.c.bf16 %v3143, %v3140
        %v3191 = vpack.c.bf16 %v3151, %v3148
        %v3192 = vpack.c.bf16 %v3156, %v3156
        %v3193 = vmul.bf16 %v3161, 1120420552
        %v3194 = vmul.bf16 %v3162, 1120420552
        %v3195 = vmul.bf16 %v3163, 1120420552
        %v3196 = vmul.bf16 %v3164, 1120420552
        %v3197 = vmul.bf16 %v3165, 1120420552
        %v3198 = vmul.bf16 %v3166, 1120420552
        %v3199 = vmul.bf16 %v3167, 1120420552
        %v3200 = vmul.bf16 %v3168, 1120420552
        %v3201 = vmul.bf16 %v3169, 1120420552
        %v3202 = vmul.bf16 %v3170, 1120420552
        %v3203 = vmul.bf16 %v3171, 1120420552
        %v3204 = vmul.bf16 %v3172, 1120420552
        %v3205 = vmul.bf16 %v3173, 1120420552
        %v3206 = vmul.bf16 %v3174, 1120420552
        %v3207 = vmul.bf16 %v3175, 1120420552
        %v3208 = vmul.bf16 %v3176, 1120420552
        %v3209 = vmul.bf16 %v3177, 1120420552
        %v3210 = vmul.bf16 %v3178, 1120420552
        %v3211 = vmul.bf16 %v3179, 1120420552
        %v3212 = vmul.bf16 %v3180, 1120420552
        %v3213 = vmul.bf16 %v3181, 1120420552
        %v3214 = vmul.bf16 %v3182, 1120420552
        %v3215 = vmul.bf16 %v3183, 1120420552
        %v3216 = vmul.bf16 %v3184, 1120420552
        %v3217 = vmul.bf16 %v3185, 1120420552
        %v3218 = vmul.bf16 %v3186, 1120420552
        %v3219 = vmul.bf16 %v3187, 1120420552
        %v3220 = vmul.bf16 %v3188, 1120420552
        %v3221 = vmul.bf16 %v3189, 1120420552
        %v3222 = vmul.bf16 %v3190, 1120420552
        %v3223 = vmul.bf16 %v3191, 1120420552
        %v3224 = vmul.bf16 %v3192, 1120420552
        %v3225 = vmin.bf16 %v3193, 1101021600
        %v3226 = vmin.bf16 %v3194, 1101021600
        %v3227 = vmin.bf16 %v3195, 1101021600
        %v3228 = vmin.bf16 %v3196, 1101021600
        %v3229 = vmin.bf16 %v3197, 1101021600
        %v3230 = vmin.bf16 %v3198, 1101021600
        %v3231 = vmin.bf16 %v3199, 1101021600
        %v3232 = vmin.bf16 %v3200, 1101021600
        %v3233 = vmin.bf16 %v3201, 1101021600
        %v3234 = vmin.bf16 %v3202, 1101021600
        %v3235 = vmin.bf16 %v3203, 1101021600
        %v3236 = vmin.bf16 %v3204, 1101021600
        %v3237 = vmin.bf16 %v3205, 1101021600
        %v3238 = vmin.bf16 %v3206, 1101021600
        %v3239 = vmin.bf16 %v3207, 1101021600
        %v3240 = vmin.bf16 %v3208, 1101021600
        %v3241 = vmin.bf16 %v3209, 1101021600
        %v3242 = vmin.bf16 %v3210, 1101021600
        %v3243 = vmin.bf16 %v3211, 1101021600
        %v3244 = vmin.bf16 %v3212, 1101021600
        %v3245 = vmin.bf16 %v3213, 1101021600
        %v3246 = vmin.bf16 %v3214, 1101021600
        %v3247 = vmin.bf16 %v3215, 1101021600
        %v3248 = vmin.bf16 %v3216, 1101021600
        %v3249 = vmin.bf16 %v3217, 1101021600
        %v3250 = vmin.bf16 %v3218, 1101021600
        %v3251 = vmin.bf16 %v3219, 1101021600
        %v3252 = vmin.bf16 %v3220, 1101021600
        %v3253 = vmin.bf16 %v3221, 1101021600
        %v3254 = vmin.bf16 %v3222, 1101021600
        %v3255 = vmin.bf16 %v3223, 1101021600
        %v3256 = vmin.bf16 %v3224, 1101021600
        %v3258 = vmul.bf16 %v3225, 1069105081
        %v3259 = vpow.bf16.pop %v3258
        %v3261 = vmul.bf16 %v3226, 1069105081
        %v3262 = vpow.bf16.pop %v3261
        %v3264 = vmul.bf16 %v3227, 1069105081
        %v3265 = vpow.bf16.pop %v3264
        %v3267 = vmul.bf16 %v3228, 1069105081
        %v3268 = vpow.bf16.pop %v3267
        %v3270 = vmul.bf16 %v3229, 1069105081
        %v3271 = vpow.bf16.pop %v3270
        %v3273 = vmul.bf16 %v3230, 1069105081
        %v3274 = vpow.bf16.pop %v3273
        %v3276 = vmul.bf16 %v3231, 1069105081
        %v3277 = vpow.bf16.pop %v3276
        %v3279 = vmul.bf16 %v3232, 1069105081
        %v3280 = vpow.bf16.pop %v3279
        %v3282 = vmul.bf16 %v3233, 1069105081
        %v3283 = vpow.bf16.pop %v3282
        %v3285 = vmul.bf16 %v3234, 1069105081
        %v3286 = vpow.bf16.pop %v3285
        %v3288 = vmul.bf16 %v3235, 1069105081
        %v3289 = vpow.bf16.pop %v3288
        %v3291 = vmul.bf16 %v3236, 1069105081
        %v3292 = vpow.bf16.pop %v3291
        %v3294 = vmul.bf16 %v3237, 1069105081
        %v3295 = vpow.bf16.pop %v3294
        %v3297 = vmul.bf16 %v3238, 1069105081
        %v3298 = vpow.bf16.pop %v3297
        %v3300 = vmul.bf16 %v3239, 1069105081
        %v3301 = vpow.bf16.pop %v3300
        %v3303 = vmul.bf16 %v3240, 1069105081
        %v3304 = vpow.bf16.pop %v3303
        %v3306 = vmul.bf16 %v3241, 1069105081
        %v3307 = vpow.bf16.pop %v3306
        %v3309 = vmul.bf16 %v3242, 1069105081
        %v3310 = vpow.bf16.pop %v3309
        %v3312 = vmul.bf16 %v3243, 1069105081
        %v3313 = vpow.bf16.pop %v3312
        %v3315 = vmul.bf16 %v3244, 1069105081
        %v3316 = vpow.bf16.pop %v3315
        %v3318 = vmul.bf16 %v3245, 1069105081
        %v3319 = vpow.bf16.pop %v3318
        %v3321 = vmul.bf16 %v3246, 1069105081
        %v3322 = vpow.bf16.pop %v3321
        %v3324 = vmul.bf16 %v3247, 1069105081
        %v3325 = vpow.bf16.pop %v3324
        %v3327 = vmul.bf16 %v3248, 1069105081
        %v3328 = vpow.bf16.pop %v3327
        %v3330 = vmul.bf16 %v3249, 1069105081
        %v3331 = vpow.bf16.pop %v3330
        %v3333 = vmul.bf16 %v3250, 1069105081
        %v3334 = vpow.bf16.pop %v3333
        %v3336 = vmul.bf16 %v3251, 1069105081
        %v3337 = vpow.bf16.pop %v3336
        %v3339 = vmul.bf16 %v3252, 1069105081
        %v3340 = vpow.bf16.pop %v3339
        %v3342 = vmul.bf16 %v3253, 1069105081
        %v3343 = vpow.bf16.pop %v3342
        %v3345 = vmul.bf16 %v3254, 1069105081
        %v3346 = vpow.bf16.pop %v3345
        %v3348 = vmul.bf16 %v3255, 1069105081
        %v3349 = vpow.bf16.pop %v3348
        %v3351 = vmul.bf16 %v3256, 1069105081
        %v3352 = vpow.bf16.pop %v3351
        %v3353 = vadd.bf16 %v3259, 1065369472
        %v3354 = vadd.bf16 %v3262, 1065369472
        %v3355 = vadd.bf16 %v3265, 1065369472
        %v3356 = vadd.bf16 %v3268, 1065369472
        %v3357 = vadd.bf16 %v3271, 1065369472
        %v3358 = vadd.bf16 %v3274, 1065369472
        %v3359 = vadd.bf16 %v3277, 1065369472
        %v3360 = vadd.bf16 %v3280, 1065369472
        %v3361 = vadd.bf16 %v3283, 1065369472
        %v3362 = vadd.bf16 %v3286, 1065369472
        %v3363 = vadd.bf16 %v3289, 1065369472
        %v3364 = vadd.bf16 %v3292, 1065369472
        %v3365 = vadd.bf16 %v3295, 1065369472
        %v3366 = vadd.bf16 %v3298, 1065369472
        %v3367 = vadd.bf16 %v3301, 1065369472
        %v3368 = vadd.bf16 %v3304, 1065369472
        %v3369 = vadd.bf16 %v3307, 1065369472
        %v3370 = vadd.bf16 %v3310, 1065369472
        %v3371 = vadd.bf16 %v3313, 1065369472
        %v3372 = vadd.bf16 %v3316, 1065369472
        %v3373 = vadd.bf16 %v3319, 1065369472
        %v3374 = vadd.bf16 %v3322, 1065369472
        %v3375 = vadd.bf16 %v3325, 1065369472
        %v3376 = vadd.bf16 %v3328, 1065369472
        %v3377 = vadd.bf16 %v3331, 1065369472
        %v3378 = vadd.bf16 %v3334, 1065369472
        %v3379 = vadd.bf16 %v3337, 1065369472
        %v3380 = vadd.bf16 %v3340, 1065369472
        %v3381 = vadd.bf16 %v3343, 1065369472
        %v3382 = vadd.bf16 %v3346, 1065369472
        %v3383 = vadd.bf16 %v3349, 1065369472
        %v3384 = vadd.bf16 %v3352, 1065369472
        %v3385 = vlog2.bf16.pop %v3353
        %v3387 = vmul.bf16 %v3385, 1060192049
        %v3388 = vlog2.bf16.pop %v3354
        %v3390 = vmul.bf16 %v3388, 1060192049
        %v3391 = vlog2.bf16.pop %v3355
        %v3393 = vmul.bf16 %v3391, 1060192049
        %v3394 = vlog2.bf16.pop %v3356
        %v3396 = vmul.bf16 %v3394, 1060192049
        %v3397 = vlog2.bf16.pop %v3357
        %v3399 = vmul.bf16 %v3397, 1060192049
        %v3400 = vlog2.bf16.pop %v3358
        %v3402 = vmul.bf16 %v3400, 1060192049
        %v3403 = vlog2.bf16.pop %v3359
        %v3405 = vmul.bf16 %v3403, 1060192049
        %v3406 = vlog2.bf16.pop %v3360
        %v3408 = vmul.bf16 %v3406, 1060192049
        %v3409 = vlog2.bf16.pop %v3361
        %v3411 = vmul.bf16 %v3409, 1060192049
        %v3412 = vlog2.bf16.pop %v3362
        %v3414 = vmul.bf16 %v3412, 1060192049
        %v3415 = vlog2.bf16.pop %v3363
        %v3417 = vmul.bf16 %v3415, 1060192049
        %v3418 = vlog2.bf16.pop %v3364
        %v3420 = vmul.bf16 %v3418, 1060192049
        %v3421 = vlog2.bf16.pop %v3365
        %v3423 = vmul.bf16 %v3421, 1060192049
        %v3424 = vlog2.bf16.pop %v3366
        %v3426 = vmul.bf16 %v3424, 1060192049
        %v3427 = vlog2.bf16.pop %v3367
        %v3429 = vmul.bf16 %v3427, 1060192049
        %v3430 = vlog2.bf16.pop %v3368
        %v3432 = vmul.bf16 %v3430, 1060192049
        %v3433 = vlog2.bf16.pop %v3369
        %v3435 = vmul.bf16 %v3433, 1060192049
        %v3436 = vlog2.bf16.pop %v3370
        %v3438 = vmul.bf16 %v3436, 1060192049
        %v3439 = vlog2.bf16.pop %v3371
        %v3441 = vmul.bf16 %v3439, 1060192049
        %v3442 = vlog2.bf16.pop %v3372
        %v3444 = vmul.bf16 %v3442, 1060192049
        %v3445 = vlog2.bf16.pop %v3373
        %v3447 = vmul.bf16 %v3445, 1060192049
        %v3448 = vlog2.bf16.pop %v3374
        %v3450 = vmul.bf16 %v3448, 1060192049
        %v3451 = vlog2.bf16.pop %v3375
        %v3453 = vmul.bf16 %v3451, 1060192049
        %v3454 = vlog2.bf16.pop %v3376
        %v3456 = vmul.bf16 %v3454, 1060192049
        %v3457 = vlog2.bf16.pop %v3377
        %v3459 = vmul.bf16 %v3457, 1060192049
        %v3460 = vlog2.bf16.pop %v3378
        %v3462 = vmul.bf16 %v3460, 1060192049
        %v3463 = vlog2.bf16.pop %v3379
        %v3465 = vmul.bf16 %v3463, 1060192049
        %v3466 = vlog2.bf16.pop %v3380
        %v3468 = vmul.bf16 %v3466, 1060192049
        %v3469 = vlog2.bf16.pop %v3381
        %v3471 = vmul.bf16 %v3469, 1060192049
        %v3472 = vlog2.bf16.pop %v3382
        %v3474 = vmul.bf16 %v3472, 1060192049
        %v3475 = vlog2.bf16.pop %v3383
        %v3477 = vmul.bf16 %v3475, 1060192049
        %v3478 = vlog2.bf16.pop %v3384
        %v3480 = vmul.bf16 %v3478, 1060192049
        %v3481 = vmul.bf16 %v3387, 1009007652
        %v3482 = vmul.bf16 %v3390, 1009007652
        %v3483 = vmul.bf16 %v3393, 1009007652
        %v3484 = vmul.bf16 %v3396, 1009007652
        %v3485 = vmul.bf16 %v3399, 1009007652
        %v3486 = vmul.bf16 %v3402, 1009007652
        %v3487 = vmul.bf16 %v3405, 1009007652
        %v3488 = vmul.bf16 %v3408, 1009007652
        %v3489 = vmul.bf16 %v3411, 1009007652
        %v3490 = vmul.bf16 %v3414, 1009007652
        %v3491 = vmul.bf16 %v3417, 1009007652
        %v3492 = vmul.bf16 %v3420, 1009007652
        %v3493 = vmul.bf16 %v3423, 1009007652
        %v3494 = vmul.bf16 %v3426, 1009007652
        %v3495 = vmul.bf16 %v3429, 1009007652
        %v3496 = vmul.bf16 %v3432, 1009007652
        %v3497 = vmul.bf16 %v3435, 1009007652
        %v3498 = vmul.bf16 %v3438, 1009007652
        %v3499 = vmul.bf16 %v3441, 1009007652
        %v3500 = vmul.bf16 %v3444, 1009007652
        %v3501 = vmul.bf16 %v3447, 1009007652
        %v3502 = vmul.bf16 %v3450, 1009007652
        %v3503 = vmul.bf16 %v3453, 1009007652
        %v3504 = vmul.bf16 %v3456, 1009007652
        %v3505 = vmul.bf16 %v3459, 1009007652
        %v3506 = vmul.bf16 %v3462, 1009007652
        %v3507 = vmul.bf16 %v3465, 1009007652
        %v3508 = vmul.bf16 %v3468, 1009007652
        %v3509 = vmul.bf16 %v3471, 1009007652
        %v3510 = vmul.bf16 %v3474, 1009007652
        %v3511 = vmul.bf16 %v3477, 1009007652
        %v3512 = vmul.bf16 %v3480, 1009007652
        %vm3513 = vcmp.gt.bf16.partialorder %v3193, 1101021600
        %vm3514 = vcmp.gt.bf16.partialorder %v3194, 1101021600
        %vm3515 = vcmp.gt.bf16.partialorder %v3195, 1101021600
        %vm3516 = vcmp.gt.bf16.partialorder %v3196, 1101021600
        %vm3517 = vcmp.gt.bf16.partialorder %v3197, 1101021600
        %vm3518 = vcmp.gt.bf16.partialorder %v3198, 1101021600
        %vm3519 = vcmp.gt.bf16.partialorder %v3199, 1101021600
        %vm3520 = vcmp.gt.bf16.partialorder %v3200, 1101021600
        %vm3521 = vcmp.gt.bf16.partialorder %v3201, 1101021600
        %vm3522 = vcmp.gt.bf16.partialorder %v3202, 1101021600
        %vm3523 = vcmp.gt.bf16.partialorder %v3203, 1101021600
        %vm3524 = vcmp.gt.bf16.partialorder %v3204, 1101021600
        %vm3525 = vcmp.gt.bf16.partialorder %v3205, 1101021600
        %vm3526 = vcmp.gt.bf16.partialorder %v3206, 1101021600
        %vm3527 = vcmp.gt.bf16.partialorder %v3207, 1101021600
        %vm3528 = vcmp.gt.bf16.partialorder %v3208, 1101021600
        %vm3529 = vcmp.gt.bf16.partialorder %v3209, 1101021600
        %vm3530 = vcmp.gt.bf16.partialorder %v3210, 1101021600
        %vm3531 = vcmp.gt.bf16.partialorder %v3211, 1101021600
        %vm3532 = vcmp.gt.bf16.partialorder %v3212, 1101021600
        %vm3533 = vcmp.gt.bf16.partialorder %v3213, 1101021600
        %vm3534 = vcmp.gt.bf16.partialorder %v3214, 1101021600
        %vm3535 = vcmp.gt.bf16.partialorder %v3215, 1101021600
        %vm3536 = vcmp.gt.bf16.partialorder %v3216, 1101021600
        %vm3537 = vcmp.gt.bf16.partialorder %v3217, 1101021600
        %vm3538 = vcmp.gt.bf16.partialorder %v3218, 1101021600
        %vm3539 = vcmp.gt.bf16.partialorder %v3219, 1101021600
        %vm3540 = vcmp.gt.bf16.partialorder %v3220, 1101021600
        %vm3541 = vcmp.gt.bf16.partialorder %v3221, 1101021600
        %vm3542 = vcmp.gt.bf16.partialorder %v3222, 1101021600
        %vm3543 = vcmp.gt.bf16.partialorder %v3223, 1101021600
        %vm3544 = vcmp.gt.bf16.partialorder %v3224, 1101021600
        %v3545 = vsel %vm3513, %v3161, %v3481
        %v3546 = vsel %vm3514, %v3162, %v3482
        %v3547 = vsel %vm3515, %v3163, %v3483
        %v3548 = vsel %vm3516, %v3164, %v3484
        %v3549 = vsel %vm3517, %v3165, %v3485
        %v3550 = vsel %vm3518, %v3166, %v3486
        %v3551 = vsel %vm3519, %v3167, %v3487
        %v3552 = vsel %vm3520, %v3168, %v3488
        %v3553 = vsel %vm3521, %v3169, %v3489
        %v3554 = vsel %vm3522, %v3170, %v3490
        %v3555 = vsel %vm3523, %v3171, %v3491
        %v3556 = vsel %vm3524, %v3172, %v3492
        %v3557 = vsel %vm3525, %v3173, %v3493
        %v3558 = vsel %vm3526, %v3174, %v3494
        %v3559 = vsel %vm3527, %v3175, %v3495
        %v3560 = vsel %vm3528, %v3176, %v3496
        %v3561 = vsel %vm3529, %v3177, %v3497
        %v3562 = vsel %vm3530, %v3178, %v3498
        %v3563 = vsel %vm3531, %v3179, %v3499
        %v3564 = vsel %vm3532, %v3180, %v3500
        %v3565 = vsel %vm3533, %v3181, %v3501
        %v3566 = vsel %vm3534, %v3182, %v3502
        %v3567 = vsel %vm3535, %v3183, %v3503
        %v3568 = vsel %vm3536, %v3184, %v3504
        %v3569 = vsel %vm3537, %v3185, %v3505
        %v3570 = vsel %vm3538, %v3186, %v3506
        %v3571 = vsel %vm3539, %v3187, %v3507
        %v3572 = vsel %vm3540, %v3188, %v3508
        %v3573 = vsel %vm3541, %v3189, %v3509
        %v3574 = vsel %vm3542, %v3190, %v3510
        %v3575 = vsel %vm3543, %v3191, %v3511
        %v3576 = vsel %vm3544, %v3192, %v3512
        %s3577 = scalar_lea.vmem %s2, 192
        %v3578 = vld [vmem:[%s3577] sm:$0xf]
        %v3579 = vld [vmem:[%s3577 + $0x4] sm:$0xf]
        %v3580 = vld [vmem:[%s3577 + $0x8] sm:$0xf]
        %v3581 = vld [vmem:[%s3577 + $0xc] sm:$0xf]
        %v3582 = vld [vmem:[%s3577 + $0x10] sm:$0xf]
        %v3583 = vld [vmem:[%s3577 + $0x14] sm:$0xf]
        %v3584 = vld [vmem:[%s3577 + $0x18] sm:$0xf]
        %v3585 = vld [vmem:[%s3577 + $0x1c] sm:$0xf]
        %v3586 = vld [vmem:[%s3577 + $0x20] sm:$0xf]
        %v3587 = vld [vmem:[%s3577 + $0x24] sm:$0xf]
        %v3588 = vld [vmem:[%s3577 + $0x28] sm:$0xf]
        %v3589 = vld [vmem:[%s3577 + $0x2c] sm:$0xf]
        %v3590 = vld [vmem:[%s3577 + $0x30] sm:$0xf]
        %v3591 = vld [vmem:[%s3577 + $0x34] sm:$0xf]
        %v3592 = vld [vmem:[%s3577 + $0x38] sm:$0xf]
        %v3593 = vld [vmem:[%s3577 + $0x3c] sm:$0xf]
        %s3594 = scalar_lea.vmem %s1, 8
        %v3595 = vld [vmem:[%s3594] sm:$0xff]
        %3596 = vmatprep.subr.mxu0 0.0
        %3597 = vmatpush1.msra.mxu0 %v3595
        %3598 = vmatprep.subr.mxu0 0.0
        %3599 = vmatpush1.msra.mxu0 0.0
        %3600 = vmatprep.subr.mxu0 0.0
        %3601 = vmatpush1.msra.mxu0 0.0
        %3602 = vmatprep.subr.mxu0 0.0
        %3603 = vmatpush1.msra.mxu0 0.0
        %3604 = vmatprep.subr.mxu0 0.0
        %3605 = vmatpush1.msra.mxu0 0.0
        %3606 = vmatprep.subr.mxu0 0.0
        %3607 = vmatpush1.msra.mxu0 0.0
        %3608 = vmatprep.subr.mxu0 0.0
        %3609 = vmatpush1.msra.mxu0 0.0
        %3610 = vmatprep.subr.mxu0 0.0
        %3611 = vmatpush1.msra.mxu0 0.0
        %3612 = vmatprep.subr.mxu0 0.0
        %3613 = vmatpush1.msra.mxu0 0.0
        %3614 = vmatprep.subr.mxu0 0.0
        %3615 = vmatpush1.msra.mxu0 0.0
        %3616 = vmatprep.subr.mxu0 0.0
        %3617 = vmatpush1.msra.mxu0 0.0
        %3618 = vmatprep.subr.mxu0 0.0
        %3619 = vmatpush1.msra.mxu0 0.0
        %3620 = vmatprep.subr.mxu0 0.0
        %3621 = vmatpush1.msra.mxu0 0.0
        %3622 = vmatprep.subr.mxu0 0.0
        %3623 = vmatpush1.msra.mxu0 0.0
        %3624 = vmatprep.subr.mxu0 0.0
        %3625 = vmatpush1.msra.mxu0 0.0
        %3626 = vmatprep.subr.mxu0 0.0
        %3627 = vmatpush1.msra.mxu0 0.0
        %3628 = vmatprep.subr.mxu0 0.0
        %3629 = vmatpush1.msra.mxu0 0.0
        %3630 = vmatprep.subr.mxu0 0.0
        %3631 = vmatpush1.msra.mxu0 0.0
        %3632 = vmatprep.subr.mxu0 0.0
        %3633 = vmatpush1.msra.mxu0 0.0
        %3634 = vmatprep.subr.mxu0 0.0
        %3635 = vmatpush1.msra.mxu0 0.0
        %3636 = vmatprep.subr.mxu0 0.0
        %3637 = vmatpush1.msra.mxu0 0.0
        %3638 = vmatprep.subr.mxu0 0.0
        %3639 = vmatpush1.msra.mxu0 0.0
        %3640 = vmatprep.subr.mxu0 0.0
        %3641 = vmatpush1.msra.mxu0 0.0
        %3642 = vmatprep.subr.mxu0 0.0
        %3643 = vmatpush1.msra.mxu0 0.0
        %3644 = vmatprep.subr.mxu0 0.0
        %3645 = vmatpush1.msra.mxu0 0.0
        %3646 = vmatprep.subr.mxu0 0.0
        %3647 = vmatpush1.msra.mxu0 0.0
        %3648 = vmatprep.subr.mxu0 0.0
        %3649 = vmatpush1.msra.mxu0 0.0
        %3650 = vmatprep.subr.mxu0 0.0
        %3651 = vmatpush1.msra.mxu0 0.0
        %3652 = vmatprep.subr.mxu0 0.0
        %3653 = vmatpush1.msra.mxu0 0.0
        %3654 = vmatprep.subr.mxu0 0.0
        %3655 = vmatpush1.msra.mxu0 0.0
        %3656 = vmatprep.subr.mxu0 0.0
        %3657 = vmatpush1.msra.mxu0 0.0
        %3658 = vmatprep.subr.mxu0 0.0
        %3659 = vmatpush1.msra.mxu0 0.0
        %3660 = vmatprep.mubr.f32.mxu0 0.0
        %3661 = vmatmul.mubr.f32.gmra.mrb[0].mxu0 %v275
        %v3662 = vpop.f32.mrb[0].mxu0
        %v3663 = vadd.f32 0.0, %v3662
        %v3664 = vpop.f32.mrb[0].mxu0
        %3665 = vmatprep.mubr.f32.mxu0 0.0
        %3666 = vmatmul.mubr.f32.gmra.mrb[0].mxu0 %v278
        %v3667 = vpop.f32.mrb[0].mxu0
        %v3668 = vadd.f32 0.0, %v3667
        %v3669 = vpop.f32.mrb[0].mxu0
        %3670 = vmatprep.mubr.f32.mxu0 0.0
        %3671 = vmatmul.mubr.f32.gmra.mrb[0].mxu0 %v281
        %v3672 = vpop.f32.mrb[0].mxu0
        %v3673 = vadd.f32 0.0, %v3672
        %v3674 = vpop.f32.mrb[0].mxu0
        %3675 = vmatprep.mubr.f32.mxu0 0.0
        %3676 = vmatmul.mubr.f32.gmra.mrb[0].mxu0 %v284
        %v3677 = vpop.f32.mrb[0].mxu0
        %v3678 = vadd.f32 0.0, %v3677
        %v3679 = vpop.f32.mrb[0].mxu0
        %3680 = vmatprep.mubr.f32.mxu0 0.0
        %3681 = vmatmul.mubr.f32.gmra.mrb[0].mxu0 %v287
        %v3682 = vpop.f32.mrb[0].mxu0
        %v3683 = vadd.f32 0.0, %v3682
        %v3684 = vpop.f32.mrb[0].mxu0
        %3685 = vmatprep.mubr.f32.mxu0 0.0
        %3686 = vmatmul.mubr.f32.gmra.mrb[0].mxu0 %v290
        %v3687 = vpop.f32.mrb[0].mxu0
        %v3688 = vadd.f32 0.0, %v3687
        %v3689 = vpop.f32.mrb[0].mxu0
        %3690 = vmatprep.mubr.f32.mxu0 0.0
        %3691 = vmatmul.mubr.f32.gmra.mrb[0].mxu0 %v293
        %v3692 = vpop.f32.mrb[0].mxu0
        %v3693 = vadd.f32 0.0, %v3692
        %v3694 = vpop.f32.mrb[0].mxu0
        %3695 = vmatprep.mubr.f32.mxu0 0.0
        %3696 = vmatmul.mubr.f32.gmra.mrb[0].mxu0 %v296
        %v3697 = vpop.f32.mrb[0].mxu0
        %v3698 = vadd.f32 0.0, %v3697
        %v3699 = vpop.f32.mrb[0].mxu0
        %3700 = vmatprep.mubr.f32.mxu0 0.0
        %3701 = vmatmul.mubr.f32.gmra.mrb[0].mxu0 %v299
        %v3702 = vpop.f32.mrb[0].mxu0
        %v3703 = vadd.f32 0.0, %v3702
        %v3704 = vpop.f32.mrb[0].mxu0
        %3705 = vmatprep.mubr.f32.mxu0 0.0
        %3706 = vmatmul.mubr.f32.gmra.mrb[0].mxu0 %v302
        %v3707 = vpop.f32.mrb[0].mxu0
        %v3708 = vadd.f32 0.0, %v3707
        %v3709 = vpop.f32.mrb[0].mxu0
        %3710 = vmatprep.mubr.f32.mxu0 0.0
        %3711 = vmatmul.mubr.f32.gmra.mrb[0].mxu0 %v305
        %v3712 = vpop.f32.mrb[0].mxu0
        %v3713 = vadd.f32 0.0, %v3712
        %v3714 = vpop.f32.mrb[0].mxu0
        %3715 = vmatprep.mubr.f32.mxu0 0.0
        %3716 = vmatmul.mubr.f32.gmra.mrb[0].mxu0 %v308
        %v3717 = vpop.f32.mrb[0].mxu0
        %v3718 = vadd.f32 0.0, %v3717
        %v3719 = vpop.f32.mrb[0].mxu0
        %3720 = vmatprep.mubr.f32.mxu0 0.0
        %3721 = vmatmul.mubr.f32.gmra.mrb[0].mxu0 %v311
        %v3722 = vpop.f32.mrb[0].mxu0
        %v3723 = vadd.f32 0.0, %v3722
        %v3724 = vpop.f32.mrb[0].mxu0
        %3725 = vmatprep.mubr.f32.mxu0 0.0
        %3726 = vmatmul.mubr.f32.gmra.mrb[0].mxu0 %v314
        %v3727 = vpop.f32.mrb[0].mxu0
        %v3728 = vadd.f32 0.0, %v3727
        %v3729 = vpop.f32.mrb[0].mxu0
        %3730 = vmatprep.mubr.f32.mxu0 0.0
        %3731 = vmatmul.mubr.f32.gmra.mrb[0].mxu0 %v317
        %v3732 = vpop.f32.mrb[0].mxu0
        %v3733 = vadd.f32 0.0, %v3732
        %v3734 = vpop.f32.mrb[0].mxu0
        %3735 = vmatprep.mubr.f32.mxu0 0.0
        %3736 = vmatmul.mubr.f32.gmra.mrb[0].mxu0 %v320
        %v3737 = vpop.f32.mrb[0].mxu0
        %v3738 = vadd.f32 0.0, %v3737
        %v3739 = vpop.f32.mrb[0].mxu0
        %3740 = vmatprep.mubr.f32.mxu0 0.0
        %3741 = vmatmul.mubr.f32.gmra.mrb[0].mxu0 %v323
        %v3742 = vpop.f32.mrb[0].mxu0
        %v3743 = vadd.f32 0.0, %v3742
        %v3744 = vpop.f32.mrb[0].mxu0
        %3745 = vmatprep.mubr.f32.mxu0 0.0
        %3746 = vmatmul.mubr.f32.gmra.mrb[0].mxu0 %v326
        %v3747 = vpop.f32.mrb[0].mxu0
        %v3748 = vadd.f32 0.0, %v3747
        %v3749 = vpop.f32.mrb[0].mxu0
        %3750 = vmatprep.mubr.f32.mxu0 0.0
        %3751 = vmatmul.mubr.f32.gmra.mrb[0].mxu0 %v329
        %v3752 = vpop.f32.mrb[0].mxu0
        %v3753 = vadd.f32 0.0, %v3752
        %v3754 = vpop.f32.mrb[0].mxu0
        %3755 = vmatprep.mubr.f32.mxu0 0.0
        %3756 = vmatmul.mubr.f32.gmra.mrb[0].mxu0 %v332
        %v3757 = vpop.f32.mrb[0].mxu0
        %v3758 = vadd.f32 0.0, %v3757
        %v3759 = vpop.f32.mrb[0].mxu0
        %3760 = vmatprep.mubr.f32.mxu0 0.0
        %3761 = vmatmul.mubr.f32.gmra.mrb[0].mxu0 %v335
        %v3762 = vpop.f32.mrb[0].mxu0
        %v3763 = vadd.f32 0.0, %v3762
        %v3764 = vpop.f32.mrb[0].mxu0
        %3765 = vmatprep.mubr.f32.mxu0 0.0
        %3766 = vmatmul.mubr.f32.gmra.mrb[0].mxu0 %v338
        %v3767 = vpop.f32.mrb[0].mxu0
        %v3768 = vadd.f32 0.0, %v3767
        %v3769 = vpop.f32.mrb[0].mxu0
        %3770 = vmatprep.mubr.f32.mxu0 0.0
        %3771 = vmatmul.mubr.f32.gmra.mrb[0].mxu0 %v341
        %v3772 = vpop.f32.mrb[0].mxu0
        %v3773 = vadd.f32 0.0, %v3772
        %v3774 = vpop.f32.mrb[0].mxu0
        %3775 = vmatprep.mubr.f32.mxu0 0.0
        %3776 = vmatmul.mubr.f32.gmra.mrb[0].mxu0 %v344
        %v3777 = vpop.f32.mrb[0].mxu0
        %v3778 = vadd.f32 0.0, %v3777
        %v3779 = vpop.f32.mrb[0].mxu0
        %3780 = vmatprep.mubr.f32.mxu0 0.0
        %3781 = vmatmul.mubr.f32.gmra.mrb[0].mxu0 %v347
        %v3782 = vpop.f32.mrb[0].mxu0
        %v3783 = vadd.f32 0.0, %v3782
        %v3784 = vpop.f32.mrb[0].mxu0
        %3785 = vmatprep.mubr.f32.mxu0 0.0
        %3786 = vmatmul.mubr.f32.gmra.mrb[0].mxu0 %v350
        %v3787 = vpop.f32.mrb[0].mxu0
        %v3788 = vadd.f32 0.0, %v3787
        %v3789 = vpop.f32.mrb[0].mxu0
        %3790 = vmatprep.mubr.f32.mxu0 0.0
        %3791 = vmatmul.mubr.f32.gmra.mrb[0].mxu0 %v353
        %v3792 = vpop.f32.mrb[0].mxu0
        %v3793 = vadd.f32 0.0, %v3792
        %v3794 = vpop.f32.mrb[0].mxu0
        %3795 = vmatprep.mubr.f32.mxu0 0.0
        %3796 = vmatmul.mubr.f32.gmra.mrb[0].mxu0 %v356
        %v3797 = vpop.f32.mrb[0].mxu0
        %v3798 = vadd.f32 0.0, %v3797
        %v3799 = vpop.f32.mrb[0].mxu0
        %3800 = vmatprep.mubr.f32.mxu0 0.0
        %3801 = vmatmul.mubr.f32.gmra.mrb[0].mxu0 %v359
        %v3802 = vpop.f32.mrb[0].mxu0
        %v3803 = vadd.f32 0.0, %v3802
        %v3804 = vpop.f32.mrb[0].mxu0
        %3805 = vmatprep.mubr.f32.mxu0 0.0
        %3806 = vmatmul.mubr.f32.gmra.mrb[0].mxu0 %v362
        %v3807 = vpop.f32.mrb[0].mxu0
        %v3808 = vadd.f32 0.0, %v3807
        %v3809 = vpop.f32.mrb[0].mxu0
        %3810 = vmatprep.mubr.f32.mxu0 0.0
        %3811 = vmatmul.mubr.f32.gmra.mrb[0].mxu0 %v365
        %v3812 = vpop.f32.mrb[0].mxu0
        %v3813 = vadd.f32 0.0, %v3812
        %v3814 = vpop.f32.mrb[0].mxu0
        %3815 = vmatprep.mubr.f32.mxu0 0.0
        %3816 = vmatmul.mubr.f32.gmra.mrb[0].mxu0 %v368
        %v3817 = vpop.f32.mrb[0].mxu0
        %v3818 = vadd.f32 0.0, %v3817
        %v3819 = vpop.f32.mrb[0].mxu0
        %3820 = vmatprep.mubr.f32.mxu0 0.0
        %3821 = vmatmul.mubr.f32.gmra.mrb[0].mxu0 %v371
        %v3822 = vpop.f32.mrb[0].mxu0
        %v3823 = vadd.f32 0.0, %v3822
        %v3824 = vpop.f32.mrb[0].mxu0
        %3825 = vmatprep.mubr.f32.mxu0 0.0
        %3826 = vmatmul.mubr.f32.gmra.mrb[0].mxu0 %v374
        %v3827 = vpop.f32.mrb[0].mxu0
        %v3828 = vadd.f32 0.0, %v3827
        %v3829 = vpop.f32.mrb[0].mxu0
        %3830 = vmatprep.mubr.f32.mxu0 0.0
        %3831 = vmatmul.mubr.f32.gmra.mrb[0].mxu0 %v377
        %v3832 = vpop.f32.mrb[0].mxu0
        %v3833 = vadd.f32 0.0, %v3832
        %v3834 = vpop.f32.mrb[0].mxu0
        %3835 = vmatprep.mubr.f32.mxu0 0.0
        %3836 = vmatmul.mubr.f32.gmra.mrb[0].mxu0 %v380
        %v3837 = vpop.f32.mrb[0].mxu0
        %v3838 = vadd.f32 0.0, %v3837
        %v3839 = vpop.f32.mrb[0].mxu0
        %3840 = vmatprep.mubr.f32.mxu0 0.0
        %3841 = vmatmul.mubr.f32.gmra.mrb[0].mxu0 %v383
        %v3842 = vpop.f32.mrb[0].mxu0
        %v3843 = vadd.f32 0.0, %v3842
        %v3844 = vpop.f32.mrb[0].mxu0
        %3845 = vmatprep.mubr.f32.mxu0 0.0
        %3846 = vmatmul.mubr.f32.gmra.mrb[0].mxu0 %v386
        %v3847 = vpop.f32.mrb[0].mxu0
        %v3848 = vadd.f32 0.0, %v3847
        %v3849 = vpop.f32.mrb[0].mxu0
        %3850 = vmatprep.mubr.f32.mxu0 0.0
        %3851 = vmatmul.mubr.f32.gmra.mrb[0].mxu0 %v389
        %v3852 = vpop.f32.mrb[0].mxu0
        %v3853 = vadd.f32 0.0, %v3852
        %v3854 = vpop.f32.mrb[0].mxu0
        %3855 = vmatprep.mubr.f32.mxu0 0.0
        %3856 = vmatmul.mubr.f32.gmra.mrb[0].mxu0 %v392
        %v3857 = vpop.f32.mrb[0].mxu0
        %v3858 = vadd.f32 0.0, %v3857
        %v3859 = vpop.f32.mrb[0].mxu0
        %3860 = vmatprep.mubr.f32.mxu0 0.0
        %3861 = vmatmul.mubr.f32.gmra.mrb[0].mxu0 %v395
        %v3862 = vpop.f32.mrb[0].mxu0
        %v3863 = vadd.f32 0.0, %v3862
        %v3864 = vpop.f32.mrb[0].mxu0
        %3865 = vmatprep.mubr.f32.mxu0 0.0
        %3866 = vmatmul.mubr.f32.gmra.mrb[0].mxu0 %v398
        %v3867 = vpop.f32.mrb[0].mxu0
        %v3868 = vadd.f32 0.0, %v3867
        %v3869 = vpop.f32.mrb[0].mxu0
        %3870 = vmatprep.mubr.f32.mxu0 0.0
        %3871 = vmatmul.mubr.f32.gmra.mrb[0].mxu0 %v401
        %v3872 = vpop.f32.mrb[0].mxu0
        %v3873 = vadd.f32 0.0, %v3872
        %v3874 = vpop.f32.mrb[0].mxu0
        %3875 = vmatprep.mubr.f32.mxu0 0.0
        %3876 = vmatmul.mubr.f32.gmra.mrb[0].mxu0 %v404
        %v3877 = vpop.f32.mrb[0].mxu0
        %v3878 = vadd.f32 0.0, %v3877
        %v3879 = vpop.f32.mrb[0].mxu0
        %3880 = vmatprep.mubr.f32.mxu0 0.0
        %3881 = vmatmul.mubr.f32.gmra.mrb[0].mxu0 %v407
        %v3882 = vpop.f32.mrb[0].mxu0
        %v3883 = vadd.f32 0.0, %v3882
        %v3884 = vpop.f32.mrb[0].mxu0
        %3885 = vmatprep.mubr.f32.mxu0 0.0
        %3886 = vmatmul.mubr.f32.gmra.mrb[0].mxu0 %v410
        %v3887 = vpop.f32.mrb[0].mxu0
        %v3888 = vadd.f32 0.0, %v3887
        %v3889 = vpop.f32.mrb[0].mxu0
        %3890 = vmatprep.mubr.f32.mxu0 0.0
        %3891 = vmatmul.mubr.f32.gmra.mrb[0].mxu0 %v413
        %v3892 = vpop.f32.mrb[0].mxu0
        %v3893 = vadd.f32 0.0, %v3892
        %v3894 = vpop.f32.mrb[0].mxu0
        %3895 = vmatprep.mubr.f32.mxu0 0.0
        %3896 = vmatmul.mubr.f32.gmra.mrb[0].mxu0 %v416
        %v3897 = vpop.f32.mrb[0].mxu0
        %v3898 = vadd.f32 0.0, %v3897
        %v3899 = vpop.f32.mrb[0].mxu0
        %3900 = vmatprep.mubr.f32.mxu0 0.0
        %3901 = vmatmul.mubr.f32.gmra.mrb[0].mxu0 %v419
        %v3902 = vpop.f32.mrb[0].mxu0
        %v3903 = vadd.f32 0.0, %v3902
        %v3904 = vpop.f32.mrb[0].mxu0
        %3905 = vmatprep.mubr.f32.mxu0 0.0
        %3906 = vmatmul.mubr.f32.gmra.mrb[0].mxu0 %v422
        %v3907 = vpop.f32.mrb[0].mxu0
        %v3908 = vadd.f32 0.0, %v3907
        %v3909 = vpop.f32.mrb[0].mxu0
        %3910 = vmatprep.mubr.f32.mxu0 0.0
        %3911 = vmatmul.mubr.f32.gmra.mrb[0].mxu0 %v425
        %v3912 = vpop.f32.mrb[0].mxu0
        %v3913 = vadd.f32 0.0, %v3912
        %v3914 = vpop.f32.mrb[0].mxu0
        %3915 = vmatprep.mubr.f32.mxu0 0.0
        %3916 = vmatmul.mubr.f32.gmra.mrb[0].mxu0 %v428
        %v3917 = vpop.f32.mrb[0].mxu0
        %v3918 = vadd.f32 0.0, %v3917
        %v3919 = vpop.f32.mrb[0].mxu0
        %3920 = vmatprep.mubr.f32.mxu0 0.0
        %3921 = vmatmul.mubr.f32.gmra.mrb[0].mxu0 %v431
        %v3922 = vpop.f32.mrb[0].mxu0
        %v3923 = vadd.f32 0.0, %v3922
        %v3924 = vpop.f32.mrb[0].mxu0
        %3925 = vmatprep.mubr.f32.mxu0 0.0
        %3926 = vmatmul.mubr.f32.gmra.mrb[0].mxu0 %v434
        %v3927 = vpop.f32.mrb[0].mxu0
        %v3928 = vadd.f32 0.0, %v3927
        %v3929 = vpop.f32.mrb[0].mxu0
        %3930 = vmatprep.mubr.f32.mxu0 0.0
        %3931 = vmatmul.mubr.f32.gmra.mrb[0].mxu0 %v437
        %v3932 = vpop.f32.mrb[0].mxu0
        %v3933 = vadd.f32 0.0, %v3932
        %v3934 = vpop.f32.mrb[0].mxu0
        %3935 = vmatprep.mubr.f32.mxu0 0.0
        %3936 = vmatmul.mubr.f32.gmra.mrb[0].mxu0 %v440
        %v3937 = vpop.f32.mrb[0].mxu0
        %v3938 = vadd.f32 0.0, %v3937
        %v3939 = vpop.f32.mrb[0].mxu0
        %3940 = vmatprep.mubr.f32.mxu0 0.0
        %3941 = vmatmul.mubr.f32.gmra.mrb[0].mxu0 %v443
        %v3942 = vpop.f32.mrb[0].mxu0
        %v3943 = vadd.f32 0.0, %v3942
        %v3944 = vpop.f32.mrb[0].mxu0
        %3945 = vmatprep.mubr.f32.mxu0 0.0
        %3946 = vmatmul.mubr.f32.gmra.mrb[0].mxu0 %v446
        %v3947 = vpop.f32.mrb[0].mxu0
        %v3948 = vadd.f32 0.0, %v3947
        %v3949 = vpop.f32.mrb[0].mxu0
        %3950 = vmatprep.mubr.f32.mxu0 0.0
        %3951 = vmatmul.mubr.f32.gmra.mrb[0].mxu0 %v449
        %v3952 = vpop.f32.mrb[0].mxu0
        %v3953 = vadd.f32 0.0, %v3952
        %v3954 = vpop.f32.mrb[0].mxu0
        %3955 = vmatprep.mubr.f32.mxu0 0.0
        %3956 = vmatmul.mubr.f32.gmra.mrb[0].mxu0 %v452
        %v3957 = vpop.f32.mrb[0].mxu0
        %v3958 = vadd.f32 0.0, %v3957
        %v3959 = vpop.f32.mrb[0].mxu0
        %3960 = vmatprep.mubr.f32.mxu0 0.0
        %3961 = vmatmul.mubr.f32.gmra.mrb[0].mxu0 %v455
        %v3962 = vpop.f32.mrb[0].mxu0
        %v3963 = vadd.f32 0.0, %v3962
        %v3964 = vpop.f32.mrb[0].mxu0
        %3965 = vmatprep.mubr.f32.mxu0 0.0
        %3966 = vmatmul.mubr.f32.gmra.mrb[0].mxu0 %v458
        %v3967 = vpop.f32.mrb[0].mxu0
        %v3968 = vadd.f32 0.0, %v3967
        %v3969 = vpop.f32.mrb[0].mxu0
        %3970 = vmatprep.mubr.f32.mxu0 0.0
        %3971 = vmatmul.mubr.f32.gmra.mrb[0].mxu0 %v461
        %v3972 = vpop.f32.mrb[0].mxu0
        %v3973 = vadd.f32 0.0, %v3972
        %v3974 = vpop.f32.mrb[0].mxu0
        %3975 = vdwg.mxu0
        %v3992 = vunpack.c.l.b16 %v3578
        %v3993 = vunpack.c.l.b16 %v3579
        %v3994 = vunpack.c.l.b16 %v3580
        %v3995 = vunpack.c.l.b16 %v3581
        %v3996 = vunpack.c.l.b16 %v3582
        %v3997 = vunpack.c.l.b16 %v3583
        %v3998 = vunpack.c.l.b16 %v3584
        %v3999 = vunpack.c.l.b16 %v3585
        %v4000 = vunpack.c.l.b16 %v3586
        %v4001 = vunpack.c.l.b16 %v3587
        %v4002 = vunpack.c.l.b16 %v3588
        %v4003 = vunpack.c.l.b16 %v3589
        %v4004 = vunpack.c.l.b16 %v3590
        %v4005 = vunpack.c.l.b16 %v3591
        %v4006 = vunpack.c.l.b16 %v3592
        %v4007 = vunpack.c.l.b16 %v3593
        %v4008 = vpack.c.b16 %v3993, %v3992
        %v4009 = vpack.c.b16 %v3995, %v3994
        %v4010 = vpack.c.b16 %v3997, %v3996
        %v4011 = vpack.c.b16 %v3999, %v3998
        %v4012 = vpack.c.b16 %v4001, %v4000
        %v4013 = vpack.c.b16 %v4003, %v4002
        %v4014 = vpack.c.b16 %v4005, %v4004
        %v4015 = vpack.c.b16 %v4007, %v4006
        %4024 = vmatprep.subr.bf16.mxu0 0
        %4025 = vmatpush1.bf16.msra.mxu0 %v4008
        %4026 = vmatprep.subr.bf16.mxu0 0
        %4027 = vmatpush1.bf16.msra.mxu0 %v4009
        %4028 = vmatprep.subr.bf16.mxu0 0
        %4029 = vmatpush1.bf16.msra.mxu0 %v4010
        %4030 = vmatprep.subr.bf16.mxu0 0
        %4031 = vmatpush1.bf16.msra.mxu0 %v4011
        %4032 = vmatprep.subr.bf16.mxu0 0
        %4033 = vmatpush1.bf16.msra.mxu0 %v4012
        %4034 = vmatprep.subr.bf16.mxu0 0
        %4035 = vmatpush1.bf16.msra.mxu0 %v4013
        %4036 = vmatprep.subr.bf16.mxu0 0
        %4037 = vmatpush1.bf16.msra.mxu0 %v4014
        %4038 = vmatprep.subr.bf16.mxu0 0
        %4039 = vmatpush1.bf16.msra.mxu0 %v4015
        %4040 = vmatprep.subr.bf16.mxu0 0
        %4041 = vmatpush1.bf16.msra.mxu0 0
        %4042 = vmatprep.subr.bf16.mxu0 0
        %4043 = vmatpush1.bf16.msra.mxu0 0
        %4044 = vmatprep.subr.bf16.mxu0 0
        %4045 = vmatpush1.bf16.msra.mxu0 0
        %4046 = vmatprep.subr.bf16.mxu0 0
        %4047 = vmatpush1.bf16.msra.mxu0 0
        %4048 = vmatprep.subr.bf16.mxu0 0
        %4049 = vmatpush1.bf16.msra.mxu0 0
        %4050 = vmatprep.subr.bf16.mxu0 0
        %4051 = vmatpush1.bf16.msra.mxu0 0
        %4052 = vmatprep.subr.bf16.mxu0 0
        %4053 = vmatpush1.bf16.msra.mxu0 0
        %4054 = vmatprep.subr.bf16.mxu0 0
        %4055 = vmatpush1.bf16.msra.mxu0 0
        %4056 = vmatprep.mubr.bf16.mxu0 0
        %4057 = vmatmul.mubr.bf16.gmra.mrb[0].mxu0 %v3545
        %v4058 = vpop.f32.mrb[0].mxu0
        %v4059 = vadd.f32 %v3663, %v4058
        %v4060 = vpop.f32.mrb[0].mxu0
        %v4061 = vpop.f32.mrb[0].mxu0
        %v4062 = vadd.f32 %v3668, %v4061
        %v4063 = vpop.f32.mrb[0].mxu0
        %4064 = vmatprep.mubr.bf16.mxu0 0
        %4065 = vmatmul.mubr.bf16.gmra.mrb[0].mxu0 %v3546
        %v4066 = vpop.f32.mrb[0].mxu0
        %v4067 = vadd.f32 %v3673, %v4066
        %v4068 = vpop.f32.mrb[0].mxu0
        %v4069 = vpop.f32.mrb[0].mxu0
        %v4070 = vadd.f32 %v3678, %v4069
        %v4071 = vpop.f32.mrb[0].mxu0
        %4072 = vmatprep.mubr.bf16.mxu0 0
        %4073 = vmatmul.mubr.bf16.gmra.mrb[0].mxu0 %v3547
        %v4074 = vpop.f32.mrb[0].mxu0
        %v4075 = vadd.f32 %v3683, %v4074
        %v4076 = vpop.f32.mrb[0].mxu0
        %v4077 = vpop.f32.mrb[0].mxu0
        %v4078 = vadd.f32 %v3688, %v4077
        %v4079 = vpop.f32.mrb[0].mxu0
        %4080 = vmatprep.mubr.bf16.mxu0 0
        %4081 = vmatmul.mubr.bf16.gmra.mrb[0].mxu0 %v3548
        %v4082 = vpop.f32.mrb[0].mxu0
        %v4083 = vadd.f32 %v3693, %v4082
        %v4084 = vpop.f32.mrb[0].mxu0
        %v4085 = vpop.f32.mrb[0].mxu0
        %v4086 = vadd.f32 %v3698, %v4085
        %v4087 = vpop.f32.mrb[0].mxu0
        %4088 = vmatprep.mubr.bf16.mxu0 0
        %4089 = vmatmul.mubr.bf16.gmra.mrb[0].mxu0 %v3549
        %v4090 = vpop.f32.mrb[0].mxu0
        %v4091 = vadd.f32 %v3703, %v4090
        %v4092 = vpop.f32.mrb[0].mxu0
        %v4093 = vpop.f32.mrb[0].mxu0
        %v4094 = vadd.f32 %v3708, %v4093
        %v4095 = vpop.f32.mrb[0].mxu0
        %4096 = vmatprep.mubr.bf16.mxu0 0
        %4097 = vmatmul.mubr.bf16.gmra.mrb[0].mxu0 %v3550
        %v4098 = vpop.f32.mrb[0].mxu0
        %v4099 = vadd.f32 %v3713, %v4098
        %v4100 = vpop.f32.mrb[0].mxu0
        %v4101 = vpop.f32.mrb[0].mxu0
        %v4102 = vadd.f32 %v3718, %v4101
        %v4103 = vpop.f32.mrb[0].mxu0
        %4104 = vmatprep.mubr.bf16.mxu0 0
        %4105 = vmatmul.mubr.bf16.gmra.mrb[0].mxu0 %v3551
        %v4106 = vpop.f32.mrb[0].mxu0
        %v4107 = vadd.f32 %v3723, %v4106
        %v4108 = vpop.f32.mrb[0].mxu0
        %v4109 = vpop.f32.mrb[0].mxu0
        %v4110 = vadd.f32 %v3728, %v4109
        %v4111 = vpop.f32.mrb[0].mxu0
        %4112 = vmatprep.mubr.bf16.mxu0 0
        %4113 = vmatmul.mubr.bf16.gmra.mrb[0].mxu0 %v3552
        %v4114 = vpop.f32.mrb[0].mxu0
        %v4115 = vadd.f32 %v3733, %v4114
        %v4116 = vpop.f32.mrb[0].mxu0
        %v4117 = vpop.f32.mrb[0].mxu0
        %v4118 = vadd.f32 %v3738, %v4117
        %v4119 = vpop.f32.mrb[0].mxu0
        %4120 = vmatprep.mubr.bf16.mxu0 0
        %4121 = vmatmul.mubr.bf16.gmra.mrb[0].mxu0 %v3553
        %v4122 = vpop.f32.mrb[0].mxu0
        %v4123 = vadd.f32 %v3743, %v4122
        %v4124 = vpop.f32.mrb[0].mxu0
        %v4125 = vpop.f32.mrb[0].mxu0
        %v4126 = vadd.f32 %v3748, %v4125
        %v4127 = vpop.f32.mrb[0].mxu0
        %4128 = vmatprep.mubr.bf16.mxu0 0
        %4129 = vmatmul.mubr.bf16.gmra.mrb[0].mxu0 %v3554
        %v4130 = vpop.f32.mrb[0].mxu0
        %v4131 = vadd.f32 %v3753, %v4130
        %v4132 = vpop.f32.mrb[0].mxu0
        %v4133 = vpop.f32.mrb[0].mxu0
        %v4134 = vadd.f32 %v3758, %v4133
        %v4135 = vpop.f32.mrb[0].mxu0
        %4136 = vmatprep.mubr.bf16.mxu0 0
        %4137 = vmatmul.mubr.bf16.gmra.mrb[0].mxu0 %v3555
        %v4138 = vpop.f32.mrb[0].mxu0
        %v4139 = vadd.f32 %v3763, %v4138
        %v4140 = vpop.f32.mrb[0].mxu0
        %v4141 = vpop.f32.mrb[0].mxu0
        %v4142 = vadd.f32 %v3768, %v4141
        %v4143 = vpop.f32.mrb[0].mxu0
        %4144 = vmatprep.mubr.bf16.mxu0 0
        %4145 = vmatmul.mubr.bf16.gmra.mrb[0].mxu0 %v3556
        %v4146 = vpop.f32.mrb[0].mxu0
        %v4147 = vadd.f32 %v3773, %v4146
        %v4148 = vpop.f32.mrb[0].mxu0
        %v4149 = vpop.f32.mrb[0].mxu0
        %v4150 = vadd.f32 %v3778, %v4149
        %v4151 = vpop.f32.mrb[0].mxu0
        %4152 = vmatprep.mubr.bf16.mxu0 0
        %4153 = vmatmul.mubr.bf16.gmra.mrb[0].mxu0 %v3557
        %v4154 = vpop.f32.mrb[0].mxu0
        %v4155 = vadd.f32 %v3783, %v4154
        %v4156 = vpop.f32.mrb[0].mxu0
        %v4157 = vpop.f32.mrb[0].mxu0
        %v4158 = vadd.f32 %v3788, %v4157
        %v4159 = vpop.f32.mrb[0].mxu0
        %4160 = vmatprep.mubr.bf16.mxu0 0
        %4161 = vmatmul.mubr.bf16.gmra.mrb[0].mxu0 %v3558
        %v4162 = vpop.f32.mrb[0].mxu0
        %v4163 = vadd.f32 %v3793, %v4162
        %v4164 = vpop.f32.mrb[0].mxu0
        %v4165 = vpop.f32.mrb[0].mxu0
        %v4166 = vadd.f32 %v3798, %v4165
        %v4167 = vpop.f32.mrb[0].mxu0
        %4168 = vmatprep.mubr.bf16.mxu0 0
        %4169 = vmatmul.mubr.bf16.gmra.mrb[0].mxu0 %v3559
        %v4170 = vpop.f32.mrb[0].mxu0
        %v4171 = vadd.f32 %v3803, %v4170
        %v4172 = vpop.f32.mrb[0].mxu0
        %v4173 = vpop.f32.mrb[0].mxu0
        %v4174 = vadd.f32 %v3808, %v4173
        %v4175 = vpop.f32.mrb[0].mxu0
        %4176 = vmatprep.mubr.bf16.mxu0 0
        %4177 = vmatmul.mubr.bf16.gmra.mrb[0].mxu0 %v3560
        %v4178 = vpop.f32.mrb[0].mxu0
        %v4179 = vadd.f32 %v3813, %v4178
        %v4180 = vpop.f32.mrb[0].mxu0
        %v4181 = vpop.f32.mrb[0].mxu0
        %v4182 = vadd.f32 %v3818, %v4181
        %v4183 = vpop.f32.mrb[0].mxu0
        %4184 = vmatprep.mubr.bf16.mxu0 0
        %4185 = vmatmul.mubr.bf16.gmra.mrb[0].mxu0 %v3561
        %v4186 = vpop.f32.mrb[0].mxu0
        %v4187 = vadd.f32 %v3823, %v4186
        %v4188 = vpop.f32.mrb[0].mxu0
        %v4189 = vpop.f32.mrb[0].mxu0
        %v4190 = vadd.f32 %v3828, %v4189
        %v4191 = vpop.f32.mrb[0].mxu0
        %4192 = vmatprep.mubr.bf16.mxu0 0
        %4193 = vmatmul.mubr.bf16.gmra.mrb[0].mxu0 %v3562
        %v4194 = vpop.f32.mrb[0].mxu0
        %v4195 = vadd.f32 %v3833, %v4194
        %v4196 = vpop.f32.mrb[0].mxu0
        %v4197 = vpop.f32.mrb[0].mxu0
        %v4198 = vadd.f32 %v3838, %v4197
        %v4199 = vpop.f32.mrb[0].mxu0
        %4200 = vmatprep.mubr.bf16.mxu0 0
        %4201 = vmatmul.mubr.bf16.gmra.mrb[0].mxu0 %v3563
        %v4202 = vpop.f32.mrb[0].mxu0
        %v4203 = vadd.f32 %v3843, %v4202
        %v4204 = vpop.f32.mrb[0].mxu0
        %v4205 = vpop.f32.mrb[0].mxu0
        %v4206 = vadd.f32 %v3848, %v4205
        %v4207 = vpop.f32.mrb[0].mxu0
        %4208 = vmatprep.mubr.bf16.mxu0 0
        %4209 = vmatmul.mubr.bf16.gmra.mrb[0].mxu0 %v3564
        %v4210 = vpop.f32.mrb[0].mxu0
        %v4211 = vadd.f32 %v3853, %v4210
        %v4212 = vpop.f32.mrb[0].mxu0
        %v4213 = vpop.f32.mrb[0].mxu0
        %v4214 = vadd.f32 %v3858, %v4213
        %v4215 = vpop.f32.mrb[0].mxu0
        %4216 = vmatprep.mubr.bf16.mxu0 0
        %4217 = vmatmul.mubr.bf16.gmra.mrb[0].mxu0 %v3565
        %v4218 = vpop.f32.mrb[0].mxu0
        %v4219 = vadd.f32 %v3863, %v4218
        %v4220 = vpop.f32.mrb[0].mxu0
        %v4221 = vpop.f32.mrb[0].mxu0
        %v4222 = vadd.f32 %v3868, %v4221
        %v4223 = vpop.f32.mrb[0].mxu0
        %4224 = vmatprep.mubr.bf16.mxu0 0
        %4225 = vmatmul.mubr.bf16.gmra.mrb[0].mxu0 %v3566
        %v4226 = vpop.f32.mrb[0].mxu0
        %v4227 = vadd.f32 %v3873, %v4226
        %v4228 = vpop.f32.mrb[0].mxu0
        %v4229 = vpop.f32.mrb[0].mxu0
        %v4230 = vadd.f32 %v3878, %v4229
        %v4231 = vpop.f32.mrb[0].mxu0
        %4232 = vmatprep.mubr.bf16.mxu0 0
        %4233 = vmatmul.mubr.bf16.gmra.mrb[0].mxu0 %v3567
        %v4234 = vpop.f32.mrb[0].mxu0
        %v4235 = vadd.f32 %v3883, %v4234
        %v4236 = vpop.f32.mrb[0].mxu0
        %v4237 = vpop.f32.mrb[0].mxu0
        %v4238 = vadd.f32 %v3888, %v4237
        %v4239 = vpop.f32.mrb[0].mxu0
        %4240 = vmatprep.mubr.bf16.mxu0 0
        %4241 = vmatmul.mubr.bf16.gmra.mrb[0].mxu0 %v3568
        %v4242 = vpop.f32.mrb[0].mxu0
        %v4243 = vadd.f32 %v3893, %v4242
        %v4244 = vpop.f32.mrb[0].mxu0
        %v4245 = vpop.f32.mrb[0].mxu0
        %v4246 = vadd.f32 %v3898, %v4245
        %v4247 = vpop.f32.mrb[0].mxu0
        %4248 = vmatprep.mubr.bf16.mxu0 0
        %4249 = vmatmul.mubr.bf16.gmra.mrb[0].mxu0 %v3569
        %v4250 = vpop.f32.mrb[0].mxu0
        %v4251 = vadd.f32 %v3903, %v4250
        %v4252 = vpop.f32.mrb[0].mxu0
        %v4253 = vpop.f32.mrb[0].mxu0
        %v4254 = vadd.f32 %v3908, %v4253
        %v4255 = vpop.f32.mrb[0].mxu0
        %4256 = vmatprep.mubr.bf16.mxu0 0
        %4257 = vmatmul.mubr.bf16.gmra.mrb[0].mxu0 %v3570
        %v4258 = vpop.f32.mrb[0].mxu0
        %v4259 = vadd.f32 %v3913, %v4258
        %v4260 = vpop.f32.mrb[0].mxu0
        %v4261 = vpop.f32.mrb[0].mxu0
        %v4262 = vadd.f32 %v3918, %v4261
        %v4263 = vpop.f32.mrb[0].mxu0
        %4264 = vmatprep.mubr.bf16.mxu0 0
        %4265 = vmatmul.mubr.bf16.gmra.mrb[0].mxu0 %v3571
        %v4266 = vpop.f32.mrb[0].mxu0
        %v4267 = vadd.f32 %v3923, %v4266
        %v4268 = vpop.f32.mrb[0].mxu0
        %v4269 = vpop.f32.mrb[0].mxu0
        %v4270 = vadd.f32 %v3928, %v4269
        %v4271 = vpop.f32.mrb[0].mxu0
        %4272 = vmatprep.mubr.bf16.mxu0 0
        %4273 = vmatmul.mubr.bf16.gmra.mrb[0].mxu0 %v3572
        %v4274 = vpop.f32.mrb[0].mxu0
        %v4275 = vadd.f32 %v3933, %v4274
        %v4276 = vpop.f32.mrb[0].mxu0
        %v4277 = vpop.f32.mrb[0].mxu0
        %v4278 = vadd.f32 %v3938, %v4277
        %v4279 = vpop.f32.mrb[0].mxu0
        %4280 = vmatprep.mubr.bf16.mxu0 0
        %4281 = vmatmul.mubr.bf16.gmra.mrb[0].mxu0 %v3573
        %v4282 = vpop.f32.mrb[0].mxu0
        %v4283 = vadd.f32 %v3943, %v4282
        %v4284 = vpop.f32.mrb[0].mxu0
        %v4285 = vpop.f32.mrb[0].mxu0
        %v4286 = vadd.f32 %v3948, %v4285
        %v4287 = vpop.f32.mrb[0].mxu0
        %4288 = vmatprep.mubr.bf16.mxu0 0
        %4289 = vmatmul.mubr.bf16.gmra.mrb[0].mxu0 %v3574
        %v4290 = vpop.f32.mrb[0].mxu0
        %v4291 = vadd.f32 %v3953, %v4290
        %v4292 = vpop.f32.mrb[0].mxu0
        %v4293 = vpop.f32.mrb[0].mxu0
        %v4294 = vadd.f32 %v3958, %v4293
        %v4295 = vpop.f32.mrb[0].mxu0
        %4296 = vmatprep.mubr.bf16.mxu0 0
        %4297 = vmatmul.mubr.bf16.gmra.mrb[0].mxu0 %v3575
        %v4298 = vpop.f32.mrb[0].mxu0
        %v4299 = vadd.f32 %v3963, %v4298
        %v4300 = vpop.f32.mrb[0].mxu0
        %v4301 = vpop.f32.mrb[0].mxu0
        %v4302 = vadd.f32 %v3968, %v4301
        %v4303 = vpop.f32.mrb[0].mxu0
        %4304 = vmatprep.mubr.bf16.mxu0 0
        %4305 = vmatmul.mubr.bf16.gmra.mrb[0].mxu0 %v3576
        %v4306 = vpop.f32.mrb[0].mxu0
        %v4307 = vadd.f32 %v3973, %v4306
        %v4308 = vpop.f32.mrb[0].mxu0
        %v4309 = vpop.f32.mrb[0].mxu0
        %v4310 = vpop.f32.mrb[0].mxu0
        %4311 = vdwg.mxu0
        %v4312 = vlaneseq
        %v4313 = vshrl.u32 %v4312, 7
        %v4314 = vsub.s32 4, %v4313
        %v4315 = vrot.slane %v267, %v4314
        %v4316 = vadd.f32 %v4059, %v4315
        %v4317 = vadd.f32 %v4062, %v4315
        %v4318 = vadd.f32 %v4067, %v4315
        %v4319 = vadd.f32 %v4070, %v4315
        %v4320 = vadd.f32 %v4075, %v4315
        %v4321 = vadd.f32 %v4078, %v4315
        %v4322 = vadd.f32 %v4083, %v4315
        %v4323 = vadd.f32 %v4086, %v4315
        %v4324 = vadd.f32 %v4091, %v4315
        %v4325 = vadd.f32 %v4094, %v4315
        %v4326 = vadd.f32 %v4099, %v4315
        %v4327 = vadd.f32 %v4102, %v4315
        %v4328 = vadd.f32 %v4107, %v4315
        %v4329 = vadd.f32 %v4110, %v4315
        %v4330 = vadd.f32 %v4115, %v4315
        %v4331 = vadd.f32 %v4118, %v4315
        %v4332 = vadd.f32 %v4123, %v4315
        %v4333 = vadd.f32 %v4126, %v4315
        %v4334 = vadd.f32 %v4131, %v4315
        %v4335 = vadd.f32 %v4134, %v4315
        %v4336 = vadd.f32 %v4139, %v4315
        %v4337 = vadd.f32 %v4142, %v4315
        %v4338 = vadd.f32 %v4147, %v4315
        %v4339 = vadd.f32 %v4150, %v4315
        %v4340 = vadd.f32 %v4155, %v4315
        %v4341 = vadd.f32 %v4158, %v4315
        %v4342 = vadd.f32 %v4163, %v4315
        %v4343 = vadd.f32 %v4166, %v4315
        %v4344 = vadd.f32 %v4171, %v4315
        %v4345 = vadd.f32 %v4174, %v4315
        %v4346 = vadd.f32 %v4179, %v4315
        %v4347 = vadd.f32 %v4182, %v4315
        %v4348 = vadd.f32 %v4187, %v4315
        %v4349 = vadd.f32 %v4190, %v4315
        %v4350 = vadd.f32 %v4195, %v4315
        %v4351 = vadd.f32 %v4198, %v4315
        %v4352 = vadd.f32 %v4203, %v4315
        %v4353 = vadd.f32 %v4206, %v4315
        %v4354 = vadd.f32 %v4211, %v4315
        %v4355 = vadd.f32 %v4214, %v4315
        %v4356 = vadd.f32 %v4219, %v4315
        %v4357 = vadd.f32 %v4222, %v4315
        %v4358 = vadd.f32 %v4227, %v4315
        %v4359 = vadd.f32 %v4230, %v4315
        %v4360 = vadd.f32 %v4235, %v4315
        %v4361 = vadd.f32 %v4238, %v4315
        %v4362 = vadd.f32 %v4243, %v4315
        %v4363 = vadd.f32 %v4246, %v4315
        %v4364 = vadd.f32 %v4251, %v4315
        %v4365 = vadd.f32 %v4254, %v4315
        %v4366 = vadd.f32 %v4259, %v4315
        %v4367 = vadd.f32 %v4262, %v4315
        %v4368 = vadd.f32 %v4267, %v4315
        %v4369 = vadd.f32 %v4270, %v4315
        %v4370 = vadd.f32 %v4275, %v4315
        %v4371 = vadd.f32 %v4278, %v4315
        %v4372 = vadd.f32 %v4283, %v4315
        %v4373 = vadd.f32 %v4286, %v4315
        %v4374 = vadd.f32 %v4291, %v4315
        %v4375 = vadd.f32 %v4294, %v4315
        %v4376 = vadd.f32 %v4299, %v4315
        %v4377 = vadd.f32 %v4302, %v4315
        %v4378 = vadd.f32 %v4307, %v4315
        %v4379 = vpack.c.bf16 %v4317, %v4316
        %v4380 = vpack.c.bf16 %v4319, %v4318
        %v4381 = vpack.c.bf16 %v4321, %v4320
        %v4382 = vpack.c.bf16 %v4323, %v4322
        %v4383 = vpack.c.bf16 %v4325, %v4324
        %v4384 = vpack.c.bf16 %v4327, %v4326
        %v4385 = vpack.c.bf16 %v4329, %v4328
        %v4386 = vpack.c.bf16 %v4331, %v4330
        %v4387 = vpack.c.bf16 %v4333, %v4332
        %v4388 = vpack.c.bf16 %v4335, %v4334
        %v4389 = vpack.c.bf16 %v4337, %v4336
        %v4390 = vpack.c.bf16 %v4339, %v4338
        %v4391 = vpack.c.bf16 %v4341, %v4340
        %v4392 = vpack.c.bf16 %v4343, %v4342
        %v4393 = vpack.c.bf16 %v4345, %v4344
        %v4394 = vpack.c.bf16 %v4347, %v4346
        %v4395 = vpack.c.bf16 %v4349, %v4348
        %v4396 = vpack.c.bf16 %v4351, %v4350
        %v4397 = vpack.c.bf16 %v4353, %v4352
        %v4398 = vpack.c.bf16 %v4355, %v4354
        %v4399 = vpack.c.bf16 %v4357, %v4356
        %v4400 = vpack.c.bf16 %v4359, %v4358
        %v4401 = vpack.c.bf16 %v4361, %v4360
        %v4402 = vpack.c.bf16 %v4363, %v4362
        %v4403 = vpack.c.bf16 %v4365, %v4364
        %v4404 = vpack.c.bf16 %v4367, %v4366
        %v4405 = vpack.c.bf16 %v4369, %v4368
        %v4406 = vpack.c.bf16 %v4371, %v4370
        %v4407 = vpack.c.bf16 %v4373, %v4372
        %v4408 = vpack.c.bf16 %v4375, %v4374
        %v4409 = vpack.c.bf16 %v4377, %v4376
        %v4410 = vpack.c.bf16 %v4378, %v4378
        %v4411 = vmul.bf16 %v4379, 1120420552
        %v4412 = vmul.bf16 %v4380, 1120420552
        %v4413 = vmul.bf16 %v4381, 1120420552
        %v4414 = vmul.bf16 %v4382, 1120420552
        %v4415 = vmul.bf16 %v4383, 1120420552
        %v4416 = vmul.bf16 %v4384, 1120420552
        %v4417 = vmul.bf16 %v4385, 1120420552
        %v4418 = vmul.bf16 %v4386, 1120420552
        %v4419 = vmul.bf16 %v4387, 1120420552
        %v4420 = vmul.bf16 %v4388, 1120420552
        %v4421 = vmul.bf16 %v4389, 1120420552
        %v4422 = vmul.bf16 %v4390, 1120420552
        %v4423 = vmul.bf16 %v4391, 1120420552
        %v4424 = vmul.bf16 %v4392, 1120420552
        %v4425 = vmul.bf16 %v4393, 1120420552
        %v4426 = vmul.bf16 %v4394, 1120420552
        %v4427 = vmul.bf16 %v4395, 1120420552
        %v4428 = vmul.bf16 %v4396, 1120420552
        %v4429 = vmul.bf16 %v4397, 1120420552
        %v4430 = vmul.bf16 %v4398, 1120420552
        %v4431 = vmul.bf16 %v4399, 1120420552
        %v4432 = vmul.bf16 %v4400, 1120420552
        %v4433 = vmul.bf16 %v4401, 1120420552
        %v4434 = vmul.bf16 %v4402, 1120420552
        %v4435 = vmul.bf16 %v4403, 1120420552
        %v4436 = vmul.bf16 %v4404, 1120420552
        %v4437 = vmul.bf16 %v4405, 1120420552
        %v4438 = vmul.bf16 %v4406, 1120420552
        %v4439 = vmul.bf16 %v4407, 1120420552
        %v4440 = vmul.bf16 %v4408, 1120420552
        %v4441 = vmul.bf16 %v4409, 1120420552
        %v4442 = vmul.bf16 %v4410, 1120420552
        %v4443 = vmin.bf16 %v4411, 1101021600
        %v4444 = vmin.bf16 %v4412, 1101021600
        %v4445 = vmin.bf16 %v4413, 1101021600
        %v4446 = vmin.bf16 %v4414, 1101021600
        %v4447 = vmin.bf16 %v4415, 1101021600
        %v4448 = vmin.bf16 %v4416, 1101021600
        %v4449 = vmin.bf16 %v4417, 1101021600
        %v4450 = vmin.bf16 %v4418, 1101021600
        %v4451 = vmin.bf16 %v4419, 1101021600
        %v4452 = vmin.bf16 %v4420, 1101021600
        %v4453 = vmin.bf16 %v4421, 1101021600
        %v4454 = vmin.bf16 %v4422, 1101021600
        %v4455 = vmin.bf16 %v4423, 1101021600
        %v4456 = vmin.bf16 %v4424, 1101021600
        %v4457 = vmin.bf16 %v4425, 1101021600
        %v4458 = vmin.bf16 %v4426, 1101021600
        %v4459 = vmin.bf16 %v4427, 1101021600
        %v4460 = vmin.bf16 %v4428, 1101021600
        %v4461 = vmin.bf16 %v4429, 1101021600
        %v4462 = vmin.bf16 %v4430, 1101021600
        %v4463 = vmin.bf16 %v4431, 1101021600
        %v4464 = vmin.bf16 %v4432, 1101021600
        %v4465 = vmin.bf16 %v4433, 1101021600
        %v4466 = vmin.bf16 %v4434, 1101021600
        %v4467 = vmin.bf16 %v4435, 1101021600
        %v4468 = vmin.bf16 %v4436, 1101021600
        %v4469 = vmin.bf16 %v4437, 1101021600
        %v4470 = vmin.bf16 %v4438, 1101021600
        %v4471 = vmin.bf16 %v4439, 1101021600
        %v4472 = vmin.bf16 %v4440, 1101021600
        %v4473 = vmin.bf16 %v4441, 1101021600
        %v4474 = vmin.bf16 %v4442, 1101021600
        %v4476 = vmul.bf16 %v4443, 1069105081
        %v4477 = vpow.bf16.pop %v4476
        %v4479 = vmul.bf16 %v4444, 1069105081
        %v4480 = vpow.bf16.pop %v4479
        %v4482 = vmul.bf16 %v4445, 1069105081
        %v4483 = vpow.bf16.pop %v4482
        %v4485 = vmul.bf16 %v4446, 1069105081
        %v4486 = vpow.bf16.pop %v4485
        %v4488 = vmul.bf16 %v4447, 1069105081
        %v4489 = vpow.bf16.pop %v4488
        %v4491 = vmul.bf16 %v4448, 1069105081
        %v4492 = vpow.bf16.pop %v4491
        %v4494 = vmul.bf16 %v4449, 1069105081
        %v4495 = vpow.bf16.pop %v4494
        %v4497 = vmul.bf16 %v4450, 1069105081
        %v4498 = vpow.bf16.pop %v4497
        %v4500 = vmul.bf16 %v4451, 1069105081
        %v4501 = vpow.bf16.pop %v4500
        %v4503 = vmul.bf16 %v4452, 1069105081
        %v4504 = vpow.bf16.pop %v4503
        %v4506 = vmul.bf16 %v4453, 1069105081
        %v4507 = vpow.bf16.pop %v4506
        %v4509 = vmul.bf16 %v4454, 1069105081
        %v4510 = vpow.bf16.pop %v4509
        %v4512 = vmul.bf16 %v4455, 1069105081
        %v4513 = vpow.bf16.pop %v4512
        %v4515 = vmul.bf16 %v4456, 1069105081
        %v4516 = vpow.bf16.pop %v4515
        %v4518 = vmul.bf16 %v4457, 1069105081
        %v4519 = vpow.bf16.pop %v4518
        %v4521 = vmul.bf16 %v4458, 1069105081
        %v4522 = vpow.bf16.pop %v4521
        %v4524 = vmul.bf16 %v4459, 1069105081
        %v4525 = vpow.bf16.pop %v4524
        %v4527 = vmul.bf16 %v4460, 1069105081
        %v4528 = vpow.bf16.pop %v4527
        %v4530 = vmul.bf16 %v4461, 1069105081
        %v4531 = vpow.bf16.pop %v4530
        %v4533 = vmul.bf16 %v4462, 1069105081
        %v4534 = vpow.bf16.pop %v4533
        %v4536 = vmul.bf16 %v4463, 1069105081
        %v4537 = vpow.bf16.pop %v4536
        %v4539 = vmul.bf16 %v4464, 1069105081
        %v4540 = vpow.bf16.pop %v4539
        %v4542 = vmul.bf16 %v4465, 1069105081
        %v4543 = vpow.bf16.pop %v4542
        %v4545 = vmul.bf16 %v4466, 1069105081
        %v4546 = vpow.bf16.pop %v4545
        %v4548 = vmul.bf16 %v4467, 1069105081
        %v4549 = vpow.bf16.pop %v4548
        %v4551 = vmul.bf16 %v4468, 1069105081
        %v4552 = vpow.bf16.pop %v4551
        %v4554 = vmul.bf16 %v4469, 1069105081
        %v4555 = vpow.bf16.pop %v4554
        %v4557 = vmul.bf16 %v4470, 1069105081
        %v4558 = vpow.bf16.pop %v4557
        %v4560 = vmul.bf16 %v4471, 1069105081
        %v4561 = vpow.bf16.pop %v4560
        %v4563 = vmul.bf16 %v4472, 1069105081
        %v4564 = vpow.bf16.pop %v4563
        %v4566 = vmul.bf16 %v4473, 1069105081
        %v4567 = vpow.bf16.pop %v4566
        %v4569 = vmul.bf16 %v4474, 1069105081
        %v4570 = vpow.bf16.pop %v4569
        %v4571 = vadd.bf16 %v4477, 1065369472
        %v4572 = vadd.bf16 %v4480, 1065369472
        %v4573 = vadd.bf16 %v4483, 1065369472
        %v4574 = vadd.bf16 %v4486, 1065369472
        %v4575 = vadd.bf16 %v4489, 1065369472
        %v4576 = vadd.bf16 %v4492, 1065369472
        %v4577 = vadd.bf16 %v4495, 1065369472
        %v4578 = vadd.bf16 %v4498, 1065369472
        %v4579 = vadd.bf16 %v4501, 1065369472
        %v4580 = vadd.bf16 %v4504, 1065369472
        %v4581 = vadd.bf16 %v4507, 1065369472
        %v4582 = vadd.bf16 %v4510, 1065369472
        %v4583 = vadd.bf16 %v4513, 1065369472
        %v4584 = vadd.bf16 %v4516, 1065369472
        %v4585 = vadd.bf16 %v4519, 1065369472
        %v4586 = vadd.bf16 %v4522, 1065369472
        %v4587 = vadd.bf16 %v4525, 1065369472
        %v4588 = vadd.bf16 %v4528, 1065369472
        %v4589 = vadd.bf16 %v4531, 1065369472
        %v4590 = vadd.bf16 %v4534, 1065369472
        %v4591 = vadd.bf16 %v4537, 1065369472
        %v4592 = vadd.bf16 %v4540, 1065369472
        %v4593 = vadd.bf16 %v4543, 1065369472
        %v4594 = vadd.bf16 %v4546, 1065369472
        %v4595 = vadd.bf16 %v4549, 1065369472
        %v4596 = vadd.bf16 %v4552, 1065369472
        %v4597 = vadd.bf16 %v4555, 1065369472
        %v4598 = vadd.bf16 %v4558, 1065369472
        %v4599 = vadd.bf16 %v4561, 1065369472
        %v4600 = vadd.bf16 %v4564, 1065369472
        %v4601 = vadd.bf16 %v4567, 1065369472
        %v4602 = vadd.bf16 %v4570, 1065369472
        %v4603 = vlog2.bf16.pop %v4571
        %v4605 = vmul.bf16 %v4603, 1060192049
        %v4606 = vlog2.bf16.pop %v4572
        %v4608 = vmul.bf16 %v4606, 1060192049
        %v4609 = vlog2.bf16.pop %v4573
        %v4611 = vmul.bf16 %v4609, 1060192049
        %v4612 = vlog2.bf16.pop %v4574
        %v4614 = vmul.bf16 %v4612, 1060192049
        %v4615 = vlog2.bf16.pop %v4575
        %v4617 = vmul.bf16 %v4615, 1060192049
        %v4618 = vlog2.bf16.pop %v4576
        %v4620 = vmul.bf16 %v4618, 1060192049
        %v4621 = vlog2.bf16.pop %v4577
        %v4623 = vmul.bf16 %v4621, 1060192049
        %v4624 = vlog2.bf16.pop %v4578
        %v4626 = vmul.bf16 %v4624, 1060192049
        %v4627 = vlog2.bf16.pop %v4579
        %v4629 = vmul.bf16 %v4627, 1060192049
        %v4630 = vlog2.bf16.pop %v4580
        %v4632 = vmul.bf16 %v4630, 1060192049
        %v4633 = vlog2.bf16.pop %v4581
        %v4635 = vmul.bf16 %v4633, 1060192049
        %v4636 = vlog2.bf16.pop %v4582
        %v4638 = vmul.bf16 %v4636, 1060192049
        %v4639 = vlog2.bf16.pop %v4583
        %v4641 = vmul.bf16 %v4639, 1060192049
        %v4642 = vlog2.bf16.pop %v4584
        %v4644 = vmul.bf16 %v4642, 1060192049
        %v4645 = vlog2.bf16.pop %v4585
        %v4647 = vmul.bf16 %v4645, 1060192049
        %v4648 = vlog2.bf16.pop %v4586
        %v4650 = vmul.bf16 %v4648, 1060192049
        %v4651 = vlog2.bf16.pop %v4587
        %v4653 = vmul.bf16 %v4651, 1060192049
        %v4654 = vlog2.bf16.pop %v4588
        %v4656 = vmul.bf16 %v4654, 1060192049
        %v4657 = vlog2.bf16.pop %v4589
        %v4659 = vmul.bf16 %v4657, 1060192049
        %v4660 = vlog2.bf16.pop %v4590
        %v4662 = vmul.bf16 %v4660, 1060192049
        %v4663 = vlog2.bf16.pop %v4591
        %v4665 = vmul.bf16 %v4663, 1060192049
        %v4666 = vlog2.bf16.pop %v4592
        %v4668 = vmul.bf16 %v4666, 1060192049
        %v4669 = vlog2.bf16.pop %v4593
        %v4671 = vmul.bf16 %v4669, 1060192049
        %v4672 = vlog2.bf16.pop %v4594
        %v4674 = vmul.bf16 %v4672, 1060192049
        %v4675 = vlog2.bf16.pop %v4595
        %v4677 = vmul.bf16 %v4675, 1060192049
        %v4678 = vlog2.bf16.pop %v4596
        %v4680 = vmul.bf16 %v4678, 1060192049
        %v4681 = vlog2.bf16.pop %v4597
        %v4683 = vmul.bf16 %v4681, 1060192049
        %v4684 = vlog2.bf16.pop %v4598
        %v4686 = vmul.bf16 %v4684, 1060192049
        %v4687 = vlog2.bf16.pop %v4599
        %v4689 = vmul.bf16 %v4687, 1060192049
        %v4690 = vlog2.bf16.pop %v4600
        %v4692 = vmul.bf16 %v4690, 1060192049
        %v4693 = vlog2.bf16.pop %v4601
        %v4695 = vmul.bf16 %v4693, 1060192049
        %v4696 = vlog2.bf16.pop %v4602
        %v4698 = vmul.bf16 %v4696, 1060192049
        %v4699 = vmul.bf16 %v4605, 1009007652
        %v4700 = vmul.bf16 %v4608, 1009007652
        %v4701 = vmul.bf16 %v4611, 1009007652
        %v4702 = vmul.bf16 %v4614, 1009007652
        %v4703 = vmul.bf16 %v4617, 1009007652
        %v4704 = vmul.bf16 %v4620, 1009007652
        %v4705 = vmul.bf16 %v4623, 1009007652
        %v4706 = vmul.bf16 %v4626, 1009007652
        %v4707 = vmul.bf16 %v4629, 1009007652
        %v4708 = vmul.bf16 %v4632, 1009007652
        %v4709 = vmul.bf16 %v4635, 1009007652
        %v4710 = vmul.bf16 %v4638, 1009007652
        %v4711 = vmul.bf16 %v4641, 1009007652
        %v4712 = vmul.bf16 %v4644, 1009007652
        %v4713 = vmul.bf16 %v4647, 1009007652
        %v4714 = vmul.bf16 %v4650, 1009007652
        %v4715 = vmul.bf16 %v4653, 1009007652
        %v4716 = vmul.bf16 %v4656, 1009007652
        %v4717 = vmul.bf16 %v4659, 1009007652
        %v4718 = vmul.bf16 %v4662, 1009007652
        %v4719 = vmul.bf16 %v4665, 1009007652
        %v4720 = vmul.bf16 %v4668, 1009007652
        %v4721 = vmul.bf16 %v4671, 1009007652
        %v4722 = vmul.bf16 %v4674, 1009007652
        %v4723 = vmul.bf16 %v4677, 1009007652
        %v4724 = vmul.bf16 %v4680, 1009007652
        %v4725 = vmul.bf16 %v4683, 1009007652
        %v4726 = vmul.bf16 %v4686, 1009007652
        %v4727 = vmul.bf16 %v4689, 1009007652
        %v4728 = vmul.bf16 %v4692, 1009007652
        %v4729 = vmul.bf16 %v4695, 1009007652
        %v4730 = vmul.bf16 %v4698, 1009007652
        %vm4731 = vcmp.gt.bf16.partialorder %v4411, 1101021600
        %vm4732 = vcmp.gt.bf16.partialorder %v4412, 1101021600
        %vm4733 = vcmp.gt.bf16.partialorder %v4413, 1101021600
        %vm4734 = vcmp.gt.bf16.partialorder %v4414, 1101021600
        %vm4735 = vcmp.gt.bf16.partialorder %v4415, 1101021600
        %vm4736 = vcmp.gt.bf16.partialorder %v4416, 1101021600
        %vm4737 = vcmp.gt.bf16.partialorder %v4417, 1101021600
        %vm4738 = vcmp.gt.bf16.partialorder %v4418, 1101021600
        %vm4739 = vcmp.gt.bf16.partialorder %v4419, 1101021600
        %vm4740 = vcmp.gt.bf16.partialorder %v4420, 1101021600
        %vm4741 = vcmp.gt.bf16.partialorder %v4421, 1101021600
        %vm4742 = vcmp.gt.bf16.partialorder %v4422, 1101021600
        %vm4743 = vcmp.gt.bf16.partialorder %v4423, 1101021600
        %vm4744 = vcmp.gt.bf16.partialorder %v4424, 1101021600
        %vm4745 = vcmp.gt.bf16.partialorder %v4425, 1101021600
        %vm4746 = vcmp.gt.bf16.partialorder %v4426, 1101021600
        %vm4747 = vcmp.gt.bf16.partialorder %v4427, 1101021600
        %vm4748 = vcmp.gt.bf16.partialorder %v4428, 1101021600
        %vm4749 = vcmp.gt.bf16.partialorder %v4429, 1101021600
        %vm4750 = vcmp.gt.bf16.partialorder %v4430, 1101021600
        %vm4751 = vcmp.gt.bf16.partialorder %v4431, 1101021600
        %vm4752 = vcmp.gt.bf16.partialorder %v4432, 1101021600
        %vm4753 = vcmp.gt.bf16.partialorder %v4433, 1101021600
        %vm4754 = vcmp.gt.bf16.partialorder %v4434, 1101021600
        %vm4755 = vcmp.gt.bf16.partialorder %v4435, 1101021600
        %vm4756 = vcmp.gt.bf16.partialorder %v4436, 1101021600
        %vm4757 = vcmp.gt.bf16.partialorder %v4437, 1101021600
        %vm4758 = vcmp.gt.bf16.partialorder %v4438, 1101021600
        %vm4759 = vcmp.gt.bf16.partialorder %v4439, 1101021600
        %vm4760 = vcmp.gt.bf16.partialorder %v4440, 1101021600
        %vm4761 = vcmp.gt.bf16.partialorder %v4441, 1101021600
        %vm4762 = vcmp.gt.bf16.partialorder %v4442, 1101021600
        %v4763 = vsel %vm4731, %v4379, %v4699
        %v4764 = vsel %vm4732, %v4380, %v4700
        %v4765 = vsel %vm4733, %v4381, %v4701
        %v4766 = vsel %vm4734, %v4382, %v4702
        %v4767 = vsel %vm4735, %v4383, %v4703
        %v4768 = vsel %vm4736, %v4384, %v4704
        %v4769 = vsel %vm4737, %v4385, %v4705
        %v4770 = vsel %vm4738, %v4386, %v4706
        %v4771 = vsel %vm4739, %v4387, %v4707
        %v4772 = vsel %vm4740, %v4388, %v4708
        %v4773 = vsel %vm4741, %v4389, %v4709
        %v4774 = vsel %vm4742, %v4390, %v4710
        %v4775 = vsel %vm4743, %v4391, %v4711
        %v4776 = vsel %vm4744, %v4392, %v4712
        %v4777 = vsel %vm4745, %v4393, %v4713
        %v4778 = vsel %vm4746, %v4394, %v4714
        %v4779 = vsel %vm4747, %v4395, %v4715
        %v4780 = vsel %vm4748, %v4396, %v4716
        %v4781 = vsel %vm4749, %v4397, %v4717
        %v4782 = vsel %vm4750, %v4398, %v4718
        %v4783 = vsel %vm4751, %v4399, %v4719
        %v4784 = vsel %vm4752, %v4400, %v4720
        %v4785 = vsel %vm4753, %v4401, %v4721
        %v4786 = vsel %vm4754, %v4402, %v4722
        %v4787 = vsel %vm4755, %v4403, %v4723
        %v4788 = vsel %vm4756, %v4404, %v4724
        %v4789 = vsel %vm4757, %v4405, %v4725
        %v4790 = vsel %vm4758, %v4406, %v4726
        %v4791 = vsel %vm4759, %v4407, %v4727
        %v4792 = vsel %vm4760, %v4408, %v4728
        %v4793 = vsel %vm4761, %v4409, %v4729
        %v4794 = vsel %vm4762, %v4410, %v4730
        %s4795 = scalar_lea.vmem %s2, 256
        %v4796 = vld [vmem:[%s4795] sm:$0xf]
        %v4797 = vld [vmem:[%s4795 + $0x4] sm:$0xf]
        %v4798 = vld [vmem:[%s4795 + $0x8] sm:$0xf]
        %v4799 = vld [vmem:[%s4795 + $0xc] sm:$0xf]
        %v4800 = vld [vmem:[%s4795 + $0x10] sm:$0xf]
        %v4801 = vld [vmem:[%s4795 + $0x14] sm:$0xf]
        %v4802 = vld [vmem:[%s4795 + $0x18] sm:$0xf]
        %v4803 = vld [vmem:[%s4795 + $0x1c] sm:$0xf]
        %v4804 = vld [vmem:[%s4795 + $0x20] sm:$0xf]
        %v4805 = vld [vmem:[%s4795 + $0x24] sm:$0xf]
        %v4806 = vld [vmem:[%s4795 + $0x28] sm:$0xf]
        %v4807 = vld [vmem:[%s4795 + $0x2c] sm:$0xf]
        %v4808 = vld [vmem:[%s4795 + $0x30] sm:$0xf]
        %v4809 = vld [vmem:[%s4795 + $0x34] sm:$0xf]
        %v4810 = vld [vmem:[%s4795 + $0x38] sm:$0xf]
        %v4811 = vld [vmem:[%s4795 + $0x3c] sm:$0xf]
        %v4812 = vlaneseq
        %v4813 = vshrl.u32 %v4812, 7
        %v4814 = vsub.s32 5, %v4813
        %v4815 = vrot.slane %v267, %v4814
        %v4832 = vunpack.c.l.b16 %v4796
        %v4833 = vunpack.c.l.b16 %v4797
        %v4834 = vunpack.c.l.b16 %v4798
        %v4835 = vunpack.c.l.b16 %v4799
        %v4836 = vunpack.c.l.b16 %v4800
        %v4837 = vunpack.c.l.b16 %v4801
        %v4838 = vunpack.c.l.b16 %v4802
        %v4839 = vunpack.c.l.b16 %v4803
        %v4840 = vunpack.c.l.b16 %v4804
        %v4841 = vunpack.c.l.b16 %v4805
        %v4842 = vunpack.c.l.b16 %v4806
        %v4843 = vunpack.c.l.b16 %v4807
        %v4844 = vunpack.c.l.b16 %v4808
        %v4845 = vunpack.c.l.b16 %v4809
        %v4846 = vunpack.c.l.b16 %v4810
        %v4847 = vunpack.c.l.b16 %v4811
        %v4848 = vpack.c.b16 %v4833, %v4832
        %v4849 = vpack.c.b16 %v4835, %v4834
        %v4850 = vpack.c.b16 %v4837, %v4836
        %v4851 = vpack.c.b16 %v4839, %v4838
        %v4852 = vpack.c.b16 %v4841, %v4840
        %v4853 = vpack.c.b16 %v4843, %v4842
        %v4854 = vpack.c.b16 %v4845, %v4844
        %v4855 = vpack.c.b16 %v4847, %v4846
        %4864 = vmatprep.subr.bf16.mxu0 0
        %4865 = vmatpush1.bf16.msra.mxu0 %v4848
        %4866 = vmatprep.subr.bf16.mxu0 0
        %4867 = vmatpush1.bf16.msra.mxu0 %v4849
        %4868 = vmatprep.subr.bf16.mxu0 0
        %4869 = vmatpush1.bf16.msra.mxu0 %v4850
        %4870 = vmatprep.subr.bf16.mxu0 0
        %4871 = vmatpush1.bf16.msra.mxu0 %v4851
        %4872 = vmatprep.subr.bf16.mxu0 0
        %4873 = vmatpush1.bf16.msra.mxu0 %v4852
        %4874 = vmatprep.subr.bf16.mxu0 0
        %4875 = vmatpush1.bf16.msra.mxu0 %v4853
        %4876 = vmatprep.subr.bf16.mxu0 0
        %4877 = vmatpush1.bf16.msra.mxu0 %v4854
        %4878 = vmatprep.subr.bf16.mxu0 0
        %4879 = vmatpush1.bf16.msra.mxu0 %v4855
        %4880 = vmatprep.subr.bf16.mxu0 0
        %4881 = vmatpush1.bf16.msra.mxu0 0
        %4882 = vmatprep.subr.bf16.mxu0 0
        %4883 = vmatpush1.bf16.msra.mxu0 0
        %4884 = vmatprep.subr.bf16.mxu0 0
        %4885 = vmatpush1.bf16.msra.mxu0 0
        %4886 = vmatprep.subr.bf16.mxu0 0
        %4887 = vmatpush1.bf16.msra.mxu0 0
        %4888 = vmatprep.subr.bf16.mxu0 0
        %4889 = vmatpush1.bf16.msra.mxu0 0
        %4890 = vmatprep.subr.bf16.mxu0 0
        %4891 = vmatpush1.bf16.msra.mxu0 0
        %4892 = vmatprep.subr.bf16.mxu0 0
        %4893 = vmatpush1.bf16.msra.mxu0 0
        %4894 = vmatprep.subr.bf16.mxu0 0
        %4895 = vmatpush1.bf16.msra.mxu0 0
        %4896 = vmatprep.mubr.bf16.mxu0 0
        %4897 = vmatmul.mubr.bf16.gmra.mrb[0].mxu0 %v4763
        %v4898 = vpop.f32.mrb[0].mxu0
        %v4899 = vadd.f32 %v4815, %v4898
        %v4900 = vpop.f32.mrb[0].mxu0
        %v4901 = vpop.f32.mrb[0].mxu0
        %v4902 = vadd.f32 %v4815, %v4901
        %v4903 = vpop.f32.mrb[0].mxu0
        %4904 = vmatprep.mubr.bf16.mxu0 0
        %4905 = vmatmul.mubr.bf16.gmra.mrb[0].mxu0 %v4764
        %v4906 = vpop.f32.mrb[0].mxu0
        %v4907 = vadd.f32 %v4815, %v4906
        %v4908 = vpop.f32.mrb[0].mxu0
        %v4909 = vpop.f32.mrb[0].mxu0
        %v4910 = vadd.f32 %v4815, %v4909
        %v4911 = vpop.f32.mrb[0].mxu0
        %4912 = vmatprep.mubr.bf16.mxu0 0
        %4913 = vmatmul.mubr.bf16.gmra.mrb[0].mxu0 %v4765
        %v4914 = vpop.f32.mrb[0].mxu0
        %v4915 = vadd.f32 %v4815, %v4914
        %v4916 = vpop.f32.mrb[0].mxu0
        %v4917 = vpop.f32.mrb[0].mxu0
        %v4918 = vadd.f32 %v4815, %v4917
        %v4919 = vpop.f32.mrb[0].mxu0
        %4920 = vmatprep.mubr.bf16.mxu0 0
        %4921 = vmatmul.mubr.bf16.gmra.mrb[0].mxu0 %v4766
        %v4922 = vpop.f32.mrb[0].mxu0
        %v4923 = vadd.f32 %v4815, %v4922
        %v4924 = vpop.f32.mrb[0].mxu0
        %v4925 = vpop.f32.mrb[0].mxu0
        %v4926 = vadd.f32 %v4815, %v4925
        %v4927 = vpop.f32.mrb[0].mxu0
        %4928 = vmatprep.mubr.bf16.mxu0 0
        %4929 = vmatmul.mubr.bf16.gmra.mrb[0].mxu0 %v4767
        %v4930 = vpop.f32.mrb[0].mxu0
        %v4931 = vadd.f32 %v4815, %v4930
        %v4932 = vpop.f32.mrb[0].mxu0
        %v4933 = vpop.f32.mrb[0].mxu0
        %v4934 = vadd.f32 %v4815, %v4933
        %v4935 = vpop.f32.mrb[0].mxu0
        %4936 = vmatprep.mubr.bf16.mxu0 0
        %4937 = vmatmul.mubr.bf16.gmra.mrb[0].mxu0 %v4768
        %v4938 = vpop.f32.mrb[0].mxu0
        %v4939 = vadd.f32 %v4815, %v4938
        %v4940 = vpop.f32.mrb[0].mxu0
        %v4941 = vpop.f32.mrb[0].mxu0
        %v4942 = vadd.f32 %v4815, %v4941
        %v4943 = vpop.f32.mrb[0].mxu0
        %4944 = vmatprep.mubr.bf16.mxu0 0
        %4945 = vmatmul.mubr.bf16.gmra.mrb[0].mxu0 %v4769
        %v4946 = vpop.f32.mrb[0].mxu0
        %v4947 = vadd.f32 %v4815, %v4946
        %v4948 = vpop.f32.mrb[0].mxu0
        %v4949 = vpop.f32.mrb[0].mxu0
        %v4950 = vadd.f32 %v4815, %v4949
        %v4951 = vpop.f32.mrb[0].mxu0
        %4952 = vmatprep.mubr.bf16.mxu0 0
        %4953 = vmatmul.mubr.bf16.gmra.mrb[0].mxu0 %v4770
        %v4954 = vpop.f32.mrb[0].mxu0
        %v4955 = vadd.f32 %v4815, %v4954
        %v4956 = vpop.f32.mrb[0].mxu0
        %v4957 = vpop.f32.mrb[0].mxu0
        %v4958 = vadd.f32 %v4815, %v4957
        %v4959 = vpop.f32.mrb[0].mxu0
        %4960 = vmatprep.mubr.bf16.mxu0 0
        %4961 = vmatmul.mubr.bf16.gmra.mrb[0].mxu0 %v4771
        %v4962 = vpop.f32.mrb[0].mxu0
        %v4963 = vadd.f32 %v4815, %v4962
        %v4964 = vpop.f32.mrb[0].mxu0
        %v4965 = vpop.f32.mrb[0].mxu0
        %v4966 = vadd.f32 %v4815, %v4965
        %v4967 = vpop.f32.mrb[0].mxu0
        %4968 = vmatprep.mubr.bf16.mxu0 0
        %4969 = vmatmul.mubr.bf16.gmra.mrb[0].mxu0 %v4772
        %v4970 = vpop.f32.mrb[0].mxu0
        %v4971 = vadd.f32 %v4815, %v4970
        %v4972 = vpop.f32.mrb[0].mxu0
        %v4973 = vpop.f32.mrb[0].mxu0
        %v4974 = vadd.f32 %v4815, %v4973
        %v4975 = vpop.f32.mrb[0].mxu0
        %4976 = vmatprep.mubr.bf16.mxu0 0
        %4977 = vmatmul.mubr.bf16.gmra.mrb[0].mxu0 %v4773
        %v4978 = vpop.f32.mrb[0].mxu0
        %v4979 = vadd.f32 %v4815, %v4978
        %v4980 = vpop.f32.mrb[0].mxu0
        %v4981 = vpop.f32.mrb[0].mxu0
        %v4982 = vadd.f32 %v4815, %v4981
        %v4983 = vpop.f32.mrb[0].mxu0
        %4984 = vmatprep.mubr.bf16.mxu0 0
        %4985 = vmatmul.mubr.bf16.gmra.mrb[0].mxu0 %v4774
        %v4986 = vpop.f32.mrb[0].mxu0
        %v4987 = vadd.f32 %v4815, %v4986
        %v4988 = vpop.f32.mrb[0].mxu0
        %v4989 = vpop.f32.mrb[0].mxu0
        %v4990 = vadd.f32 %v4815, %v4989
        %v4991 = vpop.f32.mrb[0].mxu0
        %4992 = vmatprep.mubr.bf16.mxu0 0
        %4993 = vmatmul.mubr.bf16.gmra.mrb[0].mxu0 %v4775
        %v4994 = vpop.f32.mrb[0].mxu0
        %v4995 = vadd.f32 %v4815, %v4994
        %v4996 = vpop.f32.mrb[0].mxu0
        %v4997 = vpop.f32.mrb[0].mxu0
        %v4998 = vadd.f32 %v4815, %v4997
        %v4999 = vpop.f32.mrb[0].mxu0
        %5000 = vmatprep.mubr.bf16.mxu0 0
        %5001 = vmatmul.mubr.bf16.gmra.mrb[0].mxu0 %v4776
        %v5002 = vpop.f32.mrb[0].mxu0
        %v5003 = vadd.f32 %v4815, %v5002
        %v5004 = vpop.f32.mrb[0].mxu0
        %v5005 = vpop.f32.mrb[0].mxu0
        %v5006 = vadd.f32 %v4815, %v5005
        %v5007 = vpop.f32.mrb[0].mxu0
        %5008 = vmatprep.mubr.bf16.mxu0 0
        %5009 = vmatmul.mubr.bf16.gmra.mrb[0].mxu0 %v4777
        %v5010 = vpop.f32.mrb[0].mxu0
        %v5011 = vadd.f32 %v4815, %v5010
        %v5012 = vpop.f32.mrb[0].mxu0
        %v5013 = vpop.f32.mrb[0].mxu0
        %v5014 = vadd.f32 %v4815, %v5013
        %v5015 = vpop.f32.mrb[0].mxu0
        %5016 = vmatprep.mubr.bf16.mxu0 0
        %5017 = vmatmul.mubr.bf16.gmra.mrb[0].mxu0 %v4778
        %v5018 = vpop.f32.mrb[0].mxu0
        %v5019 = vadd.f32 %v4815, %v5018
        %v5020 = vpop.f32.mrb[0].mxu0
        %v5021 = vpop.f32.mrb[0].mxu0
        %v5022 = vadd.f32 %v4815, %v5021
        %v5023 = vpop.f32.mrb[0].mxu0
        %5024 = vmatprep.mubr.bf16.mxu0 0
        %5025 = vmatmul.mubr.bf16.gmra.mrb[0].mxu0 %v4779
        %v5026 = vpop.f32.mrb[0].mxu0
        %v5027 = vadd.f32 %v4815, %v5026
        %v5028 = vpop.f32.mrb[0].mxu0
        %v5029 = vpop.f32.mrb[0].mxu0
        %v5030 = vadd.f32 %v4815, %v5029
        %v5031 = vpop.f32.mrb[0].mxu0
        %5032 = vmatprep.mubr.bf16.mxu0 0
        %5033 = vmatmul.mubr.bf16.gmra.mrb[0].mxu0 %v4780
        %v5034 = vpop.f32.mrb[0].mxu0
        %v5035 = vadd.f32 %v4815, %v5034
        %v5036 = vpop.f32.mrb[0].mxu0
        %v5037 = vpop.f32.mrb[0].mxu0
        %v5038 = vadd.f32 %v4815, %v5037
        %v5039 = vpop.f32.mrb[0].mxu0
        %5040 = vmatprep.mubr.bf16.mxu0 0
        %5041 = vmatmul.mubr.bf16.gmra.mrb[0].mxu0 %v4781
        %v5042 = vpop.f32.mrb[0].mxu0
        %v5043 = vadd.f32 %v4815, %v5042
        %v5044 = vpop.f32.mrb[0].mxu0
        %v5045 = vpop.f32.mrb[0].mxu0
        %v5046 = vadd.f32 %v4815, %v5045
        %v5047 = vpop.f32.mrb[0].mxu0
        %5048 = vmatprep.mubr.bf16.mxu0 0
        %5049 = vmatmul.mubr.bf16.gmra.mrb[0].mxu0 %v4782
        %v5050 = vpop.f32.mrb[0].mxu0
        %v5051 = vadd.f32 %v4815, %v5050
        %v5052 = vpop.f32.mrb[0].mxu0
        %v5053 = vpop.f32.mrb[0].mxu0
        %v5054 = vadd.f32 %v4815, %v5053
        %v5055 = vpop.f32.mrb[0].mxu0
        %5056 = vmatprep.mubr.bf16.mxu0 0
        %5057 = vmatmul.mubr.bf16.gmra.mrb[0].mxu0 %v4783
        %v5058 = vpop.f32.mrb[0].mxu0
        %v5059 = vadd.f32 %v4815, %v5058
        %v5060 = vpop.f32.mrb[0].mxu0
        %v5061 = vpop.f32.mrb[0].mxu0
        %v5062 = vadd.f32 %v4815, %v5061
        %v5063 = vpop.f32.mrb[0].mxu0
        %5064 = vmatprep.mubr.bf16.mxu0 0
        %5065 = vmatmul.mubr.bf16.gmra.mrb[0].mxu0 %v4784
        %v5066 = vpop.f32.mrb[0].mxu0
        %v5067 = vadd.f32 %v4815, %v5066
        %v5068 = vpop.f32.mrb[0].mxu0
        %v5069 = vpop.f32.mrb[0].mxu0
        %v5070 = vadd.f32 %v4815, %v5069
        %v5071 = vpop.f32.mrb[0].mxu0
        %5072 = vmatprep.mubr.bf16.mxu0 0
        %5073 = vmatmul.mubr.bf16.gmra.mrb[0].mxu0 %v4785
        %v5074 = vpop.f32.mrb[0].mxu0
        %v5075 = vadd.f32 %v4815, %v5074
        %v5076 = vpop.f32.mrb[0].mxu0
        %v5077 = vpop.f32.mrb[0].mxu0
        %v5078 = vadd.f32 %v4815, %v5077
        %v5079 = vpop.f32.mrb[0].mxu0
        %5080 = vmatprep.mubr.bf16.mxu0 0
        %5081 = vmatmul.mubr.bf16.gmra.mrb[0].mxu0 %v4786
        %v5082 = vpop.f32.mrb[0].mxu0
        %v5083 = vadd.f32 %v4815, %v5082
        %v5084 = vpop.f32.mrb[0].mxu0
        %v5085 = vpop.f32.mrb[0].mxu0
        %v5086 = vadd.f32 %v4815, %v5085
        %v5087 = vpop.f32.mrb[0].mxu0
        %5088 = vmatprep.mubr.bf16.mxu0 0
        %5089 = vmatmul.mubr.bf16.gmra.mrb[0].mxu0 %v4787
        %v5090 = vpop.f32.mrb[0].mxu0
        %v5091 = vadd.f32 %v4815, %v5090
        %v5092 = vpop.f32.mrb[0].mxu0
        %v5093 = vpop.f32.mrb[0].mxu0
        %v5094 = vadd.f32 %v4815, %v5093
        %v5095 = vpop.f32.mrb[0].mxu0
        %5096 = vmatprep.mubr.bf16.mxu0 0
        %5097 = vmatmul.mubr.bf16.gmra.mrb[0].mxu0 %v4788
        %v5098 = vpop.f32.mrb[0].mxu0
        %v5099 = vadd.f32 %v4815, %v5098
        %v5100 = vpop.f32.mrb[0].mxu0
        %v5101 = vpop.f32.mrb[0].mxu0
        %v5102 = vadd.f32 %v4815, %v5101
        %v5103 = vpop.f32.mrb[0].mxu0
        %5104 = vmatprep.mubr.bf16.mxu0 0
        %5105 = vmatmul.mubr.bf16.gmra.mrb[0].mxu0 %v4789
        %v5106 = vpop.f32.mrb[0].mxu0
        %v5107 = vadd.f32 %v4815, %v5106
        %v5108 = vpop.f32.mrb[0].mxu0
        %v5109 = vpop.f32.mrb[0].mxu0
        %v5110 = vadd.f32 %v4815, %v5109
        %v5111 = vpop.f32.mrb[0].mxu0
        %5112 = vmatprep.mubr.bf16.mxu0 0
        %5113 = vmatmul.mubr.bf16.gmra.mrb[0].mxu0 %v4790
        %v5114 = vpop.f32.mrb[0].mxu0
        %v5115 = vadd.f32 %v4815, %v5114
        %v5116 = vpop.f32.mrb[0].mxu0
        %v5117 = vpop.f32.mrb[0].mxu0
        %v5118 = vadd.f32 %v4815, %v5117
        %v5119 = vpop.f32.mrb[0].mxu0
        %5120 = vmatprep.mubr.bf16.mxu0 0
        %5121 = vmatmul.mubr.bf16.gmra.mrb[0].mxu0 %v4791
        %v5122 = vpop.f32.mrb[0].mxu0
        %v5123 = vadd.f32 %v4815, %v5122
        %v5124 = vpop.f32.mrb[0].mxu0
        %v5125 = vpop.f32.mrb[0].mxu0
        %v5126 = vadd.f32 %v4815, %v5125
        %v5127 = vpop.f32.mrb[0].mxu0
        %5128 = vmatprep.mubr.bf16.mxu0 0
        %5129 = vmatmul.mubr.bf16.gmra.mrb[0].mxu0 %v4792
        %v5130 = vpop.f32.mrb[0].mxu0
        %v5131 = vadd.f32 %v4815, %v5130
        %v5132 = vpop.f32.mrb[0].mxu0
        %v5133 = vpop.f32.mrb[0].mxu0
        %v5134 = vadd.f32 %v4815, %v5133
        %v5135 = vpop.f32.mrb[0].mxu0
        %5136 = vmatprep.mubr.bf16.mxu0 0
        %5137 = vmatmul.mubr.bf16.gmra.mrb[0].mxu0 %v4793
        %v5138 = vpop.f32.mrb[0].mxu0
        %v5139 = vadd.f32 %v4815, %v5138
        %v5140 = vpop.f32.mrb[0].mxu0
        %v5141 = vpop.f32.mrb[0].mxu0
        %v5142 = vadd.f32 %v4815, %v5141
        %v5143 = vpop.f32.mrb[0].mxu0
        %5144 = vmatprep.mubr.bf16.mxu0 0
        %5145 = vmatmul.mubr.bf16.gmra.mrb[0].mxu0 %v4794
        %v5146 = vpop.f32.mrb[0].mxu0
        %v5147 = vadd.f32 %v4815, %v5146
        %v5148 = vpop.f32.mrb[0].mxu0
        %v5149 = vpop.f32.mrb[0].mxu0
        %v5150 = vpop.f32.mrb[0].mxu0
        %5151 = vdwg.mxu0
        %5152 = vst [vmem:[%s191] sm:$0xff] %v4899
        %5153 = vst [vmem:[%s191 + $0x8] sm:$0xff] %v4902
        %5154 = vst [vmem:[%s191 + $0x10] sm:$0xff] %v4907
        %5155 = vst [vmem:[%s191 + $0x18] sm:$0xff] %v4910
        %5156 = vst [vmem:[%s191 + $0x20] sm:$0xff] %v4915
        %5157 = vst [vmem:[%s191 + $0x28] sm:$0xff] %v4918
        %5158 = vst [vmem:[%s191 + $0x30] sm:$0xff] %v4923
        %5159 = vst [vmem:[%s191 + $0x38] sm:$0xff] %v4926
        %5160 = vst [vmem:[%s191 + $0x40] sm:$0xff] %v4931
        %5161 = vst [vmem:[%s191 + $0x48] sm:$0xff] %v4934
        %5162 = vst [vmem:[%s191 + $0x50] sm:$0xff] %v4939
        %5163 = vst [vmem:[%s191 + $0x58] sm:$0xff] %v4942
        %5164 = vst [vmem:[%s191 + $0x60] sm:$0xff] %v4947
        %5165 = vst [vmem:[%s191 + $0x68] sm:$0xff] %v4950
        %5166 = vst [vmem:[%s191 + $0x70] sm:$0xff] %v4955
        %5167 = vst [vmem:[%s191 + $0x78] sm:$0xff] %v4958
        %5168 = vst [vmem:[%s191 + $0x80] sm:$0xff] %v4963
        %5169 = vst [vmem:[%s191 + $0x88] sm:$0xff] %v4966
        %5170 = vst [vmem:[%s191 + $0x90] sm:$0xff] %v4971
        %5171 = vst [vmem:[%s191 + $0x98] sm:$0xff] %v4974
        %5172 = vst [vmem:[%s191 + $0xa0] sm:$0xff] %v4979
        %5173 = vst [vmem:[%s191 + $0xa8] sm:$0xff] %v4982
        %5174 = vst [vmem:[%s191 + $0xb0] sm:$0xff] %v4987
        %5175 = vst [vmem:[%s191 + $0xb8] sm:$0xff] %v4990
        %5176 = vst [vmem:[%s191 + $0xc0] sm:$0xff] %v4995
        %5177 = vst [vmem:[%s191 + $0xc8] sm:$0xff] %v4998
        %5178 = vst [vmem:[%s191 + $0xd0] sm:$0xff] %v5003
        %5179 = vst [vmem:[%s191 + $0xd8] sm:$0xff] %v5006
        %5180 = vst [vmem:[%s191 + $0xe0] sm:$0xff] %v5011
        %5181 = vst [vmem:[%s191 + $0xe8] sm:$0xff] %v5014
        %5182 = vst [vmem:[%s191 + $0xf0] sm:$0xff] %v5019
        %5183 = vst [vmem:[%s191 + $0xf8] sm:$0xff] %v5022
        %5184 = vst [vmem:[%s191 + $0x100] sm:$0xff] %v5027
        %5185 = vst [vmem:[%s191 + $0x108] sm:$0xff] %v5030
        %5186 = vst [vmem:[%s191 + $0x110] sm:$0xff] %v5035
        %5187 = vst [vmem:[%s191 + $0x118] sm:$0xff] %v5038
        %5188 = vst [vmem:[%s191 + $0x120] sm:$0xff] %v5043
        %5189 = vst [vmem:[%s191 + $0x128] sm:$0xff] %v5046
        %5190 = vst [vmem:[%s191 + $0x130] sm:$0xff] %v5051
        %5191 = vst [vmem:[%s191 + $0x138] sm:$0xff] %v5054
        %5192 = vst [vmem:[%s191 + $0x140] sm:$0xff] %v5059
        %5193 = vst [vmem:[%s191 + $0x148] sm:$0xff] %v5062
        %5194 = vst [vmem:[%s191 + $0x150] sm:$0xff] %v5067
        %5195 = vst [vmem:[%s191 + $0x158] sm:$0xff] %v5070
        %5196 = vst [vmem:[%s191 + $0x160] sm:$0xff] %v5075
        %5197 = vst [vmem:[%s191 + $0x168] sm:$0xff] %v5078
        %5198 = vst [vmem:[%s191 + $0x170] sm:$0xff] %v5083
        %5199 = vst [vmem:[%s191 + $0x178] sm:$0xff] %v5086
        %5200 = vst [vmem:[%s191 + $0x180] sm:$0xff] %v5091
        %5201 = vst [vmem:[%s191 + $0x188] sm:$0xff] %v5094
        %5202 = vst [vmem:[%s191 + $0x190] sm:$0xff] %v5099
        %5203 = vst [vmem:[%s191 + $0x198] sm:$0xff] %v5102
        %5204 = vst [vmem:[%s191 + $0x1a0] sm:$0xff] %v5107
        %5205 = vst [vmem:[%s191 + $0x1a8] sm:$0xff] %v5110
        %5206 = vst [vmem:[%s191 + $0x1b0] sm:$0xff] %v5115
        %5207 = vst [vmem:[%s191 + $0x1b8] sm:$0xff] %v5118
        %5208 = vst [vmem:[%s191 + $0x1c0] sm:$0xff] %v5123
        %5209 = vst [vmem:[%s191 + $0x1c8] sm:$0xff] %v5126
        %5210 = vst [vmem:[%s191 + $0x1d0] sm:$0xff] %v5131
        %5211 = vst [vmem:[%s191 + $0x1d8] sm:$0xff] %v5134
        %5212 = vst [vmem:[%s191 + $0x1e0] sm:$0xff] %v5139
        %5213 = vst [vmem:[%s191 + $0x1e8] sm:$0xff] %v5142
        %5214 = vst [vmem:[%s191 + $0x1f0] sm:$0xff] %v5147
        %s5215 = sand.u32 %s115, 1
        %s5216 = scalar_lea.sflag [#allocation3], %s5215
        %s5217 = sand.u32 %s115, 1
        %s5218 = smul.addr %s5217, 504
        %s5219 = scalar_lea.vmem [#allocation2], %s5218
        // Predicated region
        $region37: #{tpu_custom_call.1} parent=35 // pred_check
          %p5220 = pneg %p125
        $region38: #{tpu_custom_call.1} parent=35 // pred_check_branch
          %5222 = sbr.rel (%p5220) target = $region40
        $region39: #{tpu_custom_call.1} parent=35 // pred_region
          %s5223 = smul.u32 63, %s18
          %s5225 = ssub.s32 8064, 8064
          %5226 = vsyncadd %s5216, %s5225
          %s5227 = smul.addr %s5223, 128
          %s5228 = scalar_lea.hbm %s4, %s5227
          %s5229 = sshll.u32 %s5219, 4
          %s5230 = int_to_ptr.vmem [resolvable:$true] %s5229
          %5235 = dma.vmem_to_hbm [thread:$0]  %s5230, 8064, %s5228, %s5216, 128, 128, 8
        $region40: #{tpu_custom_call.1} parent=35 // pred_fallthru
          _
      $region36: #{tpu_custom_call.1} parent=5 // pred_fallthru
        _
      %p5236 = scmp.le.s32.totalorder 2, %s13
      // Predicated region
      $region41: #{tpu_custom_call.1} parent=5 // pred_check
        %p5237 = pneg %p5236
      $region42: #{tpu_custom_call.1} parent=5 // pred_check_branch
        %5239 = sbr.rel (%p5237) target = $region44
      $region43: #{tpu_custom_call.1} parent=5 // pred_region
        %s5240 = ssub.s32 %s13, 2
        // Predicated region
        $region45: #{tpu_custom_call.1} parent=43 // pred_check
          %p5241 = pneg %p131
        $region46: #{tpu_custom_call.1} parent=43 // pred_check_branch
          %5243 = sbr.rel (%p5241) target = $region48
        $region47: #{tpu_custom_call.1} parent=43 // pred_region
          %s5244 = sand.u32 %s116, 1
          %s5245 = scalar_lea.sflag [#allocation3], %s5244
          %s5246 = sand.u32 %s116, 1
          %s5247 = smul.addr %s5246, 504
          %s5248 = scalar_lea.vmem [#allocation2], %s5247
          %5249 = dma.done %s5245, 8064
        $region48: #{tpu_custom_call.1} parent=43 // pred_fallthru
          _
      $region44: #{tpu_custom_call.1} parent=5 // pred_fallthru
        _
    $region6: #{tpu_custom_call.1} parent=1 // loop_footer
      %s17 = sadd.s32 1, %s13
    $region7: #{tpu_custom_call.1} parent=1 // loop_footer_branch
      %12 = sbr.rel target = $region3
    $region8: #{tpu_custom_call.1} parent=1 // loop_exit
      _
    %5250 = vsyncpa [#allocation3], 1
    %s5251 = scalar_lea.sflag [#allocation3], 1
    %5252 = vsyncpa %s5251, 1

</llo_original>
